<compile_context>
chip_gen: v7x
topology: tpu7x:2x2x1
jax: 0.10.0
libtpu: 0.0.40
codegen_flags: <defaults>
</compile_context>

<pallas_src>
import jax
import jax.numpy as jnp
from jax import lax
from jax.experimental import pallas as pl
from jax.experimental.pallas import tpu as pltpu


# ----------------------------------------------------------------------------
# Kernel
# ----------------------------------------------------------------------------
def _repn_bottleneck_kernel(x_ref, x_hbm, wa_ref, wb_ref, ba_ref, bb_ref,
                            o_ref, xpad, zpad, acc, sem):
    """One (batch, row-block) tile per grid step.

    x_ref : (1, tr, W, Cp)   auto-pipelined input rows of this block
    x_hbm : (N, H, W, Cp)    same array, raw HBM ref (halo rows only)
    wa_ref: (9*Cp, Cp)       stage-1 weight slab (RepConv, BN+1x1 folded)
    wb_ref: (9*Cp, Cp)       stage-2 weight slab (Conv, BN folded)
    ba_ref/bb_ref: (1, Cp)   folded biases
    o_ref : (1, tr, W, Cp)   output rows
    xpad  : VMEM (tr+4, W, Cp)  x rows with +/-2 row halo
    zpad  : VMEM (tr+2, W, Cp)  stage-1 activations with +/-1 row halo
    acc   : VMEM ((tr+2)*W, Cp) f32 accumulator
    sem   : DMA semaphores (2,)
    """
    n = pl.program_id(0)
    i = pl.program_id(1)
    nb = pl.num_programs(1)

    tr4, W, Cp = xpad.shape
    tr = tr4 - 4
    r1 = tr + 2                       # z rows needed (incl. +/-1 halo)
    dt = xpad.dtype

    # ---- assemble the x row window [i*tr-2, i*tr+tr+2) in VMEM -------------
    xpad[pl.ds(2, tr), :, :] = x_ref[0]
    r0 = i * tr

    @pl.when(i > 0)
    def _():
        cp = pltpu.make_async_copy(x_hbm.at[n, pl.ds(r0 - 2, 2)],
                                   xpad.at[pl.ds(0, 2)], sem.at[0])
        cp.start()
        cp.wait()

    @pl.when(i == 0)
    def _():
        xpad[pl.ds(0, 2), :, :] = jnp.zeros((2, W, Cp), dt)

    @pl.when(i < nb - 1)
    def _():
        cp = pltpu.make_async_copy(x_hbm.at[n, pl.ds(r0 + tr, 2)],
                                   xpad.at[pl.ds(tr + 2, 2)], sem.at[1])
        cp.start()
        cp.wait()

    @pl.when(i == nb - 1)
    def _():
        xpad[pl.ds(tr + 2, 2), :, :] = jnp.zeros((2, W, Cp), dt)

    # ---- 3x3 conv: kx folded into the contraction (K = 3*Cp) ---------------
    def conv3x3(src, w2d, rows):
        zc = jnp.zeros((rows, 1, Cp), src.dtype)
        for ky in range(3):                      # ky shift = free leading-dim slice
            base = src[pl.ds(ky, rows), :, :]                    # (rows, W, Cp)
            left = jnp.concatenate([zc, base[:, :W - 1, :]], axis=1)   # col w-1
            right = jnp.concatenate([base[:, 1:, :], zc], axis=1)      # col w+1
            slab = jnp.concatenate([left, base, right], axis=2)        # (rows,W,3Cp)
            slab = slab.reshape(rows * W, 3 * Cp)
            wk = w2d[pl.ds(ky * 3 * Cp, 3 * Cp), :]
            part = jnp.dot(slab, wk, preferred_element_type=jnp.float32)
            if ky == 0:
                acc[pl.ds(0, rows * W), :] = part
            else:
                acc[pl.ds(0, rows * W), :] = acc[pl.ds(0, rows * W), :] + part
        return acc[pl.ds(0, rows * W), :]

    # ---- stage 1: RepConv (3x3 + folded 1x1) -> folded BN -> SiLU ----------
    a1 = conv3x3(xpad, wa_ref, r1) + ba_ref[0, :]
    z = a1 * jax.nn.sigmoid(a1)
    zpad[...] = z.reshape(r1, W, Cp).astype(dt)

    # stage-2's conv zero-pads z at the *image* boundary only
    @pl.when(i == 0)
    def _():
        zpad[pl.ds(0, 1), :, :] = jnp.zeros((1, W, Cp), dt)

    @pl.when(i == nb - 1)
    def _():
        zpad[pl.ds(r1 - 1, 1), :, :] = jnp.zeros((1, W, Cp), dt)

    # ---- stage 2: Conv 3x3 -> folded BN -> SiLU, then residual add ---------
    a2 = conv3x3(zpad, wb_ref, tr) + bb_ref[0, :]
    y = a2 * jax.nn.sigmoid(a2)
    o_ref[...] = (x_ref[...].astype(jnp.float32) +
                  y.reshape(1, tr, W, Cp)).astype(o_ref.dtype)


# ----------------------------------------------------------------------------
# Wrapper
# ----------------------------------------------------------------------------
def _round_up(v, m):
    return (v + m - 1) // m * m


def _fold_bn(gamma, beta, mean, var, eps):
    scale = gamma / jnp.sqrt(var + eps)
    shift = beta - mean * scale
    return scale, shift


def repn_bottleneck(x_nhwc, w_rep3, bn_rep3, w_rep1, bn_rep1, w_cv2, bn_cv2,
                    *, eps: float = 1e-5, block_rows=None):
    """RepNBottleneck forward (inference BN), NHWC activations.

    w_rep3: (C,C,3,3) OIHW  RepConv 3x3 branch weight
    w_rep1: (C,C,1,1) OIHW  RepConv 1x1 branch weight
    w_cv2 : (C,C,3,3) OIHW  second Conv weight
    bn_*  : (gamma, beta, running_mean, running_var)
    """
    N, H, W_, C = x_nhwc.shape
    Cp = _round_up(max(C, 128), 128)          # lane-dense channel count

    # Fold BN into the conv weights; fold the 1x1 branch into the 3x3 centre.
    s1, t1 = _fold_bn(*bn_rep3, eps)
    s2, t2 = _fold_bn(*bn_rep1, eps)
    s3, t3 = _fold_bn(*bn_cv2, eps)
    w_a = w_rep3 * s1[:, None, None, None]
    w_a = w_a.at[:, :, 1, 1].add(w_rep1[:, :, 0, 0] * s2[:, None])
    bias_a = t1 + t2
    w_b = w_cv2 * s3[:, None, None, None]
    bias_b = t3

    def to_slab(w_oihw):
        w = jnp.transpose(w_oihw, (2, 3, 1, 0))                      # HWIO
        w = jnp.pad(w, ((0, 0), (0, 0), (0, Cp - C), (0, Cp - C)))
        return w.reshape(9 * Cp, Cp).astype(x_nhwc.dtype)            # (9Cp, Cp)

    w_a2d, w_b2d = to_slab(w_a), to_slab(w_b)
    bias_a2d = jnp.pad(bias_a, (0, Cp - C)).reshape(1, Cp).astype(jnp.float32)
    bias_b2d = jnp.pad(bias_b, (0, Cp - C)).reshape(1, Cp).astype(jnp.float32)

    xp = (jnp.pad(x_nhwc, ((0, 0), (0, 0), (0, 0), (0, Cp - C)))
          if Cp != C else x_nhwc)

    if block_rows is None:
        block_rows = H
        for cand in (64, 32, 16, 8):
            if H % cand == 0:
                block_rows = cand
                break
    assert H % block_rows == 0 and block_rows >= 2, "H must divide block_rows>=2"
    tr = block_rows
    nb = H // tr

    flops = 2 * 2 * N * H * W_ * 9 * Cp * Cp           # two 3x3 convs
    trans = 2 * N * H * W_ * Cp                         # two SiLUs
    bytes_acc = (xp.size + N * H * W_ * Cp
                 + w_a2d.size + w_b2d.size) * xp.dtype.itemsize

    out = pl.pallas_call(
        _repn_bottleneck_kernel,
        out_shape=jax.ShapeDtypeStruct((N, H, W_, Cp), x_nhwc.dtype),
        grid_spec=pltpu.PrefetchScalarGridSpec(
            num_scalar_prefetch=0,
            grid=(N, nb),
            in_specs=[
                pl.BlockSpec((1, tr, W_, Cp), lambda n, i: (n, i, 0, 0)),
                pl.BlockSpec(memory_space=pl.ANY),           # halo rows only
                pl.BlockSpec((9 * Cp, Cp), lambda n, i: (0, 0)),
                pl.BlockSpec((9 * Cp, Cp), lambda n, i: (0, 0)),
                pl.BlockSpec((1, Cp), lambda n, i: (0, 0)),
                pl.BlockSpec((1, Cp), lambda n, i: (0, 0)),
            ],
            out_specs=pl.BlockSpec((1, tr, W_, Cp), lambda n, i: (n, i, 0, 0)),
            scratch_shapes=[
                pltpu.VMEM((tr + 4, W_, Cp), x_nhwc.dtype),      # x + row halo
                pltpu.VMEM((tr + 2, W_, Cp), x_nhwc.dtype),      # z + row halo
                pltpu.VMEM(((tr + 2) * W_, Cp), jnp.float32),    # f32 accumulator
                pltpu.SemaphoreType.DMA((2,)),
            ]),
        compiler_params=pltpu.CompilerParams(
            dimension_semantics=("parallel", "parallel"),
            vmem_limit_bytes=48 * 1024 * 1024),
        cost_estimate=pl.CostEstimate(
            flops=flops, transcendentals=trans, bytes_accessed=bytes_acc),
    )(xp, xp, w_a2d, w_b2d, bias_a2d, bias_b2d)

    return out[..., :C] if Cp != C else out


# ----------------------------------------------------------------------------
# Pure-JAX reference (mirrors the PyTorch module structure, eval-mode BN)
# ----------------------------------------------------------------------------
def _reference(x, w_rep3, bn_rep3, w_rep1, bn_rep1, w_cv2, bn_cv2, eps=1e-5):
    def conv(inp, w_oihw, pad):
        w = jnp.transpose(w_oihw, (2, 3, 1, 0))
        return lax.conv_general_dilated(
            inp, w, (1, 1), ((pad, pad), (pad, pad)),
            dimension_numbers=("NHWC", "HWIO", "NHWC"))

    def bn(y, p):
        g, b, m, v = p
        s = g / jnp.sqrt(v + eps)
        return y * s + (b - m * s)

    a = bn(conv(x, w_rep3, 1), bn_rep3) + bn(conv(x, w_rep1, 0), bn_rep1)
    z = a * jax.nn.sigmoid(a)
    c = bn(conv(z, w_cv2, 1), bn_cv2)
    y = c * jax.nn.sigmoid(c)
    return x + y


if __name__ == "__main__":
    key = jax.random.PRNGKey(0)
    ks = jax.random.split(key, 8)

    N, C, H, W = 2, 4, 16, 16

    # Input in PyTorch NCHW convention, transposed to NHWC for the kernel.
    x_nchw = jax.random.normal(ks[0], (N, C, H, W), dtype=jnp.float32)
    x_nhwc = jnp.transpose(x_nchw, (0, 2, 3, 1))

    # Conv weights in PyTorch OIHW convention.
    w_rep3 = 0.1 * jax.random.normal(ks[1], (C, C, 3, 3), dtype=jnp.float32)
    w_rep1 = 0.1 * jax.random.normal(ks[2], (C, C, 1, 1), dtype=jnp.float32)
    w_cv2 = 0.1 * jax.random.normal(ks[3], (C, C, 3, 3), dtype=jnp.float32)

    def rand_bn(k):
        kg, kb, km, kv = jax.random.split(k, 4)
        return (1.0 + 0.1 * jax.random.normal(kg, (C,), dtype=jnp.float32),
                0.1 * jax.random.normal(kb, (C,), dtype=jnp.float32),
                0.1 * jax.random.normal(km, (C,), dtype=jnp.float32),
                1.0 + 0.5 * jax.random.uniform(kv, (C,), dtype=jnp.float32))

    bn_rep3, bn_rep1, bn_cv2 = rand_bn(ks[4]), rand_bn(ks[5]), rand_bn(ks[6])

    out = repn_bottleneck(x_nhwc, w_rep3, bn_rep3, w_rep1, bn_rep1,
                          w_cv2, bn_cv2, block_rows=8)
    out = jax.block_until_ready(out)

    ref = jax.block_until_ready(
        _reference(x_nhwc, w_rep3, bn_rep3, w_rep1, bn_rep1, w_cv2, bn_cv2))

    assert out.shape == (N, H, W, C)
    assert jnp.allclose(out, ref, atol=2e-4, rtol=2e-4), (
        float(jnp.max(jnp.abs(out - ref))))

    print("KERNEL_OK")
</pallas_src>

<mosaic_0001>
module attributes {stable_mosaic.version = 11 : i64} {
  func.func @_repn_bottleneck_kernel(%arg0: i32, %arg1: i32, %arg2: memref<1x8x16x128xf32, #tpu.memory_space<vmem>>, %arg3: memref<2x16x16x128xf32, #tpu.memory_space<any>>, %arg4: memref<1152x128xf32, #tpu.memory_space<vmem>>, %arg5: memref<1152x128xf32, #tpu.memory_space<vmem>>, %arg6: memref<1x128xf32, #tpu.memory_space<vmem>>, %arg7: memref<1x128xf32, #tpu.memory_space<vmem>>, %arg8: memref<1x8x16x128xf32, #tpu.memory_space<vmem>>, %arg9: memref<12x16x128xf32, #tpu.memory_space<vmem>>, %arg10: memref<10x16x128xf32, #tpu.memory_space<vmem>>, %arg11: memref<160x128xf32, #tpu.memory_space<vmem>>, %arg12: memref<2x!tpu.dma_semaphore, #tpu.memory_space<semaphore_mem>>) attributes {dimension_semantics = [#tpu.dimension_semantics<parallel>, #tpu.dimension_semantics<parallel>], iteration_bounds = array<i64: 2, 2>, scalar_prefetch = 0 : i64, scratch_operands = 4 : i64, tpu.core_type = #tpu.core_type<tc>, window_params = [{transform_indices = @transform_0, window_bounds = array<i64: 1, 8, 16, 128>}, {}, {pipeline_mode = #tpu.pipeline_mode<synchronous>, transform_indices = @transform_2, window_bounds = array<i64: 1152, 128>}, {pipeline_mode = #tpu.pipeline_mode<synchronous>, transform_indices = @transform_3, window_bounds = array<i64: 1152, 128>}, {pipeline_mode = #tpu.pipeline_mode<synchronous>, transform_indices = @transform_4, window_bounds = array<i64: 1, 128>}, {pipeline_mode = #tpu.pipeline_mode<synchronous>, transform_indices = @transform_5, window_bounds = array<i64: 1, 128>}, {transform_indices = @transform_6, window_bounds = array<i64: 1, 8, 16, 128>}]} {
    %c0 = arith.constant 0 : index
    %c0_0 = arith.constant 0 : index
    %c0_1 = arith.constant 0 : index
    %c0_2 = arith.constant 0 : index
    %0 = vector.load %arg2[%c0, %c0_0, %c0_1, %c0_2] : memref<1x8x16x128xf32, #tpu.memory_space<vmem>>, vector<1x8x16x128xf32>
    %1 = vector.shape_cast %0 : vector<1x8x16x128xf32> to vector<8x16x128xf32>
    %c2 = arith.constant 2 : index
    %c0_3 = arith.constant 0 : index
    %c0_4 = arith.constant 0 : index
    %2 = vector.load %arg9[%c2, %c0_3, %c0_4] : memref<12x16x128xf32, #tpu.memory_space<vmem>>, vector<8x16x128xf32>
    tpu.vector_store %arg9[%c2, %c0_3, %c0_4], %1 {strides = array<i32>} : memref<12x16x128xf32, #tpu.memory_space<vmem>>, vector<8x16x128xf32>,
    %c8_i32 = arith.constant 8 : i32
    %3 = arith.muli %arg1, %c8_i32 : i32
    %c0_i32 = arith.constant 0 : i32
    %4 = arith.cmpi sgt, %arg1, %c0_i32 : i32
    %5 = arith.extui %4 : i1 to i32
    %c0_i32_5 = arith.constant 0 : i32
    %6 = arith.cmpi ne, %5, %c0_i32_5 : i32
    scf.if %6 {
      %c2_i32 = arith.constant 2 : i32
      %122 = arith.subi %3, %c2_i32 : i32
      %c0_i32_90 = arith.constant 0 : i32
      %c0_i32_91 = arith.constant 0 : i32
      %c0_i32_92 = arith.constant 0 : i32
      %123 = tpu.memref_slice %arg3[%arg0, %122, %c0_i32_91, %c0_i32_92] : memref<2x16x16x128xf32, #tpu.memory_space<any>> -> memref<1x2x16x128xf32, #tpu.memory_space<any>>
      %124 = tpu.memref_squeeze %123 : memref<1x2x16x128xf32, #tpu.memory_space<any>> -> memref<2x16x128xf32, #tpu.memory_space<any>>
      %c0_i32_93 = arith.constant 0 : i32
      %c0_i32_94 = arith.constant 0 : i32
      %c0_i32_95 = arith.constant 0 : i32
      %125 = tpu.memref_slice %arg9[%c0_i32_93, %c0_i32_94, %c0_i32_95] : memref<12x16x128xf32, #tpu.memory_space<vmem>> -> memref<2x16x128xf32, #tpu.memory_space<vmem>>
      %126 = tpu.memref_slice %arg12[%c0_i32_90] : memref<2x!tpu.dma_semaphore, #tpu.memory_space<semaphore_mem>> -> memref<1x!tpu.dma_semaphore, #tpu.memory_space<semaphore_mem>>
      %127 = tpu.memref_squeeze %126 : memref<1x!tpu.dma_semaphore, #tpu.memory_space<semaphore_mem>> -> memref<!tpu.dma_semaphore, #tpu.memory_space<semaphore_mem>>
      tpu.enqueue_dma source(%124 : memref<2x16x128xf32, #tpu.memory_space<any>>) target(%125 : memref<2x16x128xf32, #tpu.memory_space<vmem>>) target_semaphore(%127 : memref<!tpu.dma_semaphore, #tpu.memory_space<semaphore_mem>>)
      %c0_i32_96 = arith.constant 0 : i32
      %c0_i32_97 = arith.constant 0 : i32
      %c0_i32_98 = arith.constant 0 : i32
      %128 = tpu.memref_slice %arg3[%arg0, %122, %c0_i32_97, %c0_i32_98] : memref<2x16x16x128xf32, #tpu.memory_space<any>> -> memref<1x2x16x128xf32, #tpu.memory_space<any>>
      %129 = tpu.memref_squeeze %128 : memref<1x2x16x128xf32, #tpu.memory_space<any>> -> memref<2x16x128xf32, #tpu.memory_space<any>>
      %c0_i32_99 = arith.constant 0 : i32
      %c0_i32_100 = arith.constant 0 : i32
      %c0_i32_101 = arith.constant 0 : i32
      %130 = tpu.memref_slice %arg9[%c0_i32_99, %c0_i32_100, %c0_i32_101] : memref<12x16x128xf32, #tpu.memory_space<vmem>> -> memref<2x16x128xf32, #tpu.memory_space<vmem>>
      %131 = tpu.memref_slice %arg12[%c0_i32_96] : memref<2x!tpu.dma_semaphore, #tpu.memory_space<semaphore_mem>> -> memref<1x!tpu.dma_semaphore, #tpu.memory_space<semaphore_mem>>
      %132 = tpu.memref_squeeze %131 : memref<1x!tpu.dma_semaphore, #tpu.memory_space<semaphore_mem>> -> memref<!tpu.dma_semaphore, #tpu.memory_space<semaphore_mem>>
      tpu.wait_dma2 semaphore(%132 : memref<!tpu.dma_semaphore, #tpu.memory_space<semaphore_mem>>) src(%129 : memref<2x16x128xf32, #tpu.memory_space<any>>) dst(%130 : memref<2x16x128xf32, #tpu.memory_space<vmem>>)
    } else {
    }
    %c0_i32_6 = arith.constant 0 : i32
    %7 = arith.cmpi eq, %arg1, %c0_i32_6 : i32
    %8 = arith.extui %7 : i1 to i32
    %c0_i32_7 = arith.constant 0 : i32
    %9 = arith.cmpi ne, %8, %c0_i32_7 : i32
    scf.if %9 {
      %cst_90 = arith.constant 0.000000e+00 : f32
      %122 = vector.broadcast %cst_90 : f32 to vector<2x16x128xf32>
      %c0_91 = arith.constant 0 : index
      %c0_92 = arith.constant 0 : index
      %c0_93 = arith.constant 0 : index
      %123 = vector.load %arg9[%c0_91, %c0_92, %c0_93] : memref<12x16x128xf32, #tpu.memory_space<vmem>>, vector<2x16x128xf32>
      tpu.vector_store %arg9[%c0_91, %c0_92, %c0_93], %122 {strides = array<i32>} : memref<12x16x128xf32, #tpu.memory_space<vmem>>, vector<2x16x128xf32>,
    } else {
    }
    %c1_i32 = arith.constant 1 : i32
    %10 = arith.cmpi slt, %arg1, %c1_i32 : i32
    %11 = arith.extui %10 : i1 to i32
    %c0_i32_8 = arith.constant 0 : i32
    %12 = arith.cmpi ne, %11, %c0_i32_8 : i32
    scf.if %12 {
      %c8_i32_90 = arith.constant 8 : i32
      %122 = arith.addi %3, %c8_i32_90 : i32
      %c1_i32_91 = arith.constant 1 : i32
      %c0_i32_92 = arith.constant 0 : i32
      %c0_i32_93 = arith.constant 0 : i32
      %123 = tpu.memref_slice %arg3[%arg0, %122, %c0_i32_92, %c0_i32_93] : memref<2x16x16x128xf32, #tpu.memory_space<any>> -> memref<1x2x16x128xf32, #tpu.memory_space<any>>
      %124 = tpu.memref_squeeze %123 : memref<1x2x16x128xf32, #tpu.memory_space<any>> -> memref<2x16x128xf32, #tpu.memory_space<any>>
      %c10_i32 = arith.constant 10 : i32
      %c0_i32_94 = arith.constant 0 : i32
      %c0_i32_95 = arith.constant 0 : i32
      %125 = tpu.memref_slice %arg9[%c10_i32, %c0_i32_94, %c0_i32_95] : memref<12x16x128xf32, #tpu.memory_space<vmem>> -> memref<2x16x128xf32, #tpu.memory_space<vmem>>
      %126 = tpu.memref_slice %arg12[%c1_i32_91] : memref<2x!tpu.dma_semaphore, #tpu.memory_space<semaphore_mem>> -> memref<1x!tpu.dma_semaphore, #tpu.memory_space<semaphore_mem>>
      %127 = tpu.memref_squeeze %126 : memref<1x!tpu.dma_semaphore, #tpu.memory_space<semaphore_mem>> -> memref<!tpu.dma_semaphore, #tpu.memory_space<semaphore_mem>>
      tpu.enqueue_dma source(%124 : memref<2x16x128xf32, #tpu.memory_space<any>>) target(%125 : memref<2x16x128xf32, #tpu.memory_space<vmem>>) target_semaphore(%127 : memref<!tpu.dma_semaphore, #tpu.memory_space<semaphore_mem>>)
      %c1_i32_96 = arith.constant 1 : i32
      %c0_i32_97 = arith.constant 0 : i32
      %c0_i32_98 = arith.constant 0 : i32
      %128 = tpu.memref_slice %arg3[%arg0, %122, %c0_i32_97, %c0_i32_98] : memref<2x16x16x128xf32, #tpu.memory_space<any>> -> memref<1x2x16x128xf32, #tpu.memory_space<any>>
      %129 = tpu.memref_squeeze %128 : memref<1x2x16x128xf32, #tpu.memory_space<any>> -> memref<2x16x128xf32, #tpu.memory_space<any>>
      %c10_i32_99 = arith.constant 10 : i32
      %c0_i32_100 = arith.constant 0 : i32
      %c0_i32_101 = arith.constant 0 : i32
      %130 = tpu.memref_slice %arg9[%c10_i32_99, %c0_i32_100, %c0_i32_101] : memref<12x16x128xf32, #tpu.memory_space<vmem>> -> memref<2x16x128xf32, #tpu.memory_space<vmem>>
      %131 = tpu.memref_slice %arg12[%c1_i32_96] : memref<2x!tpu.dma_semaphore, #tpu.memory_space<semaphore_mem>> -> memref<1x!tpu.dma_semaphore, #tpu.memory_space<semaphore_mem>>
      %132 = tpu.memref_squeeze %131 : memref<1x!tpu.dma_semaphore, #tpu.memory_space<semaphore_mem>> -> memref<!tpu.dma_semaphore, #tpu.memory_space<semaphore_mem>>
      tpu.wait_dma2 semaphore(%132 : memref<!tpu.dma_semaphore, #tpu.memory_space<semaphore_mem>>) src(%129 : memref<2x16x128xf32, #tpu.memory_space<any>>) dst(%130 : memref<2x16x128xf32, #tpu.memory_space<vmem>>)
    } else {
    }
    %c1_i32_9 = arith.constant 1 : i32
    %13 = arith.cmpi eq, %arg1, %c1_i32_9 : i32
    %14 = arith.extui %13 : i1 to i32
    %c0_i32_10 = arith.constant 0 : i32
    %15 = arith.cmpi ne, %14, %c0_i32_10 : i32
    scf.if %15 {
      %cst_90 = arith.constant 0.000000e+00 : f32
      %122 = vector.broadcast %cst_90 : f32 to vector<2x16x128xf32>
      %c10 = arith.constant 10 : index
      %c0_91 = arith.constant 0 : index
      %c0_92 = arith.constant 0 : index
      %123 = vector.load %arg9[%c10, %c0_91, %c0_92] : memref<12x16x128xf32, #tpu.memory_space<vmem>>, vector<2x16x128xf32>
      tpu.vector_store %arg9[%c10, %c0_91, %c0_92], %122 {strides = array<i32>} : memref<12x16x128xf32, #tpu.memory_space<vmem>>, vector<2x16x128xf32>,
    } else {
    }
    %cst = arith.constant 0.000000e+00 : f32
    %16 = vector.broadcast %cst : f32 to vector<10x1x128xf32>
    %c0_11 = arith.constant 0 : index
    %c0_12 = arith.constant 0 : index
    %c0_13 = arith.constant 0 : index
    %17 = vector.load %arg9[%c0_11, %c0_12, %c0_13] : memref<12x16x128xf32, #tpu.memory_space<vmem>>, vector<10x16x128xf32>
    %18 = vector.extract_strided_slice %17 {offsets = [0, 0, 0], sizes = [10, 15, 128], strides = [1, 1, 1]} : vector<10x16x128xf32> to vector<10x15x128xf32>
    %19 = tpu.concatenate %16, %18 in 1 : vector<10x1x128xf32>, vector<10x15x128xf32> -> vector<10x16x128xf32>
    %20 = vector.extract_strided_slice %17 {offsets = [0, 1, 0], sizes = [10, 15, 128], strides = [1, 1, 1]} : vector<10x16x128xf32> to vector<10x15x128xf32>
    %21 = tpu.concatenate %20, %16 in 1 : vector<10x15x128xf32>, vector<10x1x128xf32> -> vector<10x16x128xf32>
    %22 = tpu.concatenate %19, %17, %21 in 2 : vector<10x16x128xf32>, vector<10x16x128xf32>, vector<10x16x128xf32> -> vector<10x16x384xf32>
    %23 = vector.shape_cast %22 : vector<10x16x384xf32> to vector<160x384xf32>
    %c0_14 = arith.constant 0 : index
    %c0_15 = arith.constant 0 : index
    %24 = vector.load %arg4[%c0_14, %c0_15] : memref<1152x128xf32, #tpu.memory_space<vmem>>, vector<384x128xf32>
    %cst_16 = arith.constant dense<0.000000e+00> : vector<160x128xf32>
    %25 = tpu.matmul %23, %24, %cst_16 {dimension_numbers = #tpu.dot_dimension_numbers<[1], [0], [0], [1], [0, 0, 1, 1], [], []>} : vector<160x384xf32>, vector<384x128xf32>, vector<160x128xf32> -> vector<160x128xf32>
    %c0_17 = arith.constant 0 : index
    %c0_18 = arith.constant 0 : index
    %26 = vector.load %arg11[%c0_17, %c0_18] : memref<160x128xf32, #tpu.memory_space<vmem>>, vector<160x128xf32>
    tpu.vector_store %arg11[%c0_17, %c0_18], %25 {strides = array<i32>} : memref<160x128xf32, #tpu.memory_space<vmem>>, vector<160x128xf32>,
    %c1 = arith.constant 1 : index
    %c0_19 = arith.constant 0 : index
    %c0_20 = arith.constant 0 : index
    %27 = vector.load %arg9[%c1, %c0_19, %c0_20] : memref<12x16x128xf32, #tpu.memory_space<vmem>>, vector<10x16x128xf32>
    %28 = vector.extract_strided_slice %27 {offsets = [0, 0, 0], sizes = [10, 15, 128], strides = [1, 1, 1]} : vector<10x16x128xf32> to vector<10x15x128xf32>
    %29 = tpu.concatenate %16, %28 in 1 : vector<10x1x128xf32>, vector<10x15x128xf32> -> vector<10x16x128xf32>
    %30 = vector.extract_strided_slice %27 {offsets = [0, 1, 0], sizes = [10, 15, 128], strides = [1, 1, 1]} : vector<10x16x128xf32> to vector<10x15x128xf32>
    %31 = tpu.concatenate %30, %16 in 1 : vector<10x15x128xf32>, vector<10x1x128xf32> -> vector<10x16x128xf32>
    %32 = tpu.concatenate %29, %27, %31 in 2 : vector<10x16x128xf32>, vector<10x16x128xf32>, vector<10x16x128xf32> -> vector<10x16x384xf32>
    %33 = vector.shape_cast %32 : vector<10x16x384xf32> to vector<160x384xf32>
    %c384 = arith.constant 384 : index
    %c0_21 = arith.constant 0 : index
    %34 = vector.load %arg4[%c384, %c0_21] : memref<1152x128xf32, #tpu.memory_space<vmem>>, vector<384x128xf32>
    %cst_22 = arith.constant dense<0.000000e+00> : vector<160x128xf32>
    %35 = tpu.matmul %33, %34, %cst_22 {dimension_numbers = #tpu.dot_dimension_numbers<[1], [0], [0], [1], [0, 0, 1, 1], [], []>} : vector<160x384xf32>, vector<384x128xf32>, vector<160x128xf32> -> vector<160x128xf32>
    %c0_23 = arith.constant 0 : index
    %c0_24 = arith.constant 0 : index
    %36 = vector.load %arg11[%c0_23, %c0_24] : memref<160x128xf32, #tpu.memory_space<vmem>>, vector<160x128xf32>
    %37 = arith.addf %36, %35 : vector<160x128xf32>
    %c0_25 = arith.constant 0 : index
    %c0_26 = arith.constant 0 : index
    %38 = vector.load %arg11[%c0_25, %c0_26] : memref<160x128xf32, #tpu.memory_space<vmem>>, vector<160x128xf32>
    tpu.vector_store %arg11[%c0_25, %c0_26], %37 {strides = array<i32>} : memref<160x128xf32, #tpu.memory_space<vmem>>, vector<160x128xf32>,
    %c2_27 = arith.constant 2 : index
    %c0_28 = arith.constant 0 : index
    %c0_29 = arith.constant 0 : index
    %39 = vector.load %arg9[%c2_27, %c0_28, %c0_29] : memref<12x16x128xf32, #tpu.memory_space<vmem>>, vector<10x16x128xf32>
    %40 = vector.extract_strided_slice %39 {offsets = [0, 0, 0], sizes = [10, 15, 128], strides = [1, 1, 1]} : vector<10x16x128xf32> to vector<10x15x128xf32>
    %41 = tpu.concatenate %16, %40 in 1 : vector<10x1x128xf32>, vector<10x15x128xf32> -> vector<10x16x128xf32>
    %42 = vector.extract_strided_slice %39 {offsets = [0, 1, 0], sizes = [10, 15, 128], strides = [1, 1, 1]} : vector<10x16x128xf32> to vector<10x15x128xf32>
    %43 = tpu.concatenate %42, %16 in 1 : vector<10x15x128xf32>, vector<10x1x128xf32> -> vector<10x16x128xf32>
    %44 = tpu.concatenate %41, %39, %43 in 2 : vector<10x16x128xf32>, vector<10x16x128xf32>, vector<10x16x128xf32> -> vector<10x16x384xf32>
    %45 = vector.shape_cast %44 : vector<10x16x384xf32> to vector<160x384xf32>
    %c768 = arith.constant 768 : index
    %c0_30 = arith.constant 0 : index
    %46 = vector.load %arg4[%c768, %c0_30] : memref<1152x128xf32, #tpu.memory_space<vmem>>, vector<384x128xf32>
    %cst_31 = arith.constant dense<0.000000e+00> : vector<160x128xf32>
    %47 = tpu.matmul %45, %46, %cst_31 {dimension_numbers = #tpu.dot_dimension_numbers<[1], [0], [0], [1], [0, 0, 1, 1], [], []>} : vector<160x384xf32>, vector<384x128xf32>, vector<160x128xf32> -> vector<160x128xf32>
    %c0_32 = arith.constant 0 : index
    %c0_33 = arith.constant 0 : index
    %48 = vector.load %arg11[%c0_32, %c0_33] : memref<160x128xf32, #tpu.memory_space<vmem>>, vector<160x128xf32>
    %49 = arith.addf %48, %47 : vector<160x128xf32>
    %c0_34 = arith.constant 0 : index
    %c0_35 = arith.constant 0 : index
    %50 = vector.load %arg11[%c0_34, %c0_35] : memref<160x128xf32, #tpu.memory_space<vmem>>, vector<160x128xf32>
    tpu.vector_store %arg11[%c0_34, %c0_35], %49 {strides = array<i32>} : memref<160x128xf32, #tpu.memory_space<vmem>>, vector<160x128xf32>,
    %c0_36 = arith.constant 0 : index
    %c0_37 = arith.constant 0 : index
    %51 = vector.load %arg11[%c0_36, %c0_37] : memref<160x128xf32, #tpu.memory_space<vmem>>, vector<160x128xf32>
    %c0_38 = arith.constant 0 : index
    %c0_39 = arith.constant 0 : index
    %52 = vector.load %arg6[%c0_38, %c0_39] : memref<1x128xf32, #tpu.memory_space<vmem>>, vector<1x128xf32>
    %53 = vector.shape_cast %52 : vector<1x128xf32> to vector<128xf32>
    %54 = vector.shape_cast %53 : vector<128xf32> to vector<1x128xf32>
    %55 = vector.broadcast %54 : vector<1x128xf32> to vector<160x128xf32>
    %56 = arith.addf %51, %55 : vector<160x128xf32>
    %57 = arith.negf %56 : vector<160x128xf32>
    %58 = math.exp %57 : vector<160x128xf32>
    %cst_40 = arith.constant 1.000000e+00 : f32
    %59 = vector.broadcast %cst_40 : f32 to vector<160x128xf32>
    %60 = arith.addf %59, %58 : vector<160x128xf32>
    %61 = arith.divf %59, %60 : vector<160x128xf32>
    %62 = arith.mulf %56, %61 : vector<160x128xf32>
    %63 = vector.shape_cast %62 : vector<160x128xf32> to vector<10x16x128xf32>
    %c0_41 = arith.constant 0 : index
    %c0_42 = arith.constant 0 : index
    %c0_43 = arith.constant 0 : index
    %64 = vector.load %arg10[%c0_41, %c0_42, %c0_43] : memref<10x16x128xf32, #tpu.memory_space<vmem>>, vector<10x16x128xf32>
    tpu.vector_store %arg10[%c0_41, %c0_42, %c0_43], %63 {strides = array<i32>} : memref<10x16x128xf32, #tpu.memory_space<vmem>>, vector<10x16x128xf32>,
    %c0_i32_44 = arith.constant 0 : i32
    %65 = arith.cmpi eq, %arg1, %c0_i32_44 : i32
    %66 = arith.extui %65 : i1 to i32
    %c0_i32_45 = arith.constant 0 : i32
    %67 = arith.cmpi ne, %66, %c0_i32_45 : i32
    scf.if %67 {
      %cst_90 = arith.constant 0.000000e+00 : f32
      %122 = vector.broadcast %cst_90 : f32 to vector<1x16x128xf32>
      %c0_91 = arith.constant 0 : index
      %c0_92 = arith.constant 0 : index
      %c0_93 = arith.constant 0 : index
      %123 = vector.load %arg10[%c0_91, %c0_92, %c0_93] : memref<10x16x128xf32, #tpu.memory_space<vmem>>, vector<1x16x128xf32>
      tpu.vector_store %arg10[%c0_91, %c0_92, %c0_93], %122 {strides = array<i32>} : memref<10x16x128xf32, #tpu.memory_space<vmem>>, vector<1x16x128xf32>,
    } else {
    }
    %c1_i32_46 = arith.constant 1 : i32
    %68 = arith.cmpi eq, %arg1, %c1_i32_46 : i32
    %69 = arith.extui %68 : i1 to i32
    %c0_i32_47 = arith.constant 0 : i32
    %70 = arith.cmpi ne, %69, %c0_i32_47 : i32
    scf.if %70 {
      %cst_90 = arith.constant 0.000000e+00 : f32
      %122 = vector.broadcast %cst_90 : f32 to vector<1x16x128xf32>
      %c9 = arith.constant 9 : index
      %c0_91 = arith.constant 0 : index
      %c0_92 = arith.constant 0 : index
      %123 = vector.load %arg10[%c9, %c0_91, %c0_92] : memref<10x16x128xf32, #tpu.memory_space<vmem>>, vector<1x16x128xf32>
      tpu.vector_store %arg10[%c9, %c0_91, %c0_92], %122 {strides = array<i32>} : memref<10x16x128xf32, #tpu.memory_space<vmem>>, vector<1x16x128xf32>,
    } else {
    }
    %cst_48 = arith.constant 0.000000e+00 : f32
    %71 = vector.broadcast %cst_48 : f32 to vector<8x1x128xf32>
    %c0_49 = arith.constant 0 : index
    %c0_50 = arith.constant 0 : index
    %c0_51 = arith.constant 0 : index
    %72 = vector.load %arg10[%c0_49, %c0_50, %c0_51] : memref<10x16x128xf32, #tpu.memory_space<vmem>>, vector<8x16x128xf32>
    %73 = vector.extract_strided_slice %72 {offsets = [0, 0, 0], sizes = [8, 15, 128], strides = [1, 1, 1]} : vector<8x16x128xf32> to vector<8x15x128xf32>
    %74 = tpu.concatenate %71, %73 in 1 : vector<8x1x128xf32>, vector<8x15x128xf32> -> vector<8x16x128xf32>
    %75 = vector.extract_strided_slice %72 {offsets = [0, 1, 0], sizes = [8, 15, 128], strides = [1, 1, 1]} : vector<8x16x128xf32> to vector<8x15x128xf32>
    %76 = tpu.concatenate %75, %71 in 1 : vector<8x15x128xf32>, vector<8x1x128xf32> -> vector<8x16x128xf32>
    %77 = tpu.concatenate %74, %72, %76 in 2 : vector<8x16x128xf32>, vector<8x16x128xf32>, vector<8x16x128xf32> -> vector<8x16x384xf32>
    %78 = vector.shape_cast %77 : vector<8x16x384xf32> to vector<128x384xf32>
    %c0_52 = arith.constant 0 : index
    %c0_53 = arith.constant 0 : index
    %79 = vector.load %arg5[%c0_52, %c0_53] : memref<1152x128xf32, #tpu.memory_space<vmem>>, vector<384x128xf32>
    %cst_54 = arith.constant dense<0.000000e+00> : vector<128x128xf32>
    %80 = tpu.matmul %78, %79, %cst_54 {dimension_numbers = #tpu.dot_dimension_numbers<[1], [0], [0], [1], [0, 0, 1, 1], [], []>} : vector<128x384xf32>, vector<384x128xf32>, vector<128x128xf32> -> vector<128x128xf32>
    %c0_55 = arith.constant 0 : index
    %c0_56 = arith.constant 0 : index
    %81 = vector.load %arg11[%c0_55, %c0_56] : memref<160x128xf32, #tpu.memory_space<vmem>>, vector<128x128xf32>
    tpu.vector_store %arg11[%c0_55, %c0_56], %80 {strides = array<i32>} : memref<160x128xf32, #tpu.memory_space<vmem>>, vector<128x128xf32>,
    %c1_57 = arith.constant 1 : index
    %c0_58 = arith.constant 0 : index
    %c0_59 = arith.constant 0 : index
    %82 = vector.load %arg10[%c1_57, %c0_58, %c0_59] : memref<10x16x128xf32, #tpu.memory_space<vmem>>, vector<8x16x128xf32>
    %83 = vector.extract_strided_slice %82 {offsets = [0, 0, 0], sizes = [8, 15, 128], strides = [1, 1, 1]} : vector<8x16x128xf32> to vector<8x15x128xf32>
    %84 = tpu.concatenate %71, %83 in 1 : vector<8x1x128xf32>, vector<8x15x128xf32> -> vector<8x16x128xf32>
    %85 = vector.extract_strided_slice %82 {offsets = [0, 1, 0], sizes = [8, 15, 128], strides = [1, 1, 1]} : vector<8x16x128xf32> to vector<8x15x128xf32>
    %86 = tpu.concatenate %85, %71 in 1 : vector<8x15x128xf32>, vector<8x1x128xf32> -> vector<8x16x128xf32>
    %87 = tpu.concatenate %84, %82, %86 in 2 : vector<8x16x128xf32>, vector<8x16x128xf32>, vector<8x16x128xf32> -> vector<8x16x384xf32>
    %88 = vector.shape_cast %87 : vector<8x16x384xf32> to vector<128x384xf32>
    %c384_60 = arith.constant 384 : index
    %c0_61 = arith.constant 0 : index
    %89 = vector.load %arg5[%c384_60, %c0_61] : memref<1152x128xf32, #tpu.memory_space<vmem>>, vector<384x128xf32>
    %cst_62 = arith.constant dense<0.000000e+00> : vector<128x128xf32>
    %90 = tpu.matmul %88, %89, %cst_62 {dimension_numbers = #tpu.dot_dimension_numbers<[1], [0], [0], [1], [0, 0, 1, 1], [], []>} : vector<128x384xf32>, vector<384x128xf32>, vector<128x128xf32> -> vector<128x128xf32>
    %c0_63 = arith.constant 0 : index
    %c0_64 = arith.constant 0 : index
    %91 = vector.load %arg11[%c0_63, %c0_64] : memref<160x128xf32, #tpu.memory_space<vmem>>, vector<128x128xf32>
    %92 = arith.addf %91, %90 : vector<128x128xf32>
    %c0_65 = arith.constant 0 : index
    %c0_66 = arith.constant 0 : index
    %93 = vector.load %arg11[%c0_65, %c0_66] : memref<160x128xf32, #tpu.memory_space<vmem>>, vector<128x128xf32>
    tpu.vector_store %arg11[%c0_65, %c0_66], %92 {strides = array<i32>} : memref<160x128xf32, #tpu.memory_space<vmem>>, vector<128x128xf32>,
    %c2_67 = arith.constant 2 : index
    %c0_68 = arith.constant 0 : index
    %c0_69 = arith.constant 0 : index
    %94 = vector.load %arg10[%c2_67, %c0_68, %c0_69] : memref<10x16x128xf32, #tpu.memory_space<vmem>>, vector<8x16x128xf32>
    %95 = vector.extract_strided_slice %94 {offsets = [0, 0, 0], sizes = [8, 15, 128], strides = [1, 1, 1]} : vector<8x16x128xf32> to vector<8x15x128xf32>
    %96 = tpu.concatenate %71, %95 in 1 : vector<8x1x128xf32>, vector<8x15x128xf32> -> vector<8x16x128xf32>
    %97 = vector.extract_strided_slice %94 {offsets = [0, 1, 0], sizes = [8, 15, 128], strides = [1, 1, 1]} : vector<8x16x128xf32> to vector<8x15x128xf32>
    %98 = tpu.concatenate %97, %71 in 1 : vector<8x15x128xf32>, vector<8x1x128xf32> -> vector<8x16x128xf32>
    %99 = tpu.concatenate %96, %94, %98 in 2 : vector<8x16x128xf32>, vector<8x16x128xf32>, vector<8x16x128xf32> -> vector<8x16x384xf32>
    %100 = vector.shape_cast %99 : vector<8x16x384xf32> to vector<128x384xf32>
    %c768_70 = arith.constant 768 : index
    %c0_71 = arith.constant 0 : index
    %101 = vector.load %arg5[%c768_70, %c0_71] : memref<1152x128xf32, #tpu.memory_space<vmem>>, vector<384x128xf32>
    %cst_72 = arith.constant dense<0.000000e+00> : vector<128x128xf32>
    %102 = tpu.matmul %100, %101, %cst_72 {dimension_numbers = #tpu.dot_dimension_numbers<[1], [0], [0], [1], [0, 0, 1, 1], [], []>} : vector<128x384xf32>, vector<384x128xf32>, vector<128x128xf32> -> vector<128x128xf32>
    %c0_73 = arith.constant 0 : index
    %c0_74 = arith.constant 0 : index
    %103 = vector.load %arg11[%c0_73, %c0_74] : memref<160x128xf32, #tpu.memory_space<vmem>>, vector<128x128xf32>
    %104 = arith.addf %103, %102 : vector<128x128xf32>
    %c0_75 = arith.constant 0 : index
    %c0_76 = arith.constant 0 : index
    %105 = vector.load %arg11[%c0_75, %c0_76] : memref<160x128xf32, #tpu.memory_space<vmem>>, vector<128x128xf32>
    tpu.vector_store %arg11[%c0_75, %c0_76], %104 {strides = array<i32>} : memref<160x128xf32, #tpu.memory_space<vmem>>, vector<128x128xf32>,
    %c0_77 = arith.constant 0 : index
    %c0_78 = arith.constant 0 : index
    %106 = vector.load %arg11[%c0_77, %c0_78] : memref<160x128xf32, #tpu.memory_space<vmem>>, vector<128x128xf32>
    %c0_79 = arith.constant 0 : index
    %c0_80 = arith.constant 0 : index
    %107 = vector.load %arg7[%c0_79, %c0_80] : memref<1x128xf32, #tpu.memory_space<vmem>>, vector<1x128xf32>
    %108 = vector.shape_cast %107 : vector<1x128xf32> to vector<128xf32>
    %109 = vector.shape_cast %108 : vector<128xf32> to vector<1x128xf32>
    %110 = vector.broadcast %109 : vector<1x128xf32> to vector<128x128xf32>
    %111 = arith.addf %106, %110 : vector<128x128xf32>
    %112 = arith.negf %111 : vector<128x128xf32>
    %113 = math.exp %112 : vector<128x128xf32>
    %cst_81 = arith.constant 1.000000e+00 : f32
    %114 = vector.broadcast %cst_81 : f32 to vector<128x128xf32>
    %115 = arith.addf %114, %113 : vector<128x128xf32>
    %116 = arith.divf %114, %115 : vector<128x128xf32>
    %117 = arith.mulf %111, %116 : vector<128x128xf32>
    %c0_82 = arith.constant 0 : index
    %c0_83 = arith.constant 0 : index
    %c0_84 = arith.constant 0 : index
    %c0_85 = arith.constant 0 : index
    %118 = vector.load %arg2[%c0_82, %c0_83, %c0_84, %c0_85] : memref<1x8x16x128xf32, #tpu.memory_space<vmem>>, vector<1x8x16x128xf32>
    %119 = vector.shape_cast %117 : vector<128x128xf32> to vector<1x8x16x128xf32>
    %120 = arith.addf %118, %119 : vector<1x8x16x128xf32>
    %c0_86 = arith.constant 0 : index
    %c0_87 = arith.constant 0 : index
    %c0_88 = arith.constant 0 : index
    %c0_89 = arith.constant 0 : index
    %121 = vector.load %arg8[%c0_86, %c0_87, %c0_88, %c0_89] : memref<1x8x16x128xf32, #tpu.memory_space<vmem>>, vector<1x8x16x128xf32>
    tpu.vector_store %arg8[%c0_86, %c0_87, %c0_88, %c0_89], %120 {strides = array<i32>} : memref<1x8x16x128xf32, #tpu.memory_space<vmem>>, vector<1x8x16x128xf32>,
    return
  }
  func.func @transform_0(%arg0: i32, %arg1: i32) -> (i32, i32, i32, i32) {
    %c0_i32 = arith.constant 0 : i32
    %c0_i32_0 = arith.constant 0 : i32
    %c0_i32_1 = arith.constant 0 : i32
    return %arg0, %arg1, %c0_i32, %c0_i32_0 : i32, i32, i32, i32
  }
  func.func @transform_2(%arg0: i32, %arg1: i32) -> (i32, i32) {
    %c0_i32 = arith.constant 0 : i32
    %c0_i32_0 = arith.constant 0 : i32
    %c0_i32_1 = arith.constant 0 : i32
    return %c0_i32, %c0_i32_0 : i32, i32
  }
  func.func @transform_3(%arg0: i32, %arg1: i32) -> (i32, i32) {
    %c0_i32 = arith.constant 0 : i32
    %c0_i32_0 = arith.constant 0 : i32
    %c0_i32_1 = arith.constant 0 : i32
    return %c0_i32, %c0_i32_0 : i32, i32
  }
  func.func @transform_4(%arg0: i32, %arg1: i32) -> (i32, i32) {
    %c0_i32 = arith.constant 0 : i32
    %c0_i32_0 = arith.constant 0 : i32
    %c0_i32_1 = arith.constant 0 : i32
    return %c0_i32, %c0_i32_0 : i32, i32
  }
  func.func @transform_5(%arg0: i32, %arg1: i32) -> (i32, i32) {
    %c0_i32 = arith.constant 0 : i32
    %c0_i32_0 = arith.constant 0 : i32
    %c0_i32_1 = arith.constant 0 : i32
    return %c0_i32, %c0_i32_0 : i32, i32
  }
  func.func @transform_6(%arg0: i32, %arg1: i32) -> (i32, i32, i32, i32) {
    %c0_i32 = arith.constant 0 : i32
    %c0_i32_0 = arith.constant 0 : i32
    %c0_i32_1 = arith.constant 0 : i32
    return %arg0, %arg1, %c0_i32, %c0_i32_0 : i32, i32, i32, i32
  }
}

</mosaic_0001>

<llo_original>
// kernel: tpu_custom_call.1
$region0: #{tpu_custom_call.1}
  #allocation0 [shape = 'u32[]', space=smem, size = 0x4, offset = 0x4, fixed_abs, tag = 'smem constant byte address 0x4 - core index']
  #allocation1 [shape = 'u32[144,128]{1,0:T(1,128)}', space=vmem, size = 0x12000, scoped, tag = 'internal scratch']
  #allocation2 [shape = 'f32[12,16,128]{2,1,0:T(8,128)}', space=vmem, size = 0x18000, scoped, tag = 'scratch operand']
  #allocation3 [shape = 'f32[10,16,128]{2,1,0:T(8,128)}', space=vmem, size = 0x14000, scoped, tag = 'scratch operand']
  #allocation4 [shape = 'f32[160,128]{1,0:T(8,128)}', space=vmem, size = 0x14000, scoped, tag = 'scratch operand']
  #allocation5 [shape = 's32[2]{0}', space=sflag, size = 0x8, scoped, tag = 'scratch operand']
  #allocation13 [shape = 's32[]', space=sflag, size = 0x4, offset = 0, fixed_abs, tag = 'sflag constant byte address 0x0 - dummy sync flag']
  #allocation14 [shape = 's32[]', space=sflag, size = 0x4, offset = 0, fixed_abs, tag = 'sflag constant byte address 0x0 - dummy sync flag']
  #allocation15 [shape = 'u32[]', space=smem, size = 0x4, offset = 0x44, fixed_abs, tag = 'smem constant byte address 0x44 - assertion arg 0']
  #allocation16 [shape = 'u32[]', space=smem, size = 0x4, offset = 0x48, fixed_abs, tag = 'smem constant byte address 0x48 - assertion arg 1']
  #allocation17 [shape = 's32[]', space=sflag, size = 0x4, offset = 0, fixed_abs, tag = 'sflag constant byte address 0x0 - dummy sync flag']
  #allocation18 [shape = 's32[]', space=sflag, size = 0x4, offset = 0, fixed_abs, tag = 'sflag constant byte address 0x0 - dummy sync flag']
  %s0 = inlined_call_operand.hbm [shape: f32[2,16,16,128], index: 0, kind: input, shape index: {}]
  %s1 = inlined_call_operand.hbm [shape: f32[2,16,16,128], index: 1, kind: input, shape index: {}]
  %s2 = inlined_call_operand.hbm [shape: f32[1152,128], index: 2, kind: input, shape index: {}]
  %s3 = inlined_call_operand.hbm [shape: f32[1152,128], index: 3, kind: input, shape index: {}]
  %s4 = inlined_call_operand.vmem [shape: f32[1,128], index: 4, kind: input, shape index: {}]
  %s5 = inlined_call_operand.vmem [shape: f32[1,128], index: 5, kind: input, shape index: {}]
  %s6 = inlined_call_operand.hbm [shape: f32[2,16,16,128], index: 6, kind: output, shape index: {}]
  %s7 = sld [smem:[#allocation0]]
  $region97: #{tpu_custom_call.1} parent=0
    _
  %s9 = ssub.s32 1, %s7
  %s10 = scalar_select 0, %s9, %s7
  $region1: #{tpu_custom_call.1} parent=0
    #allocation6 [shape = 'u8[131072]{0}', space=vmem, size = 0x20000, scoped, tag = 'input window, operand 0']
    #allocation7 [shape = 's32[2]{0}', space=sflag, size = 0x8, scoped, tag = 'scoped memory for tpu_custom_call.1']
    #allocation8 [shape = 's32[2]{0}', space=sflag, size = 0x8, scoped, tag = 'scoped memory for tpu_custom_call.1']
    #allocation9 [shape = 'u8[589824]{0}', space=vmem, size = 0x90000, scoped, tag = 'input window, operand 2, single buffered']
    #allocation10 [shape = 's32[1]{0}', space=sflag, size = 0x4, scoped, tag = 'scoped memory for tpu_custom_call.1']
    #allocation11 [shape = 'u8[589824]{0}', space=vmem, size = 0x90000, scoped, tag = 'input window, operand 3, single buffered']
    #allocation12 [shape = 'u8[131072]{0}', space=vmem, size = 0x20000, scoped, tag = 'output window, operand 0']
    %11 = vsyncpa [#allocation7], 0
    %s12 = scalar_lea.sflag [#allocation7], 1
    %13 = vsyncpa %s12, 0
    %14 = vsyncpa [#allocation10], 0
    %15 = vsyncpa [#allocation8], 0
    %s16 = scalar_lea.sflag [#allocation8], 1
    %17 = vsyncpa %s16, 0
    loop: start=0, step=1, limit=6
    $region2: #{tpu_custom_call.1} parent=1 // loop_pre_header
      _
    $region3: #{tpu_custom_call.1} parent=1 // loop_header
      %s19 = sphi 0, %s23
      %p20 = scmp.ge.s32.totalorder %s19, 6
      %s26 = sphi 0, %s38
      %s27 = sphi 0, %s34
      %s28 = sphi 0, %s26
      %s29 = sphi 0, %s27
      %s30 = sphi 0, %s28
      %s31 = sphi 0, %s29
      %s43 = sphi 0, %s45
      %s46 = sphi 0, %s43
      %s47 = sphi 0, %s46
      %s63 = sphi 0, %s47
      %s67 = sphi 0, %s67
      %s69 = sphi 0, %s67
      %s70 = sphi 0, %s69
      %s84 = sphi 0, %s70
      %s88 = sphi 0, %s88
      %s90 = sphi 0, %s88
      %s91 = sphi 0, %s90
      %s105 = sphi 0, %s91
      %s109 = sphi 0, %s109
      %s111 = sphi 0, %s109
      %s112 = sphi 0, %s111
      %s126 = sphi 0, %s112
      %s130 = sphi 0, %s130
      %s132 = sphi 0, %s130
      %s133 = sphi 0, %s132
      %s147 = sphi 0, %s133
      %s155 = sphi 0, %s157
      %s158 = sphi 0, %s155
      %s159 = sphi 0, %s158
      %s175 = sphi 0, %s159
    $region4: #{tpu_custom_call.1} parent=1 // loop_header_branch
      %22 = sbr.rel (%p20) target = $region8
    $region5: #{tpu_custom_call.1} parent=1 // loop_body
      %s24 = ssub.s32 %s19, 1
      %s25 = ssub.s32 %s19, 2
      %s32 = sadd.s32 1, %s27
      %p33 = scmp.ge.s32.totalorder %s32, 2
      %s34 = scalar_select %p33, 0, %s32
      %s35 = sadd.s32 1, %s26
      %s36 = scalar_select %p33, %s35, %s26
      %p37 = scmp.ge.s32.totalorder %s36, 2
      %s38 = scalar_select %p37, 0, %s36
      %s39 = ssub.s32 %s26, %s38
      %s40 = ssub.s32 %s27, %s34
      %s41 = sor.u32 %s39, %s40
      %p42 = scmp.eq.s32.totalorder %s41, 0
      %s44 = sadd.s32 %s43, 1
      %s45 = scalar_select %p42, %s43, %s44
      %p48 = pneg %p42
      %p49 = scmp.eq.s32.totalorder %s19, 3
      %p50 = por %p48, %p49
      %p51 = scmp.ne.s32.totalorder %s43, %s46
      %p52 = scmp.eq.s32.totalorder %s19, 0
      %p53 = por %p51, %p52
      %p54 = scmp.ne.s32.totalorder %s43, %s46
      %p55 = scmp.eq.s32.totalorder %s24, 3
      %p56 = por %p54, %p55
      %p57 = scmp.ne.s32.totalorder %s46, %s47
      %p58 = scmp.eq.s32.totalorder %s24, 0
      %p59 = por %p57, %p58
      %p60 = scmp.ne.s32.totalorder %s46, %s47
      %p61 = scmp.eq.s32.totalorder %s25, 3
      %p62 = por %p60, %p61
      %p64 = scmp.ne.s32.totalorder %s47, %s63
      %p65 = scmp.eq.s32.totalorder %s25, 0
      %p66 = por %p64, %p65
      %s68 = sadd.s32 %s67, 1
      %p71 = scmp.eq.s32.totalorder %s19, 3
      %p72 = scmp.ne.s32.totalorder %s67, %s69
      %p73 = scmp.eq.s32.totalorder %s19, 0
      %p74 = por %p72, %p73
      %p75 = scmp.ne.s32.totalorder %s67, %s69
      %p76 = scmp.eq.s32.totalorder %s24, 3
      %p77 = por %p75, %p76
      %p78 = scmp.ne.s32.totalorder %s69, %s70
      %p79 = scmp.eq.s32.totalorder %s24, 0
      %p80 = por %p78, %p79
      %p81 = scmp.ne.s32.totalorder %s69, %s70
      %p82 = scmp.eq.s32.totalorder %s25, 3
      %p83 = por %p81, %p82
      %p85 = scmp.ne.s32.totalorder %s70, %s84
      %p86 = scmp.eq.s32.totalorder %s25, 0
      %p87 = por %p85, %p86
      %s89 = sadd.s32 %s88, 1
      %p92 = scmp.eq.s32.totalorder %s19, 3
      %p93 = scmp.ne.s32.totalorder %s88, %s90
      %p94 = scmp.eq.s32.totalorder %s19, 0
      %p95 = por %p93, %p94
      %p96 = scmp.ne.s32.totalorder %s88, %s90
      %p97 = scmp.eq.s32.totalorder %s24, 3
      %p98 = por %p96, %p97
      %p99 = scmp.ne.s32.totalorder %s90, %s91
      %p100 = scmp.eq.s32.totalorder %s24, 0
      %p101 = por %p99, %p100
      %p102 = scmp.ne.s32.totalorder %s90, %s91
      %p103 = scmp.eq.s32.totalorder %s25, 3
      %p104 = por %p102, %p103
      %p106 = scmp.ne.s32.totalorder %s91, %s105
      %p107 = scmp.eq.s32.totalorder %s25, 0
      %p108 = por %p106, %p107
      %s110 = sadd.s32 %s109, 1
      %p113 = scmp.eq.s32.totalorder %s19, 3
      %p114 = scmp.ne.s32.totalorder %s109, %s111
      %p115 = scmp.eq.s32.totalorder %s19, 0
      %p116 = por %p114, %p115
      %p117 = scmp.ne.s32.totalorder %s109, %s111
      %p118 = scmp.eq.s32.totalorder %s24, 3
      %p119 = por %p117, %p118
      %p120 = scmp.ne.s32.totalorder %s111, %s112
      %p121 = scmp.eq.s32.totalorder %s24, 0
      %p122 = por %p120, %p121
      %p123 = scmp.ne.s32.totalorder %s111, %s112
      %p124 = scmp.eq.s32.totalorder %s25, 3
      %p125 = por %p123, %p124
      %p127 = scmp.ne.s32.totalorder %s112, %s126
      %p128 = scmp.eq.s32.totalorder %s25, 0
      %p129 = por %p127, %p128
      %s131 = sadd.s32 %s130, 1
      %p134 = scmp.eq.s32.totalorder %s19, 3
      %p135 = scmp.ne.s32.totalorder %s130, %s132
      %p136 = scmp.eq.s32.totalorder %s19, 0
      %p137 = por %p135, %p136
      %p138 = scmp.ne.s32.totalorder %s130, %s132
      %p139 = scmp.eq.s32.totalorder %s24, 3
      %p140 = por %p138, %p139
      %p141 = scmp.ne.s32.totalorder %s132, %s133
      %p142 = scmp.eq.s32.totalorder %s24, 0
      %p143 = por %p141, %p142
      %p144 = scmp.ne.s32.totalorder %s132, %s133
      %p145 = scmp.eq.s32.totalorder %s25, 3
      %p146 = por %p144, %p145
      %p148 = scmp.ne.s32.totalorder %s133, %s147
      %p149 = scmp.eq.s32.totalorder %s25, 0
      %p150 = por %p148, %p149
      %s151 = ssub.s32 %s26, %s38
      %s152 = ssub.s32 %s27, %s34
      %s153 = sor.u32 %s151, %s152
      %p154 = scmp.eq.s32.totalorder %s153, 0
      %s156 = sadd.s32 %s155, 1
      %s157 = scalar_select %p154, %s155, %s156
      %p160 = pneg %p154
      %p161 = scmp.eq.s32.totalorder %s19, 3
      %p162 = por %p160, %p161
      %p163 = scmp.ne.s32.totalorder %s155, %s158
      %p164 = scmp.eq.s32.totalorder %s19, 0
      %p165 = por %p163, %p164
      %p166 = scmp.ne.s32.totalorder %s155, %s158
      %p167 = scmp.eq.s32.totalorder %s24, 3
      %p168 = por %p166, %p167
      %p169 = scmp.ne.s32.totalorder %s158, %s159
      %p170 = scmp.eq.s32.totalorder %s24, 0
      %p171 = por %p169, %p170
      %p172 = scmp.ne.s32.totalorder %s158, %s159
      %p173 = scmp.eq.s32.totalorder %s25, 3
      %p174 = por %p172, %p173
      %p176 = scmp.ne.s32.totalorder %s159, %s175
      %p177 = scmp.eq.s32.totalorder %s25, 0
      %p178 = por %p176, %p177
      %p179 = scmp.le.s32.totalorder 1, %s19
      %p180 = scmp.lt.s32.totalorder %s19, 5
      %p181 = pnand %p179, %p180
      %p182 = pneg %p181
      // Predicated region
      $region9: #{tpu_custom_call.1} parent=5 // pred_check
        _
      $region10: #{tpu_custom_call.1} parent=5 // pred_check_branch
        %184 = sbr.rel (%p181) target = $region12
      $region11: #{tpu_custom_call.1} parent=5 // pred_region
        %s185 = ssub.s32 %s19, 1
        // Predicated region
        $region13: #{tpu_custom_call.1} parent=11 // pred_check
          %p186 = pneg %p80
        $region14: #{tpu_custom_call.1} parent=11 // pred_check_branch
          %188 = sbr.rel (%p186) target = $region16
        $region15: #{tpu_custom_call.1} parent=11 // pred_region
          %s190 = ssub.s32 18432, 18432
          %191 = vsyncadd [#allocation10], %s190
          %s192 = sshll.u32 [#allocation9], 4
          %s193 = int_to_ptr.vmem [resolvable:$true] %s192
          %198 = dma.hbm_to_vmem [thread:$0]  %s2, 18432, %s193, [#allocation10], 128, 128, 8
        $region16: #{tpu_custom_call.1} parent=11 // pred_fallthru
          _
        // Predicated region
        $region17: #{tpu_custom_call.1} parent=11 // pred_check
          %p199 = pneg %p101
        $region18: #{tpu_custom_call.1} parent=11 // pred_check_branch
          %201 = sbr.rel (%p199) target = $region20
        $region19: #{tpu_custom_call.1} parent=11 // pred_region
          %s203 = ssub.s32 18432, 18432
          %204 = vsyncadd [#allocation10], %s203
          %s205 = sshll.u32 [#allocation11], 4
          %s206 = int_to_ptr.vmem [resolvable:$true] %s205
          %211 = dma.hbm_to_vmem [thread:$0]  %s3, 18432, %s206, [#allocation10], 128, 128, 8
        $region20: #{tpu_custom_call.1} parent=11 // pred_fallthru
          _
        // Predicated region
        $region21: #{tpu_custom_call.1} parent=11 // pred_check
          %p212 = pneg %p122
        $region22: #{tpu_custom_call.1} parent=11 // pred_check_branch
          %214 = sbr.rel (%p212) target = $region24
        $region23: #{tpu_custom_call.1} parent=11 // pred_region
          _
        $region24: #{tpu_custom_call.1} parent=11 // pred_fallthru
          _
        // Predicated region
        $region25: #{tpu_custom_call.1} parent=11 // pred_check
          %p215 = pneg %p143
        $region26: #{tpu_custom_call.1} parent=11 // pred_check_branch
          %217 = sbr.rel (%p215) target = $region28
        $region27: #{tpu_custom_call.1} parent=11 // pred_region
          _
        $region28: #{tpu_custom_call.1} parent=11 // pred_fallthru
          _
      $region12: #{tpu_custom_call.1} parent=5 // pred_fallthru
        _
      %p218 = scmp.lt.s32.totalorder %s19, 4
      // Predicated region
      $region29: #{tpu_custom_call.1} parent=5 // pred_check
        %p219 = pneg %p218
      $region30: #{tpu_custom_call.1} parent=5 // pred_check_branch
        %221 = sbr.rel (%p219) target = $region32
      $region31: #{tpu_custom_call.1} parent=5 // pred_region
        // Predicated region
        $region33: #{tpu_custom_call.1} parent=31 // pred_check
          %p222 = pneg %p53
        $region34: #{tpu_custom_call.1} parent=31 // pred_check_branch
          %224 = sbr.rel (%p222) target = $region36
        $region35: #{tpu_custom_call.1} parent=31 // pred_region
          %s225 = sand.u32 %s43, 1
          %s226 = scalar_lea.sflag [#allocation7], %s225
          %s227 = sand.u32 %s43, 1
          %s228 = smul.addr %s227, 128
          %s229 = scalar_lea.vmem [#allocation6], %s228
          %s230 = smul.u32 8, %s27
          %s232 = ssub.s32 2048, 2048
          %233 = vsyncadd %s226, %s232
          %s234 = smul.addr %s230, 2
          %s235 = smul.addr %s26, 32
          %s236 = sadd.s32 %s234, %s235
          %s237 = smul.addr %s236, 128
          %s238 = scalar_lea.hbm %s0, %s237
          %s239 = sshll.u32 %s229, 4
          %s240 = int_to_ptr.vmem [resolvable:$true] %s239
          %245 = dma.hbm_to_vmem [thread:$0]  %s238, 2048, %s240, %s226, 128, 128, 8
        $region36: #{tpu_custom_call.1} parent=31 // pred_fallthru
          _
      $region32: #{tpu_custom_call.1} parent=5 // pred_fallthru
        _
      %p246 = scmp.le.s32.totalorder 1, %s19
      %p247 = scmp.lt.s32.totalorder %s19, 5
      %p248 = pnand %p246, %p247
      %p249 = pneg %p248
      // Predicated region
      $region37: #{tpu_custom_call.1} parent=5 // pred_check
        _
      $region38: #{tpu_custom_call.1} parent=5 // pred_check_branch
        %251 = sbr.rel (%p248) target = $region40
      $region39: #{tpu_custom_call.1} parent=5 // pred_region
        %s252 = ssub.s32 %s19, 1
        %s253 = sand.u32 %s46, 1
        %s254 = scalar_lea.sflag [#allocation7], %s253
        %s255 = sand.u32 %s46, 1
        %s256 = smul.addr %s255, 128
        %s257 = scalar_lea.vmem [#allocation6], %s256
        // Predicated region
        $region41: #{tpu_custom_call.1} parent=39 // pred_check
          %p258 = pneg %p59
        $region42: #{tpu_custom_call.1} parent=39 // pred_check_branch
          %260 = sbr.rel (%p258) target = $region44
        $region43: #{tpu_custom_call.1} parent=39 // pred_region
          %261 = dma.done %s254, 2048
        $region44: #{tpu_custom_call.1} parent=39 // pred_fallthru
          _
        // Predicated region
        $region45: #{tpu_custom_call.1} parent=39 // pred_check
          %p262 = pneg %p80
        $region46: #{tpu_custom_call.1} parent=39 // pred_check_branch
          %264 = sbr.rel (%p262) target = $region48
        $region47: #{tpu_custom_call.1} parent=39 // pred_region
          %265 = dma.done [#allocation10], 18432
        $region48: #{tpu_custom_call.1} parent=39 // pred_fallthru
          _
        // Predicated region
        $region49: #{tpu_custom_call.1} parent=39 // pred_check
          %p266 = pneg %p101
        $region50: #{tpu_custom_call.1} parent=39 // pred_check_branch
          %268 = sbr.rel (%p266) target = $region52
        $region51: #{tpu_custom_call.1} parent=39 // pred_region
          %269 = dma.done [#allocation10], 18432
        $region52: #{tpu_custom_call.1} parent=39 // pred_fallthru
          _
        %s270 = sand.u32 %s46, 1
        %s271 = scalar_lea.sflag [#allocation7], %s270
        %s272 = sand.u32 %s46, 1
        %s273 = smul.addr %s272, 128
        %s274 = scalar_lea.vmem [#allocation6], %s273
        %p275 = pneg %p59
        %p276 = pneg %p56
        %p277 = pneg %p80
        %p278 = pneg %p77
        %p279 = pneg %p101
        %p280 = pneg %p98
        %p281 = pneg %p122
        %p282 = pneg %p119
        %p283 = pneg %p143
        %p284 = pneg %p140
        %p285 = pneg %p171
        %p286 = pneg %p168
        %s287 = sand.u32 %s158, 1
        %s288 = scalar_lea.sflag [#allocation8], %s287
        %s289 = sand.u32 %s158, 1
        %s290 = smul.addr %s289, 128
        %s291 = scalar_lea.vmem [#allocation12], %s290
        %s292 = smul.u32 8, %s29
        %s293 = smul.u32 8, %s29
        %v294 = vld [vmem:[%s257] sm:$0xff]
        %v295 = vld [vmem:[%s257 + $0x8] sm:$0xff]
        %v296 = vld [vmem:[%s257 + $0x10] sm:$0xff]
        %v297 = vld [vmem:[%s257 + $0x18] sm:$0xff]
        %v298 = vld [vmem:[%s257 + $0x20] sm:$0xff]
        %v299 = vld [vmem:[%s257 + $0x28] sm:$0xff]
        %v300 = vld [vmem:[%s257 + $0x30] sm:$0xff]
        %v301 = vld [vmem:[%s257 + $0x38] sm:$0xff]
        %v302 = vld [vmem:[%s257 + $0x40] sm:$0xff]
        %v303 = vld [vmem:[%s257 + $0x48] sm:$0xff]
        %v304 = vld [vmem:[%s257 + $0x50] sm:$0xff]
        %v305 = vld [vmem:[%s257 + $0x58] sm:$0xff]
        %v306 = vld [vmem:[%s257 + $0x60] sm:$0xff]
        %v307 = vld [vmem:[%s257 + $0x68] sm:$0xff]
        %v308 = vld [vmem:[%s257 + $0x70] sm:$0xff]
        %v309 = vld [vmem:[%s257 + $0x78] sm:$0xff]
        %s310 = scalar_lea.vmem [#allocation2], 32
        %311 = vst [vmem:[%s310] sm:$0xff] %v294
        %312 = vst [vmem:[%s310 + $0x8] sm:$0xff] %v295
        %313 = vst [vmem:[%s310 + $0x10] sm:$0xff] %v296
        %314 = vst [vmem:[%s310 + $0x18] sm:$0xff] %v297
        %315 = vst [vmem:[%s310 + $0x20] sm:$0xff] %v298
        %316 = vst [vmem:[%s310 + $0x28] sm:$0xff] %v299
        %317 = vst [vmem:[%s310 + $0x30] sm:$0xff] %v300
        %318 = vst [vmem:[%s310 + $0x38] sm:$0xff] %v301
        %319 = vst [vmem:[%s310 + $0x40] sm:$0xff] %v302
        %320 = vst [vmem:[%s310 + $0x48] sm:$0xff] %v303
        %321 = vst [vmem:[%s310 + $0x50] sm:$0xff] %v304
        %322 = vst [vmem:[%s310 + $0x58] sm:$0xff] %v305
        %323 = vst [vmem:[%s310 + $0x60] sm:$0xff] %v306
        %324 = vst [vmem:[%s310 + $0x68] sm:$0xff] %v307
        %325 = vst [vmem:[%s310 + $0x70] sm:$0xff] %v308
        %326 = vst [vmem:[%s310 + $0x78] sm:$0xff] %v309
        %s327 = smul.u32 %s29, 8
        %p328 = scmp.gt.s32.totalorder %s29, 0
        // Predicated region
        $region53: #{tpu_custom_call.1} parent=39 // pred_check
          %p329 = pneg %p328
        $region54: #{tpu_custom_call.1} parent=39 // pred_check_branch
          %331 = sbr.rel (%p329) target = $region56
        $region55: #{tpu_custom_call.1} parent=39 // pred_region
          %s332 = ssub.s32 %s327, 2
          %s333 = smul.u32 %s332, 16
          %s334 = smul.u32 %s28, 256
          %s335 = sadd.s32 %s333, %s334
          %s336 = smul.addr %s335, 16
          %s337 = scalar_lea.hbm %s1, %s336
          // Predicated region
          $region57: #{tpu_custom_call.1} parent=55 // pred_check
            _
          $region58: #{tpu_custom_call.1} parent=55 // pred_check_branch
            %339 = sbr.rel target = $region60
          $region59: #{tpu_custom_call.1} parent=55 // pred_region
            %340 = sst [smem:[#allocation15]] [#allocation14]
            %341 = sst [smem:[#allocation16]] [#allocation13]
          $region60: #{tpu_custom_call.1} parent=55 // pred_fallthru
            _
          %343 = shalt.err (0)
          %s345 = sshll.u32 [#allocation2], 4
          %s346 = int_to_ptr.vmem [resolvable:$true] %s345
          %348 = dma.hbm_to_vmem [thread:$0]  %s337, 512, %s346, [#allocation5]
          %s349 = smul.u32 2, 16
          %s350 = smul.u32 %s349, 1
          %s351 = sshll.u32 %s350, 4
          %352 = dma.done [#allocation5], %s351
        $region56: #{tpu_custom_call.1} parent=39 // pred_fallthru
          _
        %p353 = scmp.eq.s32.totalorder %s29, 0
        // Predicated region
        $region61: #{tpu_custom_call.1} parent=39 // pred_check
          %p354 = pneg %p353
        $region62: #{tpu_custom_call.1} parent=39 // pred_check_branch
          %356 = sbr.rel (%p354) target = $region64
        $region63: #{tpu_custom_call.1} parent=39 // pred_region
          %357 = vst [vmem:[#allocation2] sm:$0xff] 0.0
          %358 = vst [vmem:[#allocation2 + $0x8] sm:$0xff] 0.0
          %359 = vst [vmem:[#allocation2 + $0x10] sm:$0xff] 0.0
          %360 = vst [vmem:[#allocation2 + $0x18] sm:$0xff] 0.0
        $region64: #{tpu_custom_call.1} parent=39 // pred_fallthru
          _
        %p361 = scmp.lt.s32.totalorder %s29, 1
        // Predicated region
        $region65: #{tpu_custom_call.1} parent=39 // pred_check
          %p362 = pneg %p361
        $region66: #{tpu_custom_call.1} parent=39 // pred_check_branch
          %364 = sbr.rel (%p362) target = $region68
        $region67: #{tpu_custom_call.1} parent=39 // pred_region
          %s365 = sadd.s32 %s327, 8
          %s366 = smul.u32 %s365, 16
          %s367 = smul.u32 %s28, 256
          %s368 = sadd.s32 %s366, %s367
          %s369 = smul.addr %s368, 16
          %s370 = scalar_lea.hbm %s1, %s369
          %s371 = scalar_lea.vmem [#allocation2], 160
          %s372 = scalar_lea.sflag [#allocation5], 1
          // Predicated region
          $region69: #{tpu_custom_call.1} parent=67 // pred_check
            _
          $region70: #{tpu_custom_call.1} parent=67 // pred_check_branch
            %374 = sbr.rel target = $region72
          $region71: #{tpu_custom_call.1} parent=67 // pred_region
            %375 = sst [smem:[#allocation15]] [#allocation18]
            %376 = sst [smem:[#allocation16]] [#allocation17]
          $region72: #{tpu_custom_call.1} parent=67 // pred_fallthru
            _
          %378 = shalt.err (0)
          %s380 = sshll.u32 %s371, 4
          %s381 = int_to_ptr.vmem [resolvable:$true] %s380
          %383 = dma.hbm_to_vmem [thread:$0]  %s370, 512, %s381, %s372
          %s384 = smul.u32 2, 16
          %s385 = smul.u32 %s384, 1
          %s386 = sshll.u32 %s385, 4
          %387 = dma.done %s372, %s386
        $region68: #{tpu_custom_call.1} parent=39 // pred_fallthru
          _
        %p388 = scmp.eq.s32.totalorder %s29, 1
        // Predicated region
        $region73: #{tpu_custom_call.1} parent=39 // pred_check
          %p389 = pneg %p388
        $region74: #{tpu_custom_call.1} parent=39 // pred_check_branch
          %391 = sbr.rel (%p389) target = $region76
        $region75: #{tpu_custom_call.1} parent=39 // pred_region
          %s392 = scalar_lea.vmem [#allocation2], 160
          %393 = vst [vmem:[%s392] sm:$0xff] 0.0
          %394 = vst [vmem:[%s392 + $0x8] sm:$0xff] 0.0
          %395 = vst [vmem:[%s392 + $0x10] sm:$0xff] 0.0
          %396 = vst [vmem:[%s392 + $0x18] sm:$0xff] 0.0
        $region76: #{tpu_custom_call.1} parent=39 // pred_fallthru
          _
        %v397 = vld [vmem:[#allocation2] sm:$0xff]
        %v398 = vld [vmem:[#allocation2 + $0x8] sm:$0xff]
        %v399 = vld [vmem:[#allocation2 + $0x10] sm:$0xff]
        %v400 = vld [vmem:[#allocation2 + $0x18] sm:$0xff]
        %v401 = vld [vmem:[#allocation2 + $0x20] sm:$0xff]
        %v402 = vld [vmem:[#allocation2 + $0x28] sm:$0xff]
        %v403 = vld [vmem:[#allocation2 + $0x30] sm:$0xff]
        %v404 = vld [vmem:[#allocation2 + $0x38] sm:$0xff]
        %v405 = vld [vmem:[#allocation2 + $0x40] sm:$0xff]
        %v406 = vld [vmem:[#allocation2 + $0x48] sm:$0xff]
        %v407 = vld [vmem:[#allocation2 + $0x50] sm:$0xff]
        %v408 = vld [vmem:[#allocation2 + $0x58] sm:$0xff]
        %v409 = vld [vmem:[#allocation2 + $0x60] sm:$0xff]
        %v410 = vld [vmem:[#allocation2 + $0x68] sm:$0xff]
        %v411 = vld [vmem:[#allocation2 + $0x70] sm:$0xff]
        %v412 = vld [vmem:[#allocation2 + $0x78] sm:$0xff]
        %v413 = vld [vmem:[#allocation2 + $0x80] sm:$0xff]
        %v414 = vld [vmem:[#allocation2 + $0x88] sm:$0xff]
        %v415 = vld [vmem:[#allocation2 + $0x90] sm:$0xff]
        %v416 = vld [vmem:[#allocation2 + $0x98] sm:$0xff]
        %vm437 = vcmask 1040384
        %v438 = vrot.slane %v397, 7
        %v439 = vrot.slane %v398, 7
        %v440 = vsel %vm437, %v438, %v439
        %v441 = vrot.slane %v399, 7
        %v442 = vrot.slane %v400, 7
        %v443 = vsel %vm437, %v441, %v442
        %v444 = vrot.slane %v401, 7
        %v445 = vrot.slane %v402, 7
        %v446 = vsel %vm437, %v444, %v445
        %v447 = vrot.slane %v403, 7
        %v448 = vrot.slane %v404, 7
        %v449 = vsel %vm437, %v447, %v448
        %v450 = vrot.slane %v405, 7
        %v451 = vrot.slane %v406, 7
        %v452 = vsel %vm437, %v450, %v451
        %v453 = vrot.slane %v407, 7
        %v454 = vrot.slane %v408, 7
        %v455 = vsel %vm437, %v453, %v454
        %v456 = vrot.slane %v409, 7
        %v457 = vrot.slane %v410, 7
        %v458 = vsel %vm437, %v456, %v457
        %v459 = vrot.slane %v411, 7
        %v460 = vrot.slane %v412, 7
        %v461 = vsel %vm437, %v459, %v460
        %v462 = vrot.slane %v413, 7
        %v463 = vrot.slane %v414, 7
        %v464 = vsel %vm437, %v462, %v463
        %v465 = vrot.slane %v415, 7
        %v466 = vrot.slane %v416, 7
        %v467 = vsel %vm437, %v465, %v466
        %v488 = vsel %vm437, 0.0, %v438
        %v489 = vsel %vm437, 0.0, %v441
        %v490 = vsel %vm437, 0.0, %v444
        %v491 = vsel %vm437, 0.0, %v447
        %v492 = vsel %vm437, 0.0, %v450
        %v493 = vsel %vm437, 0.0, %v453
        %v494 = vsel %vm437, 0.0, %v456
        %v495 = vsel %vm437, 0.0, %v459
        %v496 = vsel %vm437, 0.0, %v462
        %v497 = vsel %vm437, 0.0, %v465
        %vm498 = vcmask 1046528
        %v499 = vrot.slane %v397, 1
        %v500 = vrot.slane %v398, 1
        %v501 = vsel %vm498, %v499, %v500
        %v502 = vrot.slane %v399, 1
        %v503 = vrot.slane %v400, 1
        %v504 = vsel %vm498, %v502, %v503
        %v505 = vrot.slane %v401, 1
        %v506 = vrot.slane %v402, 1
        %v507 = vsel %vm498, %v505, %v506
        %v508 = vrot.slane %v403, 1
        %v509 = vrot.slane %v404, 1
        %v510 = vsel %vm498, %v508, %v509
        %v511 = vrot.slane %v405, 1
        %v512 = vrot.slane %v406, 1
        %v513 = vsel %vm498, %v511, %v512
        %v514 = vrot.slane %v407, 1
        %v515 = vrot.slane %v408, 1
        %v516 = vsel %vm498, %v514, %v515
        %v517 = vrot.slane %v409, 1
        %v518 = vrot.slane %v410, 1
        %v519 = vsel %vm498, %v517, %v518
        %v520 = vrot.slane %v411, 1
        %v521 = vrot.slane %v412, 1
        %v522 = vsel %vm498, %v520, %v521
        %v523 = vrot.slane %v413, 1
        %v524 = vrot.slane %v414, 1
        %v525 = vsel %vm498, %v523, %v524
        %v526 = vrot.slane %v415, 1
        %v527 = vrot.slane %v416, 1
        %v528 = vsel %vm498, %v526, %v527
        %v549 = vsel %vm498, %v500, 0.0
        %v550 = vsel %vm498, %v503, 0.0
        %v551 = vsel %vm498, %v506, 0.0
        %v552 = vsel %vm498, %v509, 0.0
        %v553 = vsel %vm498, %v512, 0.0
        %v554 = vsel %vm498, %v515, 0.0
        %v555 = vsel %vm498, %v518, 0.0
        %v556 = vsel %vm498, %v521, 0.0
        %v557 = vsel %vm498, %v524, 0.0
        %v558 = vsel %vm498, %v527, 0.0
        %v559 = vld [vmem:[#allocation9] sm:$0xff]
        %v560 = vld [vmem:[#allocation9 + $0x8] sm:$0xff]
        %v561 = vld [vmem:[#allocation9 + $0x10] sm:$0xff]
        %v562 = vld [vmem:[#allocation9 + $0x18] sm:$0xff]
        %v563 = vld [vmem:[#allocation9 + $0x20] sm:$0xff]
        %v564 = vld [vmem:[#allocation9 + $0x28] sm:$0xff]
        %v565 = vld [vmem:[#allocation9 + $0x30] sm:$0xff]
        %v566 = vld [vmem:[#allocation9 + $0x38] sm:$0xff]
        %v567 = vld [vmem:[#allocation9 + $0x40] sm:$0xff]
        %v568 = vld [vmem:[#allocation9 + $0x48] sm:$0xff]
        %v569 = vld [vmem:[#allocation9 + $0x50] sm:$0xff]
        %v570 = vld [vmem:[#allocation9 + $0x58] sm:$0xff]
        %v571 = vld [vmem:[#allocation9 + $0x60] sm:$0xff]
        %v572 = vld [vmem:[#allocation9 + $0x68] sm:$0xff]
        %v573 = vld [vmem:[#allocation9 + $0x70] sm:$0xff]
        %v574 = vld [vmem:[#allocation9 + $0x78] sm:$0xff]
        %v575 = vld [vmem:[#allocation9 + $0x80] sm:$0xff]
        %v576 = vld [vmem:[#allocation9 + $0x88] sm:$0xff]
        %v577 = vld [vmem:[#allocation9 + $0x90] sm:$0xff]
        %v578 = vld [vmem:[#allocation9 + $0x98] sm:$0xff]
        %v579 = vld [vmem:[#allocation9 + $0xa0] sm:$0xff]
        %v580 = vld [vmem:[#allocation9 + $0xa8] sm:$0xff]
        %v581 = vld [vmem:[#allocation9 + $0xb0] sm:$0xff]
        %v582 = vld [vmem:[#allocation9 + $0xb8] sm:$0xff]
        %v583 = vld [vmem:[#allocation9 + $0xc0] sm:$0xff]
        %v584 = vld [vmem:[#allocation9 + $0xc8] sm:$0xff]
        %v585 = vld [vmem:[#allocation9 + $0xd0] sm:$0xff]
        %v586 = vld [vmem:[#allocation9 + $0xd8] sm:$0xff]
        %v587 = vld [vmem:[#allocation9 + $0xe0] sm:$0xff]
        %v588 = vld [vmem:[#allocation9 + $0xe8] sm:$0xff]
        %v589 = vld [vmem:[#allocation9 + $0xf0] sm:$0xff]
        %v590 = vld [vmem:[#allocation9 + $0xf8] sm:$0xff]
        %v591 = vld [vmem:[#allocation9 + $0x100] sm:$0xff]
        %v592 = vld [vmem:[#allocation9 + $0x108] sm:$0xff]
        %v593 = vld [vmem:[#allocation9 + $0x110] sm:$0xff]
        %v594 = vld [vmem:[#allocation9 + $0x118] sm:$0xff]
        %v595 = vld [vmem:[#allocation9 + $0x120] sm:$0xff]
        %v596 = vld [vmem:[#allocation9 + $0x128] sm:$0xff]
        %v597 = vld [vmem:[#allocation9 + $0x130] sm:$0xff]
        %v598 = vld [vmem:[#allocation9 + $0x138] sm:$0xff]
        %v599 = vld [vmem:[#allocation9 + $0x140] sm:$0xff]
        %v600 = vld [vmem:[#allocation9 + $0x148] sm:$0xff]
        %v601 = vld [vmem:[#allocation9 + $0x150] sm:$0xff]
        %v602 = vld [vmem:[#allocation9 + $0x158] sm:$0xff]
        %v603 = vld [vmem:[#allocation9 + $0x160] sm:$0xff]
        %v604 = vld [vmem:[#allocation9 + $0x168] sm:$0xff]
        %v605 = vld [vmem:[#allocation9 + $0x170] sm:$0xff]
        %v606 = vld [vmem:[#allocation9 + $0x178] sm:$0xff]
        %607 = vmatprep.subr.mxu0 0.0
        %608 = vmatpush1.msra.mxu0 %v559
        %609 = vmatprep.subr.mxu0 0.0
        %610 = vmatpush1.msra.mxu0 %v560
        %611 = vmatprep.subr.mxu0 0.0
        %612 = vmatpush1.msra.mxu0 %v561
        %613 = vmatprep.subr.mxu0 0.0
        %614 = vmatpush1.msra.mxu0 %v562
        %615 = vmatprep.subr.mxu0 0.0
        %616 = vmatpush1.msra.mxu0 %v563
        %617 = vmatprep.subr.mxu0 0.0
        %618 = vmatpush1.msra.mxu0 %v564
        %619 = vmatprep.subr.mxu0 0.0
        %620 = vmatpush1.msra.mxu0 %v565
        %621 = vmatprep.subr.mxu0 0.0
        %622 = vmatpush1.msra.mxu0 %v566
        %623 = vmatprep.subr.mxu0 0.0
        %624 = vmatpush1.msra.mxu0 %v567
        %625 = vmatprep.subr.mxu0 0.0
        %626 = vmatpush1.msra.mxu0 %v568
        %627 = vmatprep.subr.mxu0 0.0
        %628 = vmatpush1.msra.mxu0 %v569
        %629 = vmatprep.subr.mxu0 0.0
        %630 = vmatpush1.msra.mxu0 %v570
        %631 = vmatprep.subr.mxu0 0.0
        %632 = vmatpush1.msra.mxu0 %v571
        %633 = vmatprep.subr.mxu0 0.0
        %634 = vmatpush1.msra.mxu0 %v572
        %635 = vmatprep.subr.mxu0 0.0
        %636 = vmatpush1.msra.mxu0 %v573
        %637 = vmatprep.subr.mxu0 0.0
        %638 = vmatpush1.msra.mxu0 %v574
        %639 = vmatprep.subr.mxu0 0.0
        %640 = vmatpush1.msra.mxu0 %v575
        %641 = vmatprep.subr.mxu0 0.0
        %642 = vmatpush1.msra.mxu0 %v576
        %643 = vmatprep.subr.mxu0 0.0
        %644 = vmatpush1.msra.mxu0 %v577
        %645 = vmatprep.subr.mxu0 0.0
        %646 = vmatpush1.msra.mxu0 %v578
        %647 = vmatprep.subr.mxu0 0.0
        %648 = vmatpush1.msra.mxu0 %v579
        %649 = vmatprep.subr.mxu0 0.0
        %650 = vmatpush1.msra.mxu0 %v580
        %651 = vmatprep.subr.mxu0 0.0
        %652 = vmatpush1.msra.mxu0 %v581
        %653 = vmatprep.subr.mxu0 0.0
        %654 = vmatpush1.msra.mxu0 %v582
        %655 = vmatprep.subr.mxu0 0.0
        %656 = vmatpush1.msra.mxu0 %v583
        %657 = vmatprep.subr.mxu0 0.0
        %658 = vmatpush1.msra.mxu0 %v584
        %659 = vmatprep.subr.mxu0 0.0
        %660 = vmatpush1.msra.mxu0 %v585
        %661 = vmatprep.subr.mxu0 0.0
        %662 = vmatpush1.msra.mxu0 %v586
        %663 = vmatprep.subr.mxu0 0.0
        %664 = vmatpush1.msra.mxu0 %v587
        %665 = vmatprep.subr.mxu0 0.0
        %666 = vmatpush1.msra.mxu0 %v588
        %667 = vmatprep.subr.mxu0 0.0
        %668 = vmatpush1.msra.mxu0 %v589
        %669 = vmatprep.subr.mxu0 0.0
        %670 = vmatpush1.msra.mxu0 %v590
        %671 = vmatprep.mubr.f32.mxu0 %v397
        %672 = vmatmul.mubr.f32.gmra.mrb[0].mxu0 %v488
        %v673 = vpop.f32.mrb[0].mxu0
        %v674 = vadd.f32 0.0, %v673
        %v675 = vpop.f32.mrb[0].mxu0
        %676 = vmatprep.mubr.f32.mxu0 %v398
        %677 = vmatmul.mubr.f32.gmra.mrb[0].mxu0 %v440
        %v678 = vpop.f32.mrb[0].mxu0
        %v679 = vadd.f32 0.0, %v678
        %v680 = vpop.f32.mrb[0].mxu0
        %681 = vmatprep.mubr.f32.mxu0 %v399
        %682 = vmatmul.mubr.f32.gmra.mrb[0].mxu0 %v489
        %v683 = vpop.f32.mrb[0].mxu0
        %v684 = vadd.f32 0.0, %v683
        %v685 = vpop.f32.mrb[0].mxu0
        %686 = vmatprep.mubr.f32.mxu0 %v400
        %687 = vmatmul.mubr.f32.gmra.mrb[0].mxu0 %v443
        %v688 = vpop.f32.mrb[0].mxu0
        %v689 = vadd.f32 0.0, %v688
        %v690 = vpop.f32.mrb[0].mxu0
        %691 = vmatprep.mubr.f32.mxu0 %v401
        %692 = vmatmul.mubr.f32.gmra.mrb[0].mxu0 %v490
        %v693 = vpop.f32.mrb[0].mxu0
        %v694 = vadd.f32 0.0, %v693
        %v695 = vpop.f32.mrb[0].mxu0
        %696 = vmatprep.mubr.f32.mxu0 %v402
        %697 = vmatmul.mubr.f32.gmra.mrb[0].mxu0 %v446
        %v698 = vpop.f32.mrb[0].mxu0
        %v699 = vadd.f32 0.0, %v698
        %v700 = vpop.f32.mrb[0].mxu0
        %701 = vmatprep.mubr.f32.mxu0 %v403
        %702 = vmatmul.mubr.f32.gmra.mrb[0].mxu0 %v491
        %v703 = vpop.f32.mrb[0].mxu0
        %v704 = vadd.f32 0.0, %v703
        %v705 = vpop.f32.mrb[0].mxu0
        %706 = vmatprep.mubr.f32.mxu0 %v404
        %707 = vmatmul.mubr.f32.gmra.mrb[0].mxu0 %v449
        %v708 = vpop.f32.mrb[0].mxu0
        %v709 = vadd.f32 0.0, %v708
        %v710 = vpop.f32.mrb[0].mxu0
        %711 = vmatprep.mubr.f32.mxu0 %v405
        %712 = vmatmul.mubr.f32.gmra.mrb[0].mxu0 %v492
        %v713 = vpop.f32.mrb[0].mxu0
        %v714 = vadd.f32 0.0, %v713
        %v715 = vpop.f32.mrb[0].mxu0
        %716 = vmatprep.mubr.f32.mxu0 %v406
        %717 = vmatmul.mubr.f32.gmra.mrb[0].mxu0 %v452
        %v718 = vpop.f32.mrb[0].mxu0
        %v719 = vadd.f32 0.0, %v718
        %v720 = vpop.f32.mrb[0].mxu0
        %721 = vmatprep.mubr.f32.mxu0 %v407
        %722 = vmatmul.mubr.f32.gmra.mrb[0].mxu0 %v493
        %v723 = vpop.f32.mrb[0].mxu0
        %v724 = vadd.f32 0.0, %v723
        %v725 = vpop.f32.mrb[0].mxu0
        %726 = vmatprep.mubr.f32.mxu0 %v408
        %727 = vmatmul.mubr.f32.gmra.mrb[0].mxu0 %v455
        %v728 = vpop.f32.mrb[0].mxu0
        %v729 = vadd.f32 0.0, %v728
        %v730 = vpop.f32.mrb[0].mxu0
        %731 = vmatprep.mubr.f32.mxu0 %v409
        %732 = vmatmul.mubr.f32.gmra.mrb[0].mxu0 %v494
        %v733 = vpop.f32.mrb[0].mxu0
        %v734 = vadd.f32 0.0, %v733
        %v735 = vpop.f32.mrb[0].mxu0
        %736 = vmatprep.mubr.f32.mxu0 %v410
        %737 = vmatmul.mubr.f32.gmra.mrb[0].mxu0 %v458
        %v738 = vpop.f32.mrb[0].mxu0
        %v739 = vadd.f32 0.0, %v738
        %v740 = vpop.f32.mrb[0].mxu0
        %741 = vmatprep.mubr.f32.mxu0 %v411
        %742 = vmatmul.mubr.f32.gmra.mrb[0].mxu0 %v495
        %v743 = vpop.f32.mrb[0].mxu0
        %v744 = vadd.f32 0.0, %v743
        %v745 = vpop.f32.mrb[0].mxu0
        %746 = vmatprep.mubr.f32.mxu0 %v412
        %747 = vmatmul.mubr.f32.gmra.mrb[0].mxu0 %v461
        %v748 = vpop.f32.mrb[0].mxu0
        %v749 = vadd.f32 0.0, %v748
        %v750 = vpop.f32.mrb[0].mxu0
        %751 = vmatprep.mubr.f32.mxu0 %v413
        %752 = vmatmul.mubr.f32.gmra.mrb[0].mxu0 %v496
        %v753 = vpop.f32.mrb[0].mxu0
        %v754 = vadd.f32 0.0, %v753
        %v755 = vpop.f32.mrb[0].mxu0
        %756 = vmatprep.mubr.f32.mxu0 %v414
        %757 = vmatmul.mubr.f32.gmra.mrb[0].mxu0 %v464
        %v758 = vpop.f32.mrb[0].mxu0
        %v759 = vadd.f32 0.0, %v758
        %v760 = vpop.f32.mrb[0].mxu0
        %761 = vmatprep.mubr.f32.mxu0 %v415
        %762 = vmatmul.mubr.f32.gmra.mrb[0].mxu0 %v497
        %v763 = vpop.f32.mrb[0].mxu0
        %v764 = vadd.f32 0.0, %v763
        %v765 = vpop.f32.mrb[0].mxu0
        %766 = vmatprep.mubr.f32.mxu0 %v416
        %767 = vmatmul.mubr.f32.gmra.mrb[0].mxu0 %v467
        %v768 = vpop.f32.mrb[0].mxu0
        %v769 = vadd.f32 0.0, %v768
        %v770 = vpop.f32.mrb[0].mxu0
        %771 = vdwg.mxu0
        %772 = vmatprep.subr.mxu0 0.0
        %773 = vmatpush1.msra.mxu0 %v591
        %774 = vmatprep.subr.mxu0 0.0
        %775 = vmatpush1.msra.mxu0 %v592
        %776 = vmatprep.subr.mxu0 0.0
        %777 = vmatpush1.msra.mxu0 %v593
        %778 = vmatprep.subr.mxu0 0.0
        %779 = vmatpush1.msra.mxu0 %v594
        %780 = vmatprep.subr.mxu0 0.0
        %781 = vmatpush1.msra.mxu0 %v595
        %782 = vmatprep.subr.mxu0 0.0
        %783 = vmatpush1.msra.mxu0 %v596
        %784 = vmatprep.subr.mxu0 0.0
        %785 = vmatpush1.msra.mxu0 %v597
        %786 = vmatprep.subr.mxu0 0.0
        %787 = vmatpush1.msra.mxu0 %v598
        %788 = vmatprep.subr.mxu0 0.0
        %789 = vmatpush1.msra.mxu0 %v599
        %790 = vmatprep.subr.mxu0 0.0
        %791 = vmatpush1.msra.mxu0 %v600
        %792 = vmatprep.subr.mxu0 0.0
        %793 = vmatpush1.msra.mxu0 %v601
        %794 = vmatprep.subr.mxu0 0.0
        %795 = vmatpush1.msra.mxu0 %v602
        %796 = vmatprep.subr.mxu0 0.0
        %797 = vmatpush1.msra.mxu0 %v603
        %798 = vmatprep.subr.mxu0 0.0
        %799 = vmatpush1.msra.mxu0 %v604
        %800 = vmatprep.subr.mxu0 0.0
        %801 = vmatpush1.msra.mxu0 %v605
        %802 = vmatprep.subr.mxu0 0.0
        %803 = vmatpush1.msra.mxu0 %v606
        %804 = vmatprep.subr.mxu0 0.0
        %805 = vmatpush1.msra.mxu0 0.0
        %806 = vmatprep.subr.mxu0 0.0
        %807 = vmatpush1.msra.mxu0 0.0
        %808 = vmatprep.subr.mxu0 0.0
        %809 = vmatpush1.msra.mxu0 0.0
        %810 = vmatprep.subr.mxu0 0.0
        %811 = vmatpush1.msra.mxu0 0.0
        %812 = vmatprep.subr.mxu0 0.0
        %813 = vmatpush1.msra.mxu0 0.0
        %814 = vmatprep.subr.mxu0 0.0
        %815 = vmatpush1.msra.mxu0 0.0
        %816 = vmatprep.subr.mxu0 0.0
        %817 = vmatpush1.msra.mxu0 0.0
        %818 = vmatprep.subr.mxu0 0.0
        %819 = vmatpush1.msra.mxu0 0.0
        %820 = vmatprep.subr.mxu0 0.0
        %821 = vmatpush1.msra.mxu0 0.0
        %822 = vmatprep.subr.mxu0 0.0
        %823 = vmatpush1.msra.mxu0 0.0
        %824 = vmatprep.subr.mxu0 0.0
        %825 = vmatpush1.msra.mxu0 0.0
        %826 = vmatprep.subr.mxu0 0.0
        %827 = vmatpush1.msra.mxu0 0.0
        %828 = vmatprep.subr.mxu0 0.0
        %829 = vmatpush1.msra.mxu0 0.0
        %830 = vmatprep.subr.mxu0 0.0
        %831 = vmatpush1.msra.mxu0 0.0
        %832 = vmatprep.subr.mxu0 0.0
        %833 = vmatpush1.msra.mxu0 0.0
        %834 = vmatprep.subr.mxu0 0.0
        %835 = vmatpush1.msra.mxu0 0.0
        %836 = vmatprep.mubr.f32.mxu0 0.0
        %837 = vmatmul.mubr.f32.gmra.mrb[0].mxu0 %v501
        %v838 = vpop.f32.mrb[0].mxu0
        %v839 = vadd.f32 %v674, %v838
        %v840 = vpop.f32.mrb[0].mxu0
        %841 = vmatprep.mubr.f32.mxu0 0.0
        %842 = vmatmul.mubr.f32.gmra.mrb[0].mxu0 %v549
        %v843 = vpop.f32.mrb[0].mxu0
        %v844 = vadd.f32 %v679, %v843
        %v845 = vpop.f32.mrb[0].mxu0
        %846 = vmatprep.mubr.f32.mxu0 0.0
        %847 = vmatmul.mubr.f32.gmra.mrb[0].mxu0 %v504
        %v848 = vpop.f32.mrb[0].mxu0
        %v849 = vadd.f32 %v684, %v848
        %v850 = vpop.f32.mrb[0].mxu0
        %851 = vmatprep.mubr.f32.mxu0 0.0
        %852 = vmatmul.mubr.f32.gmra.mrb[0].mxu0 %v550
        %v853 = vpop.f32.mrb[0].mxu0
        %v854 = vadd.f32 %v689, %v853
        %v855 = vpop.f32.mrb[0].mxu0
        %856 = vmatprep.mubr.f32.mxu0 0.0
        %857 = vmatmul.mubr.f32.gmra.mrb[0].mxu0 %v507
        %v858 = vpop.f32.mrb[0].mxu0
        %v859 = vadd.f32 %v694, %v858
        %v860 = vpop.f32.mrb[0].mxu0
        %861 = vmatprep.mubr.f32.mxu0 0.0
        %862 = vmatmul.mubr.f32.gmra.mrb[0].mxu0 %v551
        %v863 = vpop.f32.mrb[0].mxu0
        %v864 = vadd.f32 %v699, %v863
        %v865 = vpop.f32.mrb[0].mxu0
        %866 = vmatprep.mubr.f32.mxu0 0.0
        %867 = vmatmul.mubr.f32.gmra.mrb[0].mxu0 %v510
        %v868 = vpop.f32.mrb[0].mxu0
        %v869 = vadd.f32 %v704, %v868
        %v870 = vpop.f32.mrb[0].mxu0
        %871 = vmatprep.mubr.f32.mxu0 0.0
        %872 = vmatmul.mubr.f32.gmra.mrb[0].mxu0 %v552
        %v873 = vpop.f32.mrb[0].mxu0
        %v874 = vadd.f32 %v709, %v873
        %v875 = vpop.f32.mrb[0].mxu0
        %876 = vmatprep.mubr.f32.mxu0 0.0
        %877 = vmatmul.mubr.f32.gmra.mrb[0].mxu0 %v513
        %v878 = vpop.f32.mrb[0].mxu0
        %v879 = vadd.f32 %v714, %v878
        %v880 = vpop.f32.mrb[0].mxu0
        %881 = vmatprep.mubr.f32.mxu0 0.0
        %882 = vmatmul.mubr.f32.gmra.mrb[0].mxu0 %v553
        %v883 = vpop.f32.mrb[0].mxu0
        %v884 = vadd.f32 %v719, %v883
        %v885 = vpop.f32.mrb[0].mxu0
        %886 = vmatprep.mubr.f32.mxu0 0.0
        %887 = vmatmul.mubr.f32.gmra.mrb[0].mxu0 %v516
        %v888 = vpop.f32.mrb[0].mxu0
        %v889 = vadd.f32 %v724, %v888
        %v890 = vpop.f32.mrb[0].mxu0
        %891 = vmatprep.mubr.f32.mxu0 0.0
        %892 = vmatmul.mubr.f32.gmra.mrb[0].mxu0 %v554
        %v893 = vpop.f32.mrb[0].mxu0
        %v894 = vadd.f32 %v729, %v893
        %v895 = vpop.f32.mrb[0].mxu0
        %896 = vmatprep.mubr.f32.mxu0 0.0
        %897 = vmatmul.mubr.f32.gmra.mrb[0].mxu0 %v519
        %v898 = vpop.f32.mrb[0].mxu0
        %v899 = vadd.f32 %v734, %v898
        %v900 = vpop.f32.mrb[0].mxu0
        %901 = vmatprep.mubr.f32.mxu0 0.0
        %902 = vmatmul.mubr.f32.gmra.mrb[0].mxu0 %v555
        %v903 = vpop.f32.mrb[0].mxu0
        %v904 = vadd.f32 %v739, %v903
        %v905 = vpop.f32.mrb[0].mxu0
        %906 = vmatprep.mubr.f32.mxu0 0.0
        %907 = vmatmul.mubr.f32.gmra.mrb[0].mxu0 %v522
        %v908 = vpop.f32.mrb[0].mxu0
        %v909 = vadd.f32 %v744, %v908
        %v910 = vpop.f32.mrb[0].mxu0
        %911 = vmatprep.mubr.f32.mxu0 0.0
        %912 = vmatmul.mubr.f32.gmra.mrb[0].mxu0 %v556
        %v913 = vpop.f32.mrb[0].mxu0
        %v914 = vadd.f32 %v749, %v913
        %v915 = vpop.f32.mrb[0].mxu0
        %916 = vmatprep.mubr.f32.mxu0 0.0
        %917 = vmatmul.mubr.f32.gmra.mrb[0].mxu0 %v525
        %v918 = vpop.f32.mrb[0].mxu0
        %v919 = vadd.f32 %v754, %v918
        %v920 = vpop.f32.mrb[0].mxu0
        %921 = vmatprep.mubr.f32.mxu0 0.0
        %922 = vmatmul.mubr.f32.gmra.mrb[0].mxu0 %v557
        %v923 = vpop.f32.mrb[0].mxu0
        %v924 = vadd.f32 %v759, %v923
        %v925 = vpop.f32.mrb[0].mxu0
        %926 = vmatprep.mubr.f32.mxu0 0.0
        %927 = vmatmul.mubr.f32.gmra.mrb[0].mxu0 %v528
        %v928 = vpop.f32.mrb[0].mxu0
        %v929 = vadd.f32 %v764, %v928
        %v930 = vpop.f32.mrb[0].mxu0
        %931 = vmatprep.mubr.f32.mxu0 0.0
        %932 = vmatmul.mubr.f32.gmra.mrb[0].mxu0 %v558
        %v933 = vpop.f32.mrb[0].mxu0
        %v934 = vadd.f32 %v769, %v933
        %v935 = vpop.f32.mrb[0].mxu0
        %936 = vdwg.mxu0
        %937 = vst [vmem:[#allocation4] sm:$0xff] %v839
        %938 = vst [vmem:[#allocation4 + $0x8] sm:$0xff] %v844
        %939 = vst [vmem:[#allocation4 + $0x10] sm:$0xff] %v849
        %940 = vst [vmem:[#allocation4 + $0x18] sm:$0xff] %v854
        %941 = vst [vmem:[#allocation4 + $0x20] sm:$0xff] %v859
        %942 = vst [vmem:[#allocation4 + $0x28] sm:$0xff] %v864
        %943 = vst [vmem:[#allocation4 + $0x30] sm:$0xff] %v869
        %944 = vst [vmem:[#allocation4 + $0x38] sm:$0xff] %v874
        %945 = vst [vmem:[#allocation4 + $0x40] sm:$0xff] %v879
        %946 = vst [vmem:[#allocation4 + $0x48] sm:$0xff] %v884
        %947 = vst [vmem:[#allocation4 + $0x50] sm:$0xff] %v889
        %948 = vst [vmem:[#allocation4 + $0x58] sm:$0xff] %v894
        %949 = vst [vmem:[#allocation4 + $0x60] sm:$0xff] %v899
        %950 = vst [vmem:[#allocation4 + $0x68] sm:$0xff] %v904
        %951 = vst [vmem:[#allocation4 + $0x70] sm:$0xff] %v909
        %952 = vst [vmem:[#allocation4 + $0x78] sm:$0xff] %v914
        %953 = vst [vmem:[#allocation4 + $0x80] sm:$0xff] %v919
        %954 = vst [vmem:[#allocation4 + $0x88] sm:$0xff] %v924
        %955 = vst [vmem:[#allocation4 + $0x90] sm:$0xff] %v929
        %956 = vst [vmem:[#allocation4 + $0x98] sm:$0xff] %v934
        %s957 = scalar_lea.vmem [#allocation2], 16
        %v958 = vld [vmem:[%s957] sm:$0xff]
        %v959 = vld [vmem:[%s957 + $0x8] sm:$0xff]
        %v960 = vld [vmem:[%s957 + $0x10] sm:$0xff]
        %v961 = vld [vmem:[%s957 + $0x18] sm:$0xff]
        %v962 = vld [vmem:[%s957 + $0x20] sm:$0xff]
        %v963 = vld [vmem:[%s957 + $0x28] sm:$0xff]
        %v964 = vld [vmem:[%s957 + $0x30] sm:$0xff]
        %v965 = vld [vmem:[%s957 + $0x38] sm:$0xff]
        %v966 = vld [vmem:[%s957 + $0x40] sm:$0xff]
        %v967 = vld [vmem:[%s957 + $0x48] sm:$0xff]
        %v968 = vld [vmem:[%s957 + $0x50] sm:$0xff]
        %v969 = vld [vmem:[%s957 + $0x58] sm:$0xff]
        %v970 = vld [vmem:[%s957 + $0x60] sm:$0xff]
        %v971 = vld [vmem:[%s957 + $0x68] sm:$0xff]
        %v972 = vld [vmem:[%s957 + $0x70] sm:$0xff]
        %v973 = vld [vmem:[%s957 + $0x78] sm:$0xff]
        %v974 = vld [vmem:[%s957 + $0x80] sm:$0xff]
        %v975 = vld [vmem:[%s957 + $0x88] sm:$0xff]
        %v976 = vld [vmem:[%s957 + $0x90] sm:$0xff]
        %v977 = vld [vmem:[%s957 + $0x98] sm:$0xff]
        %v998 = vrot.slane %v958, 7
        %v999 = vrot.slane %v959, 7
        %v1000 = vsel %vm437, %v998, %v999
        %v1001 = vrot.slane %v960, 7
        %v1002 = vrot.slane %v961, 7
        %v1003 = vsel %vm437, %v1001, %v1002
        %v1004 = vrot.slane %v962, 7
        %v1005 = vrot.slane %v963, 7
        %v1006 = vsel %vm437, %v1004, %v1005
        %v1007 = vrot.slane %v964, 7
        %v1008 = vrot.slane %v965, 7
        %v1009 = vsel %vm437, %v1007, %v1008
        %v1010 = vrot.slane %v966, 7
        %v1011 = vrot.slane %v967, 7
        %v1012 = vsel %vm437, %v1010, %v1011
        %v1013 = vrot.slane %v968, 7
        %v1014 = vrot.slane %v969, 7
        %v1015 = vsel %vm437, %v1013, %v1014
        %v1016 = vrot.slane %v970, 7
        %v1017 = vrot.slane %v971, 7
        %v1018 = vsel %vm437, %v1016, %v1017
        %v1019 = vrot.slane %v972, 7
        %v1020 = vrot.slane %v973, 7
        %v1021 = vsel %vm437, %v1019, %v1020
        %v1022 = vrot.slane %v974, 7
        %v1023 = vrot.slane %v975, 7
        %v1024 = vsel %vm437, %v1022, %v1023
        %v1025 = vrot.slane %v976, 7
        %v1026 = vrot.slane %v977, 7
        %v1027 = vsel %vm437, %v1025, %v1026
        %v1048 = vsel %vm437, 0.0, %v998
        %v1049 = vsel %vm437, 0.0, %v1001
        %v1050 = vsel %vm437, 0.0, %v1004
        %v1051 = vsel %vm437, 0.0, %v1007
        %v1052 = vsel %vm437, 0.0, %v1010
        %v1053 = vsel %vm437, 0.0, %v1013
        %v1054 = vsel %vm437, 0.0, %v1016
        %v1055 = vsel %vm437, 0.0, %v1019
        %v1056 = vsel %vm437, 0.0, %v1022
        %v1057 = vsel %vm437, 0.0, %v1025
        %v1058 = vrot.slane %v958, 1
        %v1059 = vrot.slane %v959, 1
        %v1060 = vsel %vm498, %v1058, %v1059
        %v1061 = vrot.slane %v960, 1
        %v1062 = vrot.slane %v961, 1
        %v1063 = vsel %vm498, %v1061, %v1062
        %v1064 = vrot.slane %v962, 1
        %v1065 = vrot.slane %v963, 1
        %v1066 = vsel %vm498, %v1064, %v1065
        %v1067 = vrot.slane %v964, 1
        %v1068 = vrot.slane %v965, 1
        %v1069 = vsel %vm498, %v1067, %v1068
        %v1070 = vrot.slane %v966, 1
        %v1071 = vrot.slane %v967, 1
        %v1072 = vsel %vm498, %v1070, %v1071
        %v1073 = vrot.slane %v968, 1
        %v1074 = vrot.slane %v969, 1
        %v1075 = vsel %vm498, %v1073, %v1074
        %v1076 = vrot.slane %v970, 1
        %v1077 = vrot.slane %v971, 1
        %v1078 = vsel %vm498, %v1076, %v1077
        %v1079 = vrot.slane %v972, 1
        %v1080 = vrot.slane %v973, 1
        %v1081 = vsel %vm498, %v1079, %v1080
        %v1082 = vrot.slane %v974, 1
        %v1083 = vrot.slane %v975, 1
        %v1084 = vsel %vm498, %v1082, %v1083
        %v1085 = vrot.slane %v976, 1
        %v1086 = vrot.slane %v977, 1
        %v1087 = vsel %vm498, %v1085, %v1086
        %v1108 = vsel %vm498, %v1059, 0.0
        %v1109 = vsel %vm498, %v1062, 0.0
        %v1110 = vsel %vm498, %v1065, 0.0
        %v1111 = vsel %vm498, %v1068, 0.0
        %v1112 = vsel %vm498, %v1071, 0.0
        %v1113 = vsel %vm498, %v1074, 0.0
        %v1114 = vsel %vm498, %v1077, 0.0
        %v1115 = vsel %vm498, %v1080, 0.0
        %v1116 = vsel %vm498, %v1083, 0.0
        %v1117 = vsel %vm498, %v1086, 0.0
        %v1118 = vld [vmem:[#allocation9 + $0x180] sm:$0xff]
        %v1119 = vld [vmem:[#allocation9 + $0x188] sm:$0xff]
        %v1120 = vld [vmem:[#allocation9 + $0x190] sm:$0xff]
        %v1121 = vld [vmem:[#allocation9 + $0x198] sm:$0xff]
        %v1122 = vld [vmem:[#allocation9 + $0x1a0] sm:$0xff]
        %v1123 = vld [vmem:[#allocation9 + $0x1a8] sm:$0xff]
        %v1124 = vld [vmem:[#allocation9 + $0x1b0] sm:$0xff]
        %v1125 = vld [vmem:[#allocation9 + $0x1b8] sm:$0xff]
        %v1126 = vld [vmem:[#allocation9 + $0x1c0] sm:$0xff]
        %v1127 = vld [vmem:[#allocation9 + $0x1c8] sm:$0xff]
        %v1128 = vld [vmem:[#allocation9 + $0x1d0] sm:$0xff]
        %v1129 = vld [vmem:[#allocation9 + $0x1d8] sm:$0xff]
        %v1130 = vld [vmem:[#allocation9 + $0x1e0] sm:$0xff]
        %v1131 = vld [vmem:[#allocation9 + $0x1e8] sm:$0xff]
        %v1132 = vld [vmem:[#allocation9 + $0x1f0] sm:$0xff]
        %v1133 = vld [vmem:[#allocation9 + $0x1f8] sm:$0xff]
        %v1134 = vld [vmem:[#allocation9 + $0x200] sm:$0xff]
        %v1135 = vld [vmem:[#allocation9 + $0x208] sm:$0xff]
        %v1136 = vld [vmem:[#allocation9 + $0x210] sm:$0xff]
        %v1137 = vld [vmem:[#allocation9 + $0x218] sm:$0xff]
        %v1138 = vld [vmem:[#allocation9 + $0x220] sm:$0xff]
        %v1139 = vld [vmem:[#allocation9 + $0x228] sm:$0xff]
        %v1140 = vld [vmem:[#allocation9 + $0x230] sm:$0xff]
        %v1141 = vld [vmem:[#allocation9 + $0x238] sm:$0xff]
        %v1142 = vld [vmem:[#allocation9 + $0x240] sm:$0xff]
        %v1143 = vld [vmem:[#allocation9 + $0x248] sm:$0xff]
        %v1144 = vld [vmem:[#allocation9 + $0x250] sm:$0xff]
        %v1145 = vld [vmem:[#allocation9 + $0x258] sm:$0xff]
        %v1146 = vld [vmem:[#allocation9 + $0x260] sm:$0xff]
        %v1147 = vld [vmem:[#allocation9 + $0x268] sm:$0xff]
        %v1148 = vld [vmem:[#allocation9 + $0x270] sm:$0xff]
        %v1149 = vld [vmem:[#allocation9 + $0x278] sm:$0xff]
        %v1150 = vld [vmem:[#allocation9 + $0x280] sm:$0xff]
        %v1151 = vld [vmem:[#allocation9 + $0x288] sm:$0xff]
        %v1152 = vld [vmem:[#allocation9 + $0x290] sm:$0xff]
        %v1153 = vld [vmem:[#allocation9 + $0x298] sm:$0xff]
        %v1154 = vld [vmem:[#allocation9 + $0x2a0] sm:$0xff]
        %v1155 = vld [vmem:[#allocation9 + $0x2a8] sm:$0xff]
        %v1156 = vld [vmem:[#allocation9 + $0x2b0] sm:$0xff]
        %v1157 = vld [vmem:[#allocation9 + $0x2b8] sm:$0xff]
        %v1158 = vld [vmem:[#allocation9 + $0x2c0] sm:$0xff]
        %v1159 = vld [vmem:[#allocation9 + $0x2c8] sm:$0xff]
        %v1160 = vld [vmem:[#allocation9 + $0x2d0] sm:$0xff]
        %v1161 = vld [vmem:[#allocation9 + $0x2d8] sm:$0xff]
        %v1162 = vld [vmem:[#allocation9 + $0x2e0] sm:$0xff]
        %v1163 = vld [vmem:[#allocation9 + $0x2e8] sm:$0xff]
        %v1164 = vld [vmem:[#allocation9 + $0x2f0] sm:$0xff]
        %v1165 = vld [vmem:[#allocation9 + $0x2f8] sm:$0xff]
        %1166 = vmatprep.subr.mxu0 0.0
        %1167 = vmatpush1.msra.mxu0 %v1118
        %1168 = vmatprep.subr.mxu0 0.0
        %1169 = vmatpush1.msra.mxu0 %v1119
        %1170 = vmatprep.subr.mxu0 0.0
        %1171 = vmatpush1.msra.mxu0 %v1120
        %1172 = vmatprep.subr.mxu0 0.0
        %1173 = vmatpush1.msra.mxu0 %v1121
        %1174 = vmatprep.subr.mxu0 0.0
        %1175 = vmatpush1.msra.mxu0 %v1122
        %1176 = vmatprep.subr.mxu0 0.0
        %1177 = vmatpush1.msra.mxu0 %v1123
        %1178 = vmatprep.subr.mxu0 0.0
        %1179 = vmatpush1.msra.mxu0 %v1124
        %1180 = vmatprep.subr.mxu0 0.0
        %1181 = vmatpush1.msra.mxu0 %v1125
        %1182 = vmatprep.subr.mxu0 0.0
        %1183 = vmatpush1.msra.mxu0 %v1126
        %1184 = vmatprep.subr.mxu0 0.0
        %1185 = vmatpush1.msra.mxu0 %v1127
        %1186 = vmatprep.subr.mxu0 0.0
        %1187 = vmatpush1.msra.mxu0 %v1128
        %1188 = vmatprep.subr.mxu0 0.0
        %1189 = vmatpush1.msra.mxu0 %v1129
        %1190 = vmatprep.subr.mxu0 0.0
        %1191 = vmatpush1.msra.mxu0 %v1130
        %1192 = vmatprep.subr.mxu0 0.0
        %1193 = vmatpush1.msra.mxu0 %v1131
        %1194 = vmatprep.subr.mxu0 0.0
        %1195 = vmatpush1.msra.mxu0 %v1132
        %1196 = vmatprep.subr.mxu0 0.0
        %1197 = vmatpush1.msra.mxu0 %v1133
        %1198 = vmatprep.subr.mxu0 0.0
        %1199 = vmatpush1.msra.mxu0 %v1134
        %1200 = vmatprep.subr.mxu0 0.0
        %1201 = vmatpush1.msra.mxu0 %v1135
        %1202 = vmatprep.subr.mxu0 0.0
        %1203 = vmatpush1.msra.mxu0 %v1136
        %1204 = vmatprep.subr.mxu0 0.0
        %1205 = vmatpush1.msra.mxu0 %v1137
        %1206 = vmatprep.subr.mxu0 0.0
        %1207 = vmatpush1.msra.mxu0 %v1138
        %1208 = vmatprep.subr.mxu0 0.0
        %1209 = vmatpush1.msra.mxu0 %v1139
        %1210 = vmatprep.subr.mxu0 0.0
        %1211 = vmatpush1.msra.mxu0 %v1140
        %1212 = vmatprep.subr.mxu0 0.0
        %1213 = vmatpush1.msra.mxu0 %v1141
        %1214 = vmatprep.subr.mxu0 0.0
        %1215 = vmatpush1.msra.mxu0 %v1142
        %1216 = vmatprep.subr.mxu0 0.0
        %1217 = vmatpush1.msra.mxu0 %v1143
        %1218 = vmatprep.subr.mxu0 0.0
        %1219 = vmatpush1.msra.mxu0 %v1144
        %1220 = vmatprep.subr.mxu0 0.0
        %1221 = vmatpush1.msra.mxu0 %v1145
        %1222 = vmatprep.subr.mxu0 0.0
        %1223 = vmatpush1.msra.mxu0 %v1146
        %1224 = vmatprep.subr.mxu0 0.0
        %1225 = vmatpush1.msra.mxu0 %v1147
        %1226 = vmatprep.subr.mxu0 0.0
        %1227 = vmatpush1.msra.mxu0 %v1148
        %1228 = vmatprep.subr.mxu0 0.0
        %1229 = vmatpush1.msra.mxu0 %v1149
        %1230 = vmatprep.mubr.f32.mxu0 %v958
        %1231 = vmatmul.mubr.f32.gmra.mrb[0].mxu0 %v1048
        %v1232 = vpop.f32.mrb[0].mxu0
        %v1233 = vadd.f32 0.0, %v1232
        %v1234 = vpop.f32.mrb[0].mxu0
        %1235 = vmatprep.mubr.f32.mxu0 %v959
        %1236 = vmatmul.mubr.f32.gmra.mrb[0].mxu0 %v1000
        %v1237 = vpop.f32.mrb[0].mxu0
        %v1238 = vadd.f32 0.0, %v1237
        %v1239 = vpop.f32.mrb[0].mxu0
        %1240 = vmatprep.mubr.f32.mxu0 %v960
        %1241 = vmatmul.mubr.f32.gmra.mrb[0].mxu0 %v1049
        %v1242 = vpop.f32.mrb[0].mxu0
        %v1243 = vadd.f32 0.0, %v1242
        %v1244 = vpop.f32.mrb[0].mxu0
        %1245 = vmatprep.mubr.f32.mxu0 %v961
        %1246 = vmatmul.mubr.f32.gmra.mrb[0].mxu0 %v1003
        %v1247 = vpop.f32.mrb[0].mxu0
        %v1248 = vadd.f32 0.0, %v1247
        %v1249 = vpop.f32.mrb[0].mxu0
        %1250 = vmatprep.mubr.f32.mxu0 %v962
        %1251 = vmatmul.mubr.f32.gmra.mrb[0].mxu0 %v1050
        %v1252 = vpop.f32.mrb[0].mxu0
        %v1253 = vadd.f32 0.0, %v1252
        %v1254 = vpop.f32.mrb[0].mxu0
        %1255 = vmatprep.mubr.f32.mxu0 %v963
        %1256 = vmatmul.mubr.f32.gmra.mrb[0].mxu0 %v1006
        %v1257 = vpop.f32.mrb[0].mxu0
        %v1258 = vadd.f32 0.0, %v1257
        %v1259 = vpop.f32.mrb[0].mxu0
        %1260 = vmatprep.mubr.f32.mxu0 %v964
        %1261 = vmatmul.mubr.f32.gmra.mrb[0].mxu0 %v1051
        %v1262 = vpop.f32.mrb[0].mxu0
        %v1263 = vadd.f32 0.0, %v1262
        %v1264 = vpop.f32.mrb[0].mxu0
        %1265 = vmatprep.mubr.f32.mxu0 %v965
        %1266 = vmatmul.mubr.f32.gmra.mrb[0].mxu0 %v1009
        %v1267 = vpop.f32.mrb[0].mxu0
        %v1268 = vadd.f32 0.0, %v1267
        %v1269 = vpop.f32.mrb[0].mxu0
        %1270 = vmatprep.mubr.f32.mxu0 %v966
        %1271 = vmatmul.mubr.f32.gmra.mrb[0].mxu0 %v1052
        %v1272 = vpop.f32.mrb[0].mxu0
        %v1273 = vadd.f32 0.0, %v1272
        %v1274 = vpop.f32.mrb[0].mxu0
        %1275 = vmatprep.mubr.f32.mxu0 %v967
        %1276 = vmatmul.mubr.f32.gmra.mrb[0].mxu0 %v1012
        %v1277 = vpop.f32.mrb[0].mxu0
        %v1278 = vadd.f32 0.0, %v1277
        %v1279 = vpop.f32.mrb[0].mxu0
        %1280 = vmatprep.mubr.f32.mxu0 %v968
        %1281 = vmatmul.mubr.f32.gmra.mrb[0].mxu0 %v1053
        %v1282 = vpop.f32.mrb[0].mxu0
        %v1283 = vadd.f32 0.0, %v1282
        %v1284 = vpop.f32.mrb[0].mxu0
        %1285 = vmatprep.mubr.f32.mxu0 %v969
        %1286 = vmatmul.mubr.f32.gmra.mrb[0].mxu0 %v1015
        %v1287 = vpop.f32.mrb[0].mxu0
        %v1288 = vadd.f32 0.0, %v1287
        %v1289 = vpop.f32.mrb[0].mxu0
        %1290 = vmatprep.mubr.f32.mxu0 %v970
        %1291 = vmatmul.mubr.f32.gmra.mrb[0].mxu0 %v1054
        %v1292 = vpop.f32.mrb[0].mxu0
        %v1293 = vadd.f32 0.0, %v1292
        %v1294 = vpop.f32.mrb[0].mxu0
        %1295 = vmatprep.mubr.f32.mxu0 %v971
        %1296 = vmatmul.mubr.f32.gmra.mrb[0].mxu0 %v1018
        %v1297 = vpop.f32.mrb[0].mxu0
        %v1298 = vadd.f32 0.0, %v1297
        %v1299 = vpop.f32.mrb[0].mxu0
        %1300 = vmatprep.mubr.f32.mxu0 %v972
        %1301 = vmatmul.mubr.f32.gmra.mrb[0].mxu0 %v1055
        %v1302 = vpop.f32.mrb[0].mxu0
        %v1303 = vadd.f32 0.0, %v1302
        %v1304 = vpop.f32.mrb[0].mxu0
        %1305 = vmatprep.mubr.f32.mxu0 %v973
        %1306 = vmatmul.mubr.f32.gmra.mrb[0].mxu0 %v1021
        %v1307 = vpop.f32.mrb[0].mxu0
        %v1308 = vadd.f32 0.0, %v1307
        %v1309 = vpop.f32.mrb[0].mxu0
        %1310 = vmatprep.mubr.f32.mxu0 %v974
        %1311 = vmatmul.mubr.f32.gmra.mrb[0].mxu0 %v1056
        %v1312 = vpop.f32.mrb[0].mxu0
        %v1313 = vadd.f32 0.0, %v1312
        %v1314 = vpop.f32.mrb[0].mxu0
        %1315 = vmatprep.mubr.f32.mxu0 %v975
        %1316 = vmatmul.mubr.f32.gmra.mrb[0].mxu0 %v1024
        %v1317 = vpop.f32.mrb[0].mxu0
        %v1318 = vadd.f32 0.0, %v1317
        %v1319 = vpop.f32.mrb[0].mxu0
        %1320 = vmatprep.mubr.f32.mxu0 %v976
        %1321 = vmatmul.mubr.f32.gmra.mrb[0].mxu0 %v1057
        %v1322 = vpop.f32.mrb[0].mxu0
        %v1323 = vadd.f32 0.0, %v1322
        %v1324 = vpop.f32.mrb[0].mxu0
        %1325 = vmatprep.mubr.f32.mxu0 %v977
        %1326 = vmatmul.mubr.f32.gmra.mrb[0].mxu0 %v1027
        %v1327 = vpop.f32.mrb[0].mxu0
        %v1328 = vadd.f32 0.0, %v1327
        %v1329 = vpop.f32.mrb[0].mxu0
        %1330 = vdwg.mxu0
        %1331 = vmatprep.subr.mxu0 0.0
        %1332 = vmatpush1.msra.mxu0 %v1150
        %1333 = vmatprep.subr.mxu0 0.0
        %1334 = vmatpush1.msra.mxu0 %v1151
        %1335 = vmatprep.subr.mxu0 0.0
        %1336 = vmatpush1.msra.mxu0 %v1152
        %1337 = vmatprep.subr.mxu0 0.0
        %1338 = vmatpush1.msra.mxu0 %v1153
        %1339 = vmatprep.subr.mxu0 0.0
        %1340 = vmatpush1.msra.mxu0 %v1154
        %1341 = vmatprep.subr.mxu0 0.0
        %1342 = vmatpush1.msra.mxu0 %v1155
        %1343 = vmatprep.subr.mxu0 0.0
        %1344 = vmatpush1.msra.mxu0 %v1156
        %1345 = vmatprep.subr.mxu0 0.0
        %1346 = vmatpush1.msra.mxu0 %v1157
        %1347 = vmatprep.subr.mxu0 0.0
        %1348 = vmatpush1.msra.mxu0 %v1158
        %1349 = vmatprep.subr.mxu0 0.0
        %1350 = vmatpush1.msra.mxu0 %v1159
        %1351 = vmatprep.subr.mxu0 0.0
        %1352 = vmatpush1.msra.mxu0 %v1160
        %1353 = vmatprep.subr.mxu0 0.0
        %1354 = vmatpush1.msra.mxu0 %v1161
        %1355 = vmatprep.subr.mxu0 0.0
        %1356 = vmatpush1.msra.mxu0 %v1162
        %1357 = vmatprep.subr.mxu0 0.0
        %1358 = vmatpush1.msra.mxu0 %v1163
        %1359 = vmatprep.subr.mxu0 0.0
        %1360 = vmatpush1.msra.mxu0 %v1164
        %1361 = vmatprep.subr.mxu0 0.0
        %1362 = vmatpush1.msra.mxu0 %v1165
        %1363 = vmatprep.subr.mxu0 0.0
        %1364 = vmatpush1.msra.mxu0 0.0
        %1365 = vmatprep.subr.mxu0 0.0
        %1366 = vmatpush1.msra.mxu0 0.0
        %1367 = vmatprep.subr.mxu0 0.0
        %1368 = vmatpush1.msra.mxu0 0.0
        %1369 = vmatprep.subr.mxu0 0.0
        %1370 = vmatpush1.msra.mxu0 0.0
        %1371 = vmatprep.subr.mxu0 0.0
        %1372 = vmatpush1.msra.mxu0 0.0
        %1373 = vmatprep.subr.mxu0 0.0
        %1374 = vmatpush1.msra.mxu0 0.0
        %1375 = vmatprep.subr.mxu0 0.0
        %1376 = vmatpush1.msra.mxu0 0.0
        %1377 = vmatprep.subr.mxu0 0.0
        %1378 = vmatpush1.msra.mxu0 0.0
        %1379 = vmatprep.subr.mxu0 0.0
        %1380 = vmatpush1.msra.mxu0 0.0
        %1381 = vmatprep.subr.mxu0 0.0
        %1382 = vmatpush1.msra.mxu0 0.0
        %1383 = vmatprep.subr.mxu0 0.0
        %1384 = vmatpush1.msra.mxu0 0.0
        %1385 = vmatprep.subr.mxu0 0.0
        %1386 = vmatpush1.msra.mxu0 0.0
        %1387 = vmatprep.subr.mxu0 0.0
        %1388 = vmatpush1.msra.mxu0 0.0
        %1389 = vmatprep.subr.mxu0 0.0
        %1390 = vmatpush1.msra.mxu0 0.0
        %1391 = vmatprep.subr.mxu0 0.0
        %1392 = vmatpush1.msra.mxu0 0.0
        %1393 = vmatprep.subr.mxu0 0.0
        %1394 = vmatpush1.msra.mxu0 0.0
        %1395 = vmatprep.mubr.f32.mxu0 0.0
        %1396 = vmatmul.mubr.f32.gmra.mrb[0].mxu0 %v1060
        %v1397 = vpop.f32.mrb[0].mxu0
        %v1398 = vadd.f32 %v1233, %v1397
        %v1399 = vpop.f32.mrb[0].mxu0
        %1400 = vmatprep.mubr.f32.mxu0 0.0
        %1401 = vmatmul.mubr.f32.gmra.mrb[0].mxu0 %v1108
        %v1402 = vpop.f32.mrb[0].mxu0
        %v1403 = vadd.f32 %v1238, %v1402
        %v1404 = vpop.f32.mrb[0].mxu0
        %1405 = vmatprep.mubr.f32.mxu0 0.0
        %1406 = vmatmul.mubr.f32.gmra.mrb[0].mxu0 %v1063
        %v1407 = vpop.f32.mrb[0].mxu0
        %v1408 = vadd.f32 %v1243, %v1407
        %v1409 = vpop.f32.mrb[0].mxu0
        %1410 = vmatprep.mubr.f32.mxu0 0.0
        %1411 = vmatmul.mubr.f32.gmra.mrb[0].mxu0 %v1109
        %v1412 = vpop.f32.mrb[0].mxu0
        %v1413 = vadd.f32 %v1248, %v1412
        %v1414 = vpop.f32.mrb[0].mxu0
        %1415 = vmatprep.mubr.f32.mxu0 0.0
        %1416 = vmatmul.mubr.f32.gmra.mrb[0].mxu0 %v1066
        %v1417 = vpop.f32.mrb[0].mxu0
        %v1418 = vadd.f32 %v1253, %v1417
        %v1419 = vpop.f32.mrb[0].mxu0
        %1420 = vmatprep.mubr.f32.mxu0 0.0
        %1421 = vmatmul.mubr.f32.gmra.mrb[0].mxu0 %v1110
        %v1422 = vpop.f32.mrb[0].mxu0
        %v1423 = vadd.f32 %v1258, %v1422
        %v1424 = vpop.f32.mrb[0].mxu0
        %1425 = vmatprep.mubr.f32.mxu0 0.0
        %1426 = vmatmul.mubr.f32.gmra.mrb[0].mxu0 %v1069
        %v1427 = vpop.f32.mrb[0].mxu0
        %v1428 = vadd.f32 %v1263, %v1427
        %v1429 = vpop.f32.mrb[0].mxu0
        %1430 = vmatprep.mubr.f32.mxu0 0.0
        %1431 = vmatmul.mubr.f32.gmra.mrb[0].mxu0 %v1111
        %v1432 = vpop.f32.mrb[0].mxu0
        %v1433 = vadd.f32 %v1268, %v1432
        %v1434 = vpop.f32.mrb[0].mxu0
        %1435 = vmatprep.mubr.f32.mxu0 0.0
        %1436 = vmatmul.mubr.f32.gmra.mrb[0].mxu0 %v1072
        %v1437 = vpop.f32.mrb[0].mxu0
        %v1438 = vadd.f32 %v1273, %v1437
        %v1439 = vpop.f32.mrb[0].mxu0
        %1440 = vmatprep.mubr.f32.mxu0 0.0
        %1441 = vmatmul.mubr.f32.gmra.mrb[0].mxu0 %v1112
        %v1442 = vpop.f32.mrb[0].mxu0
        %v1443 = vadd.f32 %v1278, %v1442
        %v1444 = vpop.f32.mrb[0].mxu0
        %1445 = vmatprep.mubr.f32.mxu0 0.0
        %1446 = vmatmul.mubr.f32.gmra.mrb[0].mxu0 %v1075
        %v1447 = vpop.f32.mrb[0].mxu0
        %v1448 = vadd.f32 %v1283, %v1447
        %v1449 = vpop.f32.mrb[0].mxu0
        %1450 = vmatprep.mubr.f32.mxu0 0.0
        %1451 = vmatmul.mubr.f32.gmra.mrb[0].mxu0 %v1113
        %v1452 = vpop.f32.mrb[0].mxu0
        %v1453 = vadd.f32 %v1288, %v1452
        %v1454 = vpop.f32.mrb[0].mxu0
        %1455 = vmatprep.mubr.f32.mxu0 0.0
        %1456 = vmatmul.mubr.f32.gmra.mrb[0].mxu0 %v1078
        %v1457 = vpop.f32.mrb[0].mxu0
        %v1458 = vadd.f32 %v1293, %v1457
        %v1459 = vpop.f32.mrb[0].mxu0
        %1460 = vmatprep.mubr.f32.mxu0 0.0
        %1461 = vmatmul.mubr.f32.gmra.mrb[0].mxu0 %v1114
        %v1462 = vpop.f32.mrb[0].mxu0
        %v1463 = vadd.f32 %v1298, %v1462
        %v1464 = vpop.f32.mrb[0].mxu0
        %1465 = vmatprep.mubr.f32.mxu0 0.0
        %1466 = vmatmul.mubr.f32.gmra.mrb[0].mxu0 %v1081
        %v1467 = vpop.f32.mrb[0].mxu0
        %v1468 = vadd.f32 %v1303, %v1467
        %v1469 = vpop.f32.mrb[0].mxu0
        %1470 = vmatprep.mubr.f32.mxu0 0.0
        %1471 = vmatmul.mubr.f32.gmra.mrb[0].mxu0 %v1115
        %v1472 = vpop.f32.mrb[0].mxu0
        %v1473 = vadd.f32 %v1308, %v1472
        %v1474 = vpop.f32.mrb[0].mxu0
        %1475 = vmatprep.mubr.f32.mxu0 0.0
        %1476 = vmatmul.mubr.f32.gmra.mrb[0].mxu0 %v1084
        %v1477 = vpop.f32.mrb[0].mxu0
        %v1478 = vadd.f32 %v1313, %v1477
        %v1479 = vpop.f32.mrb[0].mxu0
        %1480 = vmatprep.mubr.f32.mxu0 0.0
        %1481 = vmatmul.mubr.f32.gmra.mrb[0].mxu0 %v1116
        %v1482 = vpop.f32.mrb[0].mxu0
        %v1483 = vadd.f32 %v1318, %v1482
        %v1484 = vpop.f32.mrb[0].mxu0
        %1485 = vmatprep.mubr.f32.mxu0 0.0
        %1486 = vmatmul.mubr.f32.gmra.mrb[0].mxu0 %v1087
        %v1487 = vpop.f32.mrb[0].mxu0
        %v1488 = vadd.f32 %v1323, %v1487
        %v1489 = vpop.f32.mrb[0].mxu0
        %1490 = vmatprep.mubr.f32.mxu0 0.0
        %1491 = vmatmul.mubr.f32.gmra.mrb[0].mxu0 %v1117
        %v1492 = vpop.f32.mrb[0].mxu0
        %v1493 = vadd.f32 %v1328, %v1492
        %v1494 = vpop.f32.mrb[0].mxu0
        %1495 = vdwg.mxu0
        %v1496 = vld [vmem:[#allocation4] sm:$0xff]
        %v1497 = vld [vmem:[#allocation4 + $0x8] sm:$0xff]
        %v1498 = vld [vmem:[#allocation4 + $0x10] sm:$0xff]
        %v1499 = vld [vmem:[#allocation4 + $0x18] sm:$0xff]
        %v1500 = vld [vmem:[#allocation4 + $0x20] sm:$0xff]
        %v1501 = vld [vmem:[#allocation4 + $0x28] sm:$0xff]
        %v1502 = vld [vmem:[#allocation4 + $0x30] sm:$0xff]
        %v1503 = vld [vmem:[#allocation4 + $0x38] sm:$0xff]
        %v1504 = vld [vmem:[#allocation4 + $0x40] sm:$0xff]
        %v1505 = vld [vmem:[#allocation4 + $0x48] sm:$0xff]
        %v1506 = vld [vmem:[#allocation4 + $0x50] sm:$0xff]
        %v1507 = vld [vmem:[#allocation4 + $0x58] sm:$0xff]
        %v1508 = vld [vmem:[#allocation4 + $0x60] sm:$0xff]
        %v1509 = vld [vmem:[#allocation4 + $0x68] sm:$0xff]
        %v1510 = vld [vmem:[#allocation4 + $0x70] sm:$0xff]
        %v1511 = vld [vmem:[#allocation4 + $0x78] sm:$0xff]
        %v1512 = vld [vmem:[#allocation4 + $0x80] sm:$0xff]
        %v1513 = vld [vmem:[#allocation4 + $0x88] sm:$0xff]
        %v1514 = vld [vmem:[#allocation4 + $0x90] sm:$0xff]
        %v1515 = vld [vmem:[#allocation4 + $0x98] sm:$0xff]
        %v1516 = vadd.f32 %v1496, %v1398
        %v1517 = vadd.f32 %v1497, %v1403
        %v1518 = vadd.f32 %v1498, %v1408
        %v1519 = vadd.f32 %v1499, %v1413
        %v1520 = vadd.f32 %v1500, %v1418
        %v1521 = vadd.f32 %v1501, %v1423
        %v1522 = vadd.f32 %v1502, %v1428
        %v1523 = vadd.f32 %v1503, %v1433
        %v1524 = vadd.f32 %v1504, %v1438
        %v1525 = vadd.f32 %v1505, %v1443
        %v1526 = vadd.f32 %v1506, %v1448
        %v1527 = vadd.f32 %v1507, %v1453
        %v1528 = vadd.f32 %v1508, %v1458
        %v1529 = vadd.f32 %v1509, %v1463
        %v1530 = vadd.f32 %v1510, %v1468
        %v1531 = vadd.f32 %v1511, %v1473
        %v1532 = vadd.f32 %v1512, %v1478
        %v1533 = vadd.f32 %v1513, %v1483
        %v1534 = vadd.f32 %v1514, %v1488
        %v1535 = vadd.f32 %v1515, %v1493
        %1536 = vst [vmem:[#allocation4] sm:$0xff] %v1516
        %1537 = vst [vmem:[#allocation4 + $0x8] sm:$0xff] %v1517
        %1538 = vst [vmem:[#allocation4 + $0x10] sm:$0xff] %v1518
        %1539 = vst [vmem:[#allocation4 + $0x18] sm:$0xff] %v1519
        %1540 = vst [vmem:[#allocation4 + $0x20] sm:$0xff] %v1520
        %1541 = vst [vmem:[#allocation4 + $0x28] sm:$0xff] %v1521
        %1542 = vst [vmem:[#allocation4 + $0x30] sm:$0xff] %v1522
        %1543 = vst [vmem:[#allocation4 + $0x38] sm:$0xff] %v1523
        %1544 = vst [vmem:[#allocation4 + $0x40] sm:$0xff] %v1524
        %1545 = vst [vmem:[#allocation4 + $0x48] sm:$0xff] %v1525
        %1546 = vst [vmem:[#allocation4 + $0x50] sm:$0xff] %v1526
        %1547 = vst [vmem:[#allocation4 + $0x58] sm:$0xff] %v1527
        %1548 = vst [vmem:[#allocation4 + $0x60] sm:$0xff] %v1528
        %1549 = vst [vmem:[#allocation4 + $0x68] sm:$0xff] %v1529
        %1550 = vst [vmem:[#allocation4 + $0x70] sm:$0xff] %v1530
        %1551 = vst [vmem:[#allocation4 + $0x78] sm:$0xff] %v1531
        %1552 = vst [vmem:[#allocation4 + $0x80] sm:$0xff] %v1532
        %1553 = vst [vmem:[#allocation4 + $0x88] sm:$0xff] %v1533
        %1554 = vst [vmem:[#allocation4 + $0x90] sm:$0xff] %v1534
        %1555 = vst [vmem:[#allocation4 + $0x98] sm:$0xff] %v1535
        %v1556 = vld [vmem:[%s310] sm:$0xff]
        %v1557 = vld [vmem:[%s310 + $0x8] sm:$0xff]
        %v1558 = vld [vmem:[%s310 + $0x10] sm:$0xff]
        %v1559 = vld [vmem:[%s310 + $0x18] sm:$0xff]
        %v1560 = vld [vmem:[%s310 + $0x20] sm:$0xff]
        %v1561 = vld [vmem:[%s310 + $0x28] sm:$0xff]
        %v1562 = vld [vmem:[%s310 + $0x30] sm:$0xff]
        %v1563 = vld [vmem:[%s310 + $0x38] sm:$0xff]
        %v1564 = vld [vmem:[%s310 + $0x40] sm:$0xff]
        %v1565 = vld [vmem:[%s310 + $0x48] sm:$0xff]
        %v1566 = vld [vmem:[%s310 + $0x50] sm:$0xff]
        %v1567 = vld [vmem:[%s310 + $0x58] sm:$0xff]
        %v1568 = vld [vmem:[%s310 + $0x60] sm:$0xff]
        %v1569 = vld [vmem:[%s310 + $0x68] sm:$0xff]
        %v1570 = vld [vmem:[%s310 + $0x70] sm:$0xff]
        %v1571 = vld [vmem:[%s310 + $0x78] sm:$0xff]
        %v1572 = vld [vmem:[%s310 + $0x80] sm:$0xff]
        %v1573 = vld [vmem:[%s310 + $0x88] sm:$0xff]
        %v1574 = vld [vmem:[%s310 + $0x90] sm:$0xff]
        %v1575 = vld [vmem:[%s310 + $0x98] sm:$0xff]
        %v1596 = vrot.slane %v1556, 7
        %v1597 = vrot.slane %v1557, 7
        %v1598 = vsel %vm437, %v1596, %v1597
        %v1599 = vrot.slane %v1558, 7
        %v1600 = vrot.slane %v1559, 7
        %v1601 = vsel %vm437, %v1599, %v1600
        %v1602 = vrot.slane %v1560, 7
        %v1603 = vrot.slane %v1561, 7
        %v1604 = vsel %vm437, %v1602, %v1603
        %v1605 = vrot.slane %v1562, 7
        %v1606 = vrot.slane %v1563, 7
        %v1607 = vsel %vm437, %v1605, %v1606
        %v1608 = vrot.slane %v1564, 7
        %v1609 = vrot.slane %v1565, 7
        %v1610 = vsel %vm437, %v1608, %v1609
        %v1611 = vrot.slane %v1566, 7
        %v1612 = vrot.slane %v1567, 7
        %v1613 = vsel %vm437, %v1611, %v1612
        %v1614 = vrot.slane %v1568, 7
        %v1615 = vrot.slane %v1569, 7
        %v1616 = vsel %vm437, %v1614, %v1615
        %v1617 = vrot.slane %v1570, 7
        %v1618 = vrot.slane %v1571, 7
        %v1619 = vsel %vm437, %v1617, %v1618
        %v1620 = vrot.slane %v1572, 7
        %v1621 = vrot.slane %v1573, 7
        %v1622 = vsel %vm437, %v1620, %v1621
        %v1623 = vrot.slane %v1574, 7
        %v1624 = vrot.slane %v1575, 7
        %v1625 = vsel %vm437, %v1623, %v1624
        %v1646 = vsel %vm437, 0.0, %v1596
        %v1647 = vsel %vm437, 0.0, %v1599
        %v1648 = vsel %vm437, 0.0, %v1602
        %v1649 = vsel %vm437, 0.0, %v1605
        %v1650 = vsel %vm437, 0.0, %v1608
        %v1651 = vsel %vm437, 0.0, %v1611
        %v1652 = vsel %vm437, 0.0, %v1614
        %v1653 = vsel %vm437, 0.0, %v1617
        %v1654 = vsel %vm437, 0.0, %v1620
        %v1655 = vsel %vm437, 0.0, %v1623
        %v1656 = vrot.slane %v1556, 1
        %v1657 = vrot.slane %v1557, 1
        %v1658 = vsel %vm498, %v1656, %v1657
        %v1659 = vrot.slane %v1558, 1
        %v1660 = vrot.slane %v1559, 1
        %v1661 = vsel %vm498, %v1659, %v1660
        %v1662 = vrot.slane %v1560, 1
        %v1663 = vrot.slane %v1561, 1
        %v1664 = vsel %vm498, %v1662, %v1663
        %v1665 = vrot.slane %v1562, 1
        %v1666 = vrot.slane %v1563, 1
        %v1667 = vsel %vm498, %v1665, %v1666
        %v1668 = vrot.slane %v1564, 1
        %v1669 = vrot.slane %v1565, 1
        %v1670 = vsel %vm498, %v1668, %v1669
        %v1671 = vrot.slane %v1566, 1
        %v1672 = vrot.slane %v1567, 1
        %v1673 = vsel %vm498, %v1671, %v1672
        %v1674 = vrot.slane %v1568, 1
        %v1675 = vrot.slane %v1569, 1
        %v1676 = vsel %vm498, %v1674, %v1675
        %v1677 = vrot.slane %v1570, 1
        %v1678 = vrot.slane %v1571, 1
        %v1679 = vsel %vm498, %v1677, %v1678
        %v1680 = vrot.slane %v1572, 1
        %v1681 = vrot.slane %v1573, 1
        %v1682 = vsel %vm498, %v1680, %v1681
        %v1683 = vrot.slane %v1574, 1
        %v1684 = vrot.slane %v1575, 1
        %v1685 = vsel %vm498, %v1683, %v1684
        %v1706 = vsel %vm498, %v1657, 0.0
        %v1707 = vsel %vm498, %v1660, 0.0
        %v1708 = vsel %vm498, %v1663, 0.0
        %v1709 = vsel %vm498, %v1666, 0.0
        %v1710 = vsel %vm498, %v1669, 0.0
        %v1711 = vsel %vm498, %v1672, 0.0
        %v1712 = vsel %vm498, %v1675, 0.0
        %v1713 = vsel %vm498, %v1678, 0.0
        %v1714 = vsel %vm498, %v1681, 0.0
        %v1715 = vsel %vm498, %v1684, 0.0
        %v1716 = vld [vmem:[#allocation9 + $0x300] sm:$0xff]
        %v1717 = vld [vmem:[#allocation9 + $0x308] sm:$0xff]
        %v1718 = vld [vmem:[#allocation9 + $0x310] sm:$0xff]
        %v1719 = vld [vmem:[#allocation9 + $0x318] sm:$0xff]
        %v1720 = vld [vmem:[#allocation9 + $0x320] sm:$0xff]
        %v1721 = vld [vmem:[#allocation9 + $0x328] sm:$0xff]
        %v1722 = vld [vmem:[#allocation9 + $0x330] sm:$0xff]
        %v1723 = vld [vmem:[#allocation9 + $0x338] sm:$0xff]
        %v1724 = vld [vmem:[#allocation9 + $0x340] sm:$0xff]
        %v1725 = vld [vmem:[#allocation9 + $0x348] sm:$0xff]
        %v1726 = vld [vmem:[#allocation9 + $0x350] sm:$0xff]
        %v1727 = vld [vmem:[#allocation9 + $0x358] sm:$0xff]
        %v1728 = vld [vmem:[#allocation9 + $0x360] sm:$0xff]
        %v1729 = vld [vmem:[#allocation9 + $0x368] sm:$0xff]
        %v1730 = vld [vmem:[#allocation9 + $0x370] sm:$0xff]
        %v1731 = vld [vmem:[#allocation9 + $0x378] sm:$0xff]
        %v1732 = vld [vmem:[#allocation9 + $0x380] sm:$0xff]
        %v1733 = vld [vmem:[#allocation9 + $0x388] sm:$0xff]
        %v1734 = vld [vmem:[#allocation9 + $0x390] sm:$0xff]
        %v1735 = vld [vmem:[#allocation9 + $0x398] sm:$0xff]
        %v1736 = vld [vmem:[#allocation9 + $0x3a0] sm:$0xff]
        %v1737 = vld [vmem:[#allocation9 + $0x3a8] sm:$0xff]
        %v1738 = vld [vmem:[#allocation9 + $0x3b0] sm:$0xff]
        %v1739 = vld [vmem:[#allocation9 + $0x3b8] sm:$0xff]
        %v1740 = vld [vmem:[#allocation9 + $0x3c0] sm:$0xff]
        %v1741 = vld [vmem:[#allocation9 + $0x3c8] sm:$0xff]
        %v1742 = vld [vmem:[#allocation9 + $0x3d0] sm:$0xff]
        %v1743 = vld [vmem:[#allocation9 + $0x3d8] sm:$0xff]
        %v1744 = vld [vmem:[#allocation9 + $0x3e0] sm:$0xff]
        %v1745 = vld [vmem:[#allocation9 + $0x3e8] sm:$0xff]
        %v1746 = vld [vmem:[#allocation9 + $0x3f0] sm:$0xff]
        %v1747 = vld [vmem:[#allocation9 + $0x3f8] sm:$0xff]
        %v1748 = vld [vmem:[#allocation9 + $0x400] sm:$0xff]
        %v1749 = vld [vmem:[#allocation9 + $0x408] sm:$0xff]
        %v1750 = vld [vmem:[#allocation9 + $0x410] sm:$0xff]
        %v1751 = vld [vmem:[#allocation9 + $0x418] sm:$0xff]
        %v1752 = vld [vmem:[#allocation9 + $0x420] sm:$0xff]
        %v1753 = vld [vmem:[#allocation9 + $0x428] sm:$0xff]
        %v1754 = vld [vmem:[#allocation9 + $0x430] sm:$0xff]
        %v1755 = vld [vmem:[#allocation9 + $0x438] sm:$0xff]
        %v1756 = vld [vmem:[#allocation9 + $0x440] sm:$0xff]
        %v1757 = vld [vmem:[#allocation9 + $0x448] sm:$0xff]
        %v1758 = vld [vmem:[#allocation9 + $0x450] sm:$0xff]
        %v1759 = vld [vmem:[#allocation9 + $0x458] sm:$0xff]
        %v1760 = vld [vmem:[#allocation9 + $0x460] sm:$0xff]
        %v1761 = vld [vmem:[#allocation9 + $0x468] sm:$0xff]
        %v1762 = vld [vmem:[#allocation9 + $0x470] sm:$0xff]
        %v1763 = vld [vmem:[#allocation9 + $0x478] sm:$0xff]
        %1764 = vmatprep.subr.mxu0 0.0
        %1765 = vmatpush1.msra.mxu0 %v1716
        %1766 = vmatprep.subr.mxu0 0.0
        %1767 = vmatpush1.msra.mxu0 %v1717
        %1768 = vmatprep.subr.mxu0 0.0
        %1769 = vmatpush1.msra.mxu0 %v1718
        %1770 = vmatprep.subr.mxu0 0.0
        %1771 = vmatpush1.msra.mxu0 %v1719
        %1772 = vmatprep.subr.mxu0 0.0
        %1773 = vmatpush1.msra.mxu0 %v1720
        %1774 = vmatprep.subr.mxu0 0.0
        %1775 = vmatpush1.msra.mxu0 %v1721
        %1776 = vmatprep.subr.mxu0 0.0
        %1777 = vmatpush1.msra.mxu0 %v1722
        %1778 = vmatprep.subr.mxu0 0.0
        %1779 = vmatpush1.msra.mxu0 %v1723
        %1780 = vmatprep.subr.mxu0 0.0
        %1781 = vmatpush1.msra.mxu0 %v1724
        %1782 = vmatprep.subr.mxu0 0.0
        %1783 = vmatpush1.msra.mxu0 %v1725
        %1784 = vmatprep.subr.mxu0 0.0
        %1785 = vmatpush1.msra.mxu0 %v1726
        %1786 = vmatprep.subr.mxu0 0.0
        %1787 = vmatpush1.msra.mxu0 %v1727
        %1788 = vmatprep.subr.mxu0 0.0
        %1789 = vmatpush1.msra.mxu0 %v1728
        %1790 = vmatprep.subr.mxu0 0.0
        %1791 = vmatpush1.msra.mxu0 %v1729
        %1792 = vmatprep.subr.mxu0 0.0
        %1793 = vmatpush1.msra.mxu0 %v1730
        %1794 = vmatprep.subr.mxu0 0.0
        %1795 = vmatpush1.msra.mxu0 %v1731
        %1796 = vmatprep.subr.mxu0 0.0
        %1797 = vmatpush1.msra.mxu0 %v1732
        %1798 = vmatprep.subr.mxu0 0.0
        %1799 = vmatpush1.msra.mxu0 %v1733
        %1800 = vmatprep.subr.mxu0 0.0
        %1801 = vmatpush1.msra.mxu0 %v1734
        %1802 = vmatprep.subr.mxu0 0.0
        %1803 = vmatpush1.msra.mxu0 %v1735
        %1804 = vmatprep.subr.mxu0 0.0
        %1805 = vmatpush1.msra.mxu0 %v1736
        %1806 = vmatprep.subr.mxu0 0.0
        %1807 = vmatpush1.msra.mxu0 %v1737
        %1808 = vmatprep.subr.mxu0 0.0
        %1809 = vmatpush1.msra.mxu0 %v1738
        %1810 = vmatprep.subr.mxu0 0.0
        %1811 = vmatpush1.msra.mxu0 %v1739
        %1812 = vmatprep.subr.mxu0 0.0
        %1813 = vmatpush1.msra.mxu0 %v1740
        %1814 = vmatprep.subr.mxu0 0.0
        %1815 = vmatpush1.msra.mxu0 %v1741
        %1816 = vmatprep.subr.mxu0 0.0
        %1817 = vmatpush1.msra.mxu0 %v1742
        %1818 = vmatprep.subr.mxu0 0.0
        %1819 = vmatpush1.msra.mxu0 %v1743
        %1820 = vmatprep.subr.mxu0 0.0
        %1821 = vmatpush1.msra.mxu0 %v1744
        %1822 = vmatprep.subr.mxu0 0.0
        %1823 = vmatpush1.msra.mxu0 %v1745
        %1824 = vmatprep.subr.mxu0 0.0
        %1825 = vmatpush1.msra.mxu0 %v1746
        %1826 = vmatprep.subr.mxu0 0.0
        %1827 = vmatpush1.msra.mxu0 %v1747
        %1828 = vmatprep.mubr.f32.mxu0 %v1556
        %1829 = vmatmul.mubr.f32.gmra.mrb[0].mxu0 %v1646
        %v1830 = vpop.f32.mrb[0].mxu0
        %v1831 = vadd.f32 0.0, %v1830
        %v1832 = vpop.f32.mrb[0].mxu0
        %1833 = vmatprep.mubr.f32.mxu0 %v1557
        %1834 = vmatmul.mubr.f32.gmra.mrb[0].mxu0 %v1598
        %v1835 = vpop.f32.mrb[0].mxu0
        %v1836 = vadd.f32 0.0, %v1835
        %v1837 = vpop.f32.mrb[0].mxu0
        %1838 = vmatprep.mubr.f32.mxu0 %v1558
        %1839 = vmatmul.mubr.f32.gmra.mrb[0].mxu0 %v1647
        %v1840 = vpop.f32.mrb[0].mxu0
        %v1841 = vadd.f32 0.0, %v1840
        %v1842 = vpop.f32.mrb[0].mxu0
        %1843 = vmatprep.mubr.f32.mxu0 %v1559
        %1844 = vmatmul.mubr.f32.gmra.mrb[0].mxu0 %v1601
        %v1845 = vpop.f32.mrb[0].mxu0
        %v1846 = vadd.f32 0.0, %v1845
        %v1847 = vpop.f32.mrb[0].mxu0
        %1848 = vmatprep.mubr.f32.mxu0 %v1560
        %1849 = vmatmul.mubr.f32.gmra.mrb[0].mxu0 %v1648
        %v1850 = vpop.f32.mrb[0].mxu0
        %v1851 = vadd.f32 0.0, %v1850
        %v1852 = vpop.f32.mrb[0].mxu0
        %1853 = vmatprep.mubr.f32.mxu0 %v1561
        %1854 = vmatmul.mubr.f32.gmra.mrb[0].mxu0 %v1604
        %v1855 = vpop.f32.mrb[0].mxu0
        %v1856 = vadd.f32 0.0, %v1855
        %v1857 = vpop.f32.mrb[0].mxu0
        %1858 = vmatprep.mubr.f32.mxu0 %v1562
        %1859 = vmatmul.mubr.f32.gmra.mrb[0].mxu0 %v1649
        %v1860 = vpop.f32.mrb[0].mxu0
        %v1861 = vadd.f32 0.0, %v1860
        %v1862 = vpop.f32.mrb[0].mxu0
        %1863 = vmatprep.mubr.f32.mxu0 %v1563
        %1864 = vmatmul.mubr.f32.gmra.mrb[0].mxu0 %v1607
        %v1865 = vpop.f32.mrb[0].mxu0
        %v1866 = vadd.f32 0.0, %v1865
        %v1867 = vpop.f32.mrb[0].mxu0
        %1868 = vmatprep.mubr.f32.mxu0 %v1564
        %1869 = vmatmul.mubr.f32.gmra.mrb[0].mxu0 %v1650
        %v1870 = vpop.f32.mrb[0].mxu0
        %v1871 = vadd.f32 0.0, %v1870
        %v1872 = vpop.f32.mrb[0].mxu0
        %1873 = vmatprep.mubr.f32.mxu0 %v1565
        %1874 = vmatmul.mubr.f32.gmra.mrb[0].mxu0 %v1610
        %v1875 = vpop.f32.mrb[0].mxu0
        %v1876 = vadd.f32 0.0, %v1875
        %v1877 = vpop.f32.mrb[0].mxu0
        %1878 = vmatprep.mubr.f32.mxu0 %v1566
        %1879 = vmatmul.mubr.f32.gmra.mrb[0].mxu0 %v1651
        %v1880 = vpop.f32.mrb[0].mxu0
        %v1881 = vadd.f32 0.0, %v1880
        %v1882 = vpop.f32.mrb[0].mxu0
        %1883 = vmatprep.mubr.f32.mxu0 %v1567
        %1884 = vmatmul.mubr.f32.gmra.mrb[0].mxu0 %v1613
        %v1885 = vpop.f32.mrb[0].mxu0
        %v1886 = vadd.f32 0.0, %v1885
        %v1887 = vpop.f32.mrb[0].mxu0
        %1888 = vmatprep.mubr.f32.mxu0 %v1568
        %1889 = vmatmul.mubr.f32.gmra.mrb[0].mxu0 %v1652
        %v1890 = vpop.f32.mrb[0].mxu0
        %v1891 = vadd.f32 0.0, %v1890
        %v1892 = vpop.f32.mrb[0].mxu0
        %1893 = vmatprep.mubr.f32.mxu0 %v1569
        %1894 = vmatmul.mubr.f32.gmra.mrb[0].mxu0 %v1616
        %v1895 = vpop.f32.mrb[0].mxu0
        %v1896 = vadd.f32 0.0, %v1895
        %v1897 = vpop.f32.mrb[0].mxu0
        %1898 = vmatprep.mubr.f32.mxu0 %v1570
        %1899 = vmatmul.mubr.f32.gmra.mrb[0].mxu0 %v1653
        %v1900 = vpop.f32.mrb[0].mxu0
        %v1901 = vadd.f32 0.0, %v1900
        %v1902 = vpop.f32.mrb[0].mxu0
        %1903 = vmatprep.mubr.f32.mxu0 %v1571
        %1904 = vmatmul.mubr.f32.gmra.mrb[0].mxu0 %v1619
        %v1905 = vpop.f32.mrb[0].mxu0
        %v1906 = vadd.f32 0.0, %v1905
        %v1907 = vpop.f32.mrb[0].mxu0
        %1908 = vmatprep.mubr.f32.mxu0 %v1572
        %1909 = vmatmul.mubr.f32.gmra.mrb[0].mxu0 %v1654
        %v1910 = vpop.f32.mrb[0].mxu0
        %v1911 = vadd.f32 0.0, %v1910
        %v1912 = vpop.f32.mrb[0].mxu0
        %1913 = vmatprep.mubr.f32.mxu0 %v1573
        %1914 = vmatmul.mubr.f32.gmra.mrb[0].mxu0 %v1622
        %v1915 = vpop.f32.mrb[0].mxu0
        %v1916 = vadd.f32 0.0, %v1915
        %v1917 = vpop.f32.mrb[0].mxu0
        %1918 = vmatprep.mubr.f32.mxu0 %v1574
        %1919 = vmatmul.mubr.f32.gmra.mrb[0].mxu0 %v1655
        %v1920 = vpop.f32.mrb[0].mxu0
        %v1921 = vadd.f32 0.0, %v1920
        %v1922 = vpop.f32.mrb[0].mxu0
        %1923 = vmatprep.mubr.f32.mxu0 %v1575
        %1924 = vmatmul.mubr.f32.gmra.mrb[0].mxu0 %v1625
        %v1925 = vpop.f32.mrb[0].mxu0
        %v1926 = vadd.f32 0.0, %v1925
        %v1927 = vpop.f32.mrb[0].mxu0
        %1928 = vdwg.mxu0
        %1929 = vmatprep.subr.mxu0 0.0
        %1930 = vmatpush1.msra.mxu0 %v1748
        %1931 = vmatprep.subr.mxu0 0.0
        %1932 = vmatpush1.msra.mxu0 %v1749
        %1933 = vmatprep.subr.mxu0 0.0
        %1934 = vmatpush1.msra.mxu0 %v1750
        %1935 = vmatprep.subr.mxu0 0.0
        %1936 = vmatpush1.msra.mxu0 %v1751
        %1937 = vmatprep.subr.mxu0 0.0
        %1938 = vmatpush1.msra.mxu0 %v1752
        %1939 = vmatprep.subr.mxu0 0.0
        %1940 = vmatpush1.msra.mxu0 %v1753
        %1941 = vmatprep.subr.mxu0 0.0
        %1942 = vmatpush1.msra.mxu0 %v1754
        %1943 = vmatprep.subr.mxu0 0.0
        %1944 = vmatpush1.msra.mxu0 %v1755
        %1945 = vmatprep.subr.mxu0 0.0
        %1946 = vmatpush1.msra.mxu0 %v1756
        %1947 = vmatprep.subr.mxu0 0.0
        %1948 = vmatpush1.msra.mxu0 %v1757
        %1949 = vmatprep.subr.mxu0 0.0
        %1950 = vmatpush1.msra.mxu0 %v1758
        %1951 = vmatprep.subr.mxu0 0.0
        %1952 = vmatpush1.msra.mxu0 %v1759
        %1953 = vmatprep.subr.mxu0 0.0
        %1954 = vmatpush1.msra.mxu0 %v1760
        %1955 = vmatprep.subr.mxu0 0.0
        %1956 = vmatpush1.msra.mxu0 %v1761
        %1957 = vmatprep.subr.mxu0 0.0
        %1958 = vmatpush1.msra.mxu0 %v1762
        %1959 = vmatprep.subr.mxu0 0.0
        %1960 = vmatpush1.msra.mxu0 %v1763
        %1961 = vmatprep.subr.mxu0 0.0
        %1962 = vmatpush1.msra.mxu0 0.0
        %1963 = vmatprep.subr.mxu0 0.0
        %1964 = vmatpush1.msra.mxu0 0.0
        %1965 = vmatprep.subr.mxu0 0.0
        %1966 = vmatpush1.msra.mxu0 0.0
        %1967 = vmatprep.subr.mxu0 0.0
        %1968 = vmatpush1.msra.mxu0 0.0
        %1969 = vmatprep.subr.mxu0 0.0
        %1970 = vmatpush1.msra.mxu0 0.0
        %1971 = vmatprep.subr.mxu0 0.0
        %1972 = vmatpush1.msra.mxu0 0.0
        %1973 = vmatprep.subr.mxu0 0.0
        %1974 = vmatpush1.msra.mxu0 0.0
        %1975 = vmatprep.subr.mxu0 0.0
        %1976 = vmatpush1.msra.mxu0 0.0
        %1977 = vmatprep.subr.mxu0 0.0
        %1978 = vmatpush1.msra.mxu0 0.0
        %1979 = vmatprep.subr.mxu0 0.0
        %1980 = vmatpush1.msra.mxu0 0.0
        %1981 = vmatprep.subr.mxu0 0.0
        %1982 = vmatpush1.msra.mxu0 0.0
        %1983 = vmatprep.subr.mxu0 0.0
        %1984 = vmatpush1.msra.mxu0 0.0
        %1985 = vmatprep.subr.mxu0 0.0
        %1986 = vmatpush1.msra.mxu0 0.0
        %1987 = vmatprep.subr.mxu0 0.0
        %1988 = vmatpush1.msra.mxu0 0.0
        %1989 = vmatprep.subr.mxu0 0.0
        %1990 = vmatpush1.msra.mxu0 0.0
        %1991 = vmatprep.subr.mxu0 0.0
        %1992 = vmatpush1.msra.mxu0 0.0
        %1993 = vmatprep.mubr.f32.mxu0 0.0
        %1994 = vmatmul.mubr.f32.gmra.mrb[0].mxu0 %v1658
        %v1995 = vpop.f32.mrb[0].mxu0
        %v1996 = vadd.f32 %v1831, %v1995
        %v1997 = vpop.f32.mrb[0].mxu0
        %1998 = vmatprep.mubr.f32.mxu0 0.0
        %1999 = vmatmul.mubr.f32.gmra.mrb[0].mxu0 %v1706
        %v2000 = vpop.f32.mrb[0].mxu0
        %v2001 = vadd.f32 %v1836, %v2000
        %v2002 = vpop.f32.mrb[0].mxu0
        %2003 = vmatprep.mubr.f32.mxu0 0.0
        %2004 = vmatmul.mubr.f32.gmra.mrb[0].mxu0 %v1661
        %v2005 = vpop.f32.mrb[0].mxu0
        %v2006 = vadd.f32 %v1841, %v2005
        %v2007 = vpop.f32.mrb[0].mxu0
        %2008 = vmatprep.mubr.f32.mxu0 0.0
        %2009 = vmatmul.mubr.f32.gmra.mrb[0].mxu0 %v1707
        %v2010 = vpop.f32.mrb[0].mxu0
        %v2011 = vadd.f32 %v1846, %v2010
        %v2012 = vpop.f32.mrb[0].mxu0
        %2013 = vmatprep.mubr.f32.mxu0 0.0
        %2014 = vmatmul.mubr.f32.gmra.mrb[0].mxu0 %v1664
        %v2015 = vpop.f32.mrb[0].mxu0
        %v2016 = vadd.f32 %v1851, %v2015
        %v2017 = vpop.f32.mrb[0].mxu0
        %2018 = vmatprep.mubr.f32.mxu0 0.0
        %2019 = vmatmul.mubr.f32.gmra.mrb[0].mxu0 %v1708
        %v2020 = vpop.f32.mrb[0].mxu0
        %v2021 = vadd.f32 %v1856, %v2020
        %v2022 = vpop.f32.mrb[0].mxu0
        %2023 = vmatprep.mubr.f32.mxu0 0.0
        %2024 = vmatmul.mubr.f32.gmra.mrb[0].mxu0 %v1667
        %v2025 = vpop.f32.mrb[0].mxu0
        %v2026 = vadd.f32 %v1861, %v2025
        %v2027 = vpop.f32.mrb[0].mxu0
        %2028 = vmatprep.mubr.f32.mxu0 0.0
        %2029 = vmatmul.mubr.f32.gmra.mrb[0].mxu0 %v1709
        %v2030 = vpop.f32.mrb[0].mxu0
        %v2031 = vadd.f32 %v1866, %v2030
        %v2032 = vpop.f32.mrb[0].mxu0
        %2033 = vmatprep.mubr.f32.mxu0 0.0
        %2034 = vmatmul.mubr.f32.gmra.mrb[0].mxu0 %v1670
        %v2035 = vpop.f32.mrb[0].mxu0
        %v2036 = vadd.f32 %v1871, %v2035
        %v2037 = vpop.f32.mrb[0].mxu0
        %2038 = vmatprep.mubr.f32.mxu0 0.0
        %2039 = vmatmul.mubr.f32.gmra.mrb[0].mxu0 %v1710
        %v2040 = vpop.f32.mrb[0].mxu0
        %v2041 = vadd.f32 %v1876, %v2040
        %v2042 = vpop.f32.mrb[0].mxu0
        %2043 = vmatprep.mubr.f32.mxu0 0.0
        %2044 = vmatmul.mubr.f32.gmra.mrb[0].mxu0 %v1673
        %v2045 = vpop.f32.mrb[0].mxu0
        %v2046 = vadd.f32 %v1881, %v2045
        %v2047 = vpop.f32.mrb[0].mxu0
        %2048 = vmatprep.mubr.f32.mxu0 0.0
        %2049 = vmatmul.mubr.f32.gmra.mrb[0].mxu0 %v1711
        %v2050 = vpop.f32.mrb[0].mxu0
        %v2051 = vadd.f32 %v1886, %v2050
        %v2052 = vpop.f32.mrb[0].mxu0
        %2053 = vmatprep.mubr.f32.mxu0 0.0
        %2054 = vmatmul.mubr.f32.gmra.mrb[0].mxu0 %v1676
        %v2055 = vpop.f32.mrb[0].mxu0
        %v2056 = vadd.f32 %v1891, %v2055
        %v2057 = vpop.f32.mrb[0].mxu0
        %2058 = vmatprep.mubr.f32.mxu0 0.0
        %2059 = vmatmul.mubr.f32.gmra.mrb[0].mxu0 %v1712
        %v2060 = vpop.f32.mrb[0].mxu0
        %v2061 = vadd.f32 %v1896, %v2060
        %v2062 = vpop.f32.mrb[0].mxu0
        %2063 = vmatprep.mubr.f32.mxu0 0.0
        %2064 = vmatmul.mubr.f32.gmra.mrb[0].mxu0 %v1679
        %v2065 = vpop.f32.mrb[0].mxu0
        %v2066 = vadd.f32 %v1901, %v2065
        %v2067 = vpop.f32.mrb[0].mxu0
        %2068 = vmatprep.mubr.f32.mxu0 0.0
        %2069 = vmatmul.mubr.f32.gmra.mrb[0].mxu0 %v1713
        %v2070 = vpop.f32.mrb[0].mxu0
        %v2071 = vadd.f32 %v1906, %v2070
        %v2072 = vpop.f32.mrb[0].mxu0
        %2073 = vmatprep.mubr.f32.mxu0 0.0
        %2074 = vmatmul.mubr.f32.gmra.mrb[0].mxu0 %v1682
        %v2075 = vpop.f32.mrb[0].mxu0
        %v2076 = vadd.f32 %v1911, %v2075
        %v2077 = vpop.f32.mrb[0].mxu0
        %2078 = vmatprep.mubr.f32.mxu0 0.0
        %2079 = vmatmul.mubr.f32.gmra.mrb[0].mxu0 %v1714
        %v2080 = vpop.f32.mrb[0].mxu0
        %v2081 = vadd.f32 %v1916, %v2080
        %v2082 = vpop.f32.mrb[0].mxu0
        %2083 = vmatprep.mubr.f32.mxu0 0.0
        %2084 = vmatmul.mubr.f32.gmra.mrb[0].mxu0 %v1685
        %v2085 = vpop.f32.mrb[0].mxu0
        %v2086 = vadd.f32 %v1921, %v2085
        %v2087 = vpop.f32.mrb[0].mxu0
        %2088 = vmatprep.mubr.f32.mxu0 0.0
        %2089 = vmatmul.mubr.f32.gmra.mrb[0].mxu0 %v1715
        %v2090 = vpop.f32.mrb[0].mxu0
        %v2091 = vadd.f32 %v1926, %v2090
        %v2092 = vpop.f32.mrb[0].mxu0
        %2093 = vdwg.mxu0
        %v2094 = vld [vmem:[#allocation4] sm:$0xff]
        %v2095 = vld [vmem:[#allocation4 + $0x8] sm:$0xff]
        %v2096 = vld [vmem:[#allocation4 + $0x10] sm:$0xff]
        %v2097 = vld [vmem:[#allocation4 + $0x18] sm:$0xff]
        %v2098 = vld [vmem:[#allocation4 + $0x20] sm:$0xff]
        %v2099 = vld [vmem:[#allocation4 + $0x28] sm:$0xff]
        %v2100 = vld [vmem:[#allocation4 + $0x30] sm:$0xff]
        %v2101 = vld [vmem:[#allocation4 + $0x38] sm:$0xff]
        %v2102 = vld [vmem:[#allocation4 + $0x40] sm:$0xff]
        %v2103 = vld [vmem:[#allocation4 + $0x48] sm:$0xff]
        %v2104 = vld [vmem:[#allocation4 + $0x50] sm:$0xff]
        %v2105 = vld [vmem:[#allocation4 + $0x58] sm:$0xff]
        %v2106 = vld [vmem:[#allocation4 + $0x60] sm:$0xff]
        %v2107 = vld [vmem:[#allocation4 + $0x68] sm:$0xff]
        %v2108 = vld [vmem:[#allocation4 + $0x70] sm:$0xff]
        %v2109 = vld [vmem:[#allocation4 + $0x78] sm:$0xff]
        %v2110 = vld [vmem:[#allocation4 + $0x80] sm:$0xff]
        %v2111 = vld [vmem:[#allocation4 + $0x88] sm:$0xff]
        %v2112 = vld [vmem:[#allocation4 + $0x90] sm:$0xff]
        %v2113 = vld [vmem:[#allocation4 + $0x98] sm:$0xff]
        %v2114 = vadd.f32 %v2094, %v1996
        %v2115 = vadd.f32 %v2095, %v2001
        %v2116 = vadd.f32 %v2096, %v2006
        %v2117 = vadd.f32 %v2097, %v2011
        %v2118 = vadd.f32 %v2098, %v2016
        %v2119 = vadd.f32 %v2099, %v2021
        %v2120 = vadd.f32 %v2100, %v2026
        %v2121 = vadd.f32 %v2101, %v2031
        %v2122 = vadd.f32 %v2102, %v2036
        %v2123 = vadd.f32 %v2103, %v2041
        %v2124 = vadd.f32 %v2104, %v2046
        %v2125 = vadd.f32 %v2105, %v2051
        %v2126 = vadd.f32 %v2106, %v2056
        %v2127 = vadd.f32 %v2107, %v2061
        %v2128 = vadd.f32 %v2108, %v2066
        %v2129 = vadd.f32 %v2109, %v2071
        %v2130 = vadd.f32 %v2110, %v2076
        %v2131 = vadd.f32 %v2111, %v2081
        %v2132 = vadd.f32 %v2112, %v2086
        %v2133 = vadd.f32 %v2113, %v2091
        %2134 = vst [vmem:[#allocation4] sm:$0xff] %v2114
        %2135 = vst [vmem:[#allocation4 + $0x8] sm:$0xff] %v2115
        %2136 = vst [vmem:[#allocation4 + $0x10] sm:$0xff] %v2116
        %2137 = vst [vmem:[#allocation4 + $0x18] sm:$0xff] %v2117
        %2138 = vst [vmem:[#allocation4 + $0x20] sm:$0xff] %v2118
        %2139 = vst [vmem:[#allocation4 + $0x28] sm:$0xff] %v2119
        %2140 = vst [vmem:[#allocation4 + $0x30] sm:$0xff] %v2120
        %2141 = vst [vmem:[#allocation4 + $0x38] sm:$0xff] %v2121
        %2142 = vst [vmem:[#allocation4 + $0x40] sm:$0xff] %v2122
        %2143 = vst [vmem:[#allocation4 + $0x48] sm:$0xff] %v2123
        %2144 = vst [vmem:[#allocation4 + $0x50] sm:$0xff] %v2124
        %2145 = vst [vmem:[#allocation4 + $0x58] sm:$0xff] %v2125
        %2146 = vst [vmem:[#allocation4 + $0x60] sm:$0xff] %v2126
        %2147 = vst [vmem:[#allocation4 + $0x68] sm:$0xff] %v2127
        %2148 = vst [vmem:[#allocation4 + $0x70] sm:$0xff] %v2128
        %2149 = vst [vmem:[#allocation4 + $0x78] sm:$0xff] %v2129
        %2150 = vst [vmem:[#allocation4 + $0x80] sm:$0xff] %v2130
        %2151 = vst [vmem:[#allocation4 + $0x88] sm:$0xff] %v2131
        %2152 = vst [vmem:[#allocation4 + $0x90] sm:$0xff] %v2132
        %2153 = vst [vmem:[#allocation4 + $0x98] sm:$0xff] %v2133
        %v2154 = vld [vmem:[#allocation4] sm:$0xff]
        %v2155 = vld [vmem:[#allocation4 + $0x8] sm:$0xff]
        %v2156 = vld [vmem:[#allocation4 + $0x10] sm:$0xff]
        %v2157 = vld [vmem:[#allocation4 + $0x18] sm:$0xff]
        %v2158 = vld [vmem:[#allocation4 + $0x20] sm:$0xff]
        %v2159 = vld [vmem:[#allocation4 + $0x28] sm:$0xff]
        %v2160 = vld [vmem:[#allocation4 + $0x30] sm:$0xff]
        %v2161 = vld [vmem:[#allocation4 + $0x38] sm:$0xff]
        %v2162 = vld [vmem:[#allocation4 + $0x40] sm:$0xff]
        %v2163 = vld [vmem:[#allocation4 + $0x48] sm:$0xff]
        %v2164 = vld [vmem:[#allocation4 + $0x50] sm:$0xff]
        %v2165 = vld [vmem:[#allocation4 + $0x58] sm:$0xff]
        %v2166 = vld [vmem:[#allocation4 + $0x60] sm:$0xff]
        %v2167 = vld [vmem:[#allocation4 + $0x68] sm:$0xff]
        %v2168 = vld [vmem:[#allocation4 + $0x70] sm:$0xff]
        %v2169 = vld [vmem:[#allocation4 + $0x78] sm:$0xff]
        %v2170 = vld [vmem:[#allocation4 + $0x80] sm:$0xff]
        %v2171 = vld [vmem:[#allocation4 + $0x88] sm:$0xff]
        %v2172 = vld [vmem:[#allocation4 + $0x90] sm:$0xff]
        %v2173 = vld [vmem:[#allocation4 + $0x98] sm:$0xff]
        %v2174 = vld [vmem:[%s4] sm:$0x1]
        %v2176 = vlaneseq
        %v2177 = vshrl.u32 %v2176, 7
        %v2178 = vsub.s32 0, %v2177
        %v2179 = vrot.slane %v2174, %v2178
        %v2181 = vadd.f32 %v2154, %v2179
        %v2182 = vadd.f32 %v2155, %v2179
        %v2183 = vadd.f32 %v2156, %v2179
        %v2184 = vadd.f32 %v2157, %v2179
        %v2185 = vadd.f32 %v2158, %v2179
        %v2186 = vadd.f32 %v2159, %v2179
        %v2187 = vadd.f32 %v2160, %v2179
        %v2188 = vadd.f32 %v2161, %v2179
        %v2189 = vadd.f32 %v2162, %v2179
        %v2190 = vadd.f32 %v2163, %v2179
        %v2191 = vadd.f32 %v2164, %v2179
        %v2192 = vadd.f32 %v2165, %v2179
        %v2193 = vadd.f32 %v2166, %v2179
        %v2194 = vadd.f32 %v2167, %v2179
        %v2195 = vadd.f32 %v2168, %v2179
        %v2196 = vadd.f32 %v2169, %v2179
        %v2197 = vadd.f32 %v2170, %v2179
        %v2198 = vadd.f32 %v2171, %v2179
        %v2199 = vadd.f32 %v2172, %v2179
        %v2200 = vadd.f32 %v2173, %v2179
        %v2201 = vxor.u32 %v2181, 2147483648
        %v2202 = vxor.u32 %v2182, 2147483648
        %v2203 = vxor.u32 %v2183, 2147483648
        %v2204 = vxor.u32 %v2184, 2147483648
        %v2205 = vxor.u32 %v2185, 2147483648
        %v2206 = vxor.u32 %v2186, 2147483648
        %v2207 = vxor.u32 %v2187, 2147483648
        %v2208 = vxor.u32 %v2188, 2147483648
        %v2209 = vxor.u32 %v2189, 2147483648
        %v2210 = vxor.u32 %v2190, 2147483648
        %v2211 = vxor.u32 %v2191, 2147483648
        %v2212 = vxor.u32 %v2192, 2147483648
        %v2213 = vxor.u32 %v2193, 2147483648
        %v2214 = vxor.u32 %v2194, 2147483648
        %v2215 = vxor.u32 %v2195, 2147483648
        %v2216 = vxor.u32 %v2196, 2147483648
        %v2217 = vxor.u32 %v2197, 2147483648
        %v2218 = vxor.u32 %v2198, 2147483648
        %v2219 = vxor.u32 %v2199, 2147483648
        %v2220 = vxor.u32 %v2200, 2147483648
        %v2221 = vmul.f32 %v2201, 1.442695
        %v2222 = vpow.pop %v2221
        %v2223 = vmul.f32 %v2202, 1.442695
        %v2224 = vpow.pop %v2223
        %v2225 = vmul.f32 %v2203, 1.442695
        %v2226 = vpow.pop %v2225
        %v2227 = vmul.f32 %v2204, 1.442695
        %v2228 = vpow.pop %v2227
        %v2229 = vmul.f32 %v2205, 1.442695
        %v2230 = vpow.pop %v2229
        %v2231 = vmul.f32 %v2206, 1.442695
        %v2232 = vpow.pop %v2231
        %v2233 = vmul.f32 %v2207, 1.442695
        %v2234 = vpow.pop %v2233
        %v2235 = vmul.f32 %v2208, 1.442695
        %v2236 = vpow.pop %v2235
        %v2237 = vmul.f32 %v2209, 1.442695
        %v2238 = vpow.pop %v2237
        %v2239 = vmul.f32 %v2210, 1.442695
        %v2240 = vpow.pop %v2239
        %v2241 = vmul.f32 %v2211, 1.442695
        %v2242 = vpow.pop %v2241
        %v2243 = vmul.f32 %v2212, 1.442695
        %v2244 = vpow.pop %v2243
        %v2245 = vmul.f32 %v2213, 1.442695
        %v2246 = vpow.pop %v2245
        %v2247 = vmul.f32 %v2214, 1.442695
        %v2248 = vpow.pop %v2247
        %v2249 = vmul.f32 %v2215, 1.442695
        %v2250 = vpow.pop %v2249
        %v2251 = vmul.f32 %v2216, 1.442695
        %v2252 = vpow.pop %v2251
        %v2253 = vmul.f32 %v2217, 1.442695
        %v2254 = vpow.pop %v2253
        %v2255 = vmul.f32 %v2218, 1.442695
        %v2256 = vpow.pop %v2255
        %v2257 = vmul.f32 %v2219, 1.442695
        %v2258 = vpow.pop %v2257
        %v2259 = vmul.f32 %v2220, 1.442695
        %v2260 = vpow.pop %v2259
        %v2261 = vadd.f32 %v2222, 1.0
        %v2262 = vadd.f32 %v2224, 1.0
        %v2263 = vadd.f32 %v2226, 1.0
        %v2264 = vadd.f32 %v2228, 1.0
        %v2265 = vadd.f32 %v2230, 1.0
        %v2266 = vadd.f32 %v2232, 1.0
        %v2267 = vadd.f32 %v2234, 1.0
        %v2268 = vadd.f32 %v2236, 1.0
        %v2269 = vadd.f32 %v2238, 1.0
        %v2270 = vadd.f32 %v2240, 1.0
        %v2271 = vadd.f32 %v2242, 1.0
        %v2272 = vadd.f32 %v2244, 1.0
        %v2273 = vadd.f32 %v2246, 1.0
        %v2274 = vadd.f32 %v2248, 1.0
        %v2275 = vadd.f32 %v2250, 1.0
        %v2276 = vadd.f32 %v2252, 1.0
        %v2277 = vadd.f32 %v2254, 1.0
        %v2278 = vadd.f32 %v2256, 1.0
        %v2279 = vadd.f32 %v2258, 1.0
        %v2280 = vadd.f32 %v2260, 1.0
        %v2281 = vrcp.pop %v2261
        %v2282 = vmul.f32 1.0, %v2281
        %v2283 = vrcp.pop %v2262
        %v2284 = vmul.f32 1.0, %v2283
        %v2285 = vrcp.pop %v2263
        %v2286 = vmul.f32 1.0, %v2285
        %v2287 = vrcp.pop %v2264
        %v2288 = vmul.f32 1.0, %v2287
        %v2289 = vrcp.pop %v2265
        %v2290 = vmul.f32 1.0, %v2289
        %v2291 = vrcp.pop %v2266
        %v2292 = vmul.f32 1.0, %v2291
        %v2293 = vrcp.pop %v2267
        %v2294 = vmul.f32 1.0, %v2293
        %v2295 = vrcp.pop %v2268
        %v2296 = vmul.f32 1.0, %v2295
        %v2297 = vrcp.pop %v2269
        %v2298 = vmul.f32 1.0, %v2297
        %v2299 = vrcp.pop %v2270
        %v2300 = vmul.f32 1.0, %v2299
        %v2301 = vrcp.pop %v2271
        %v2302 = vmul.f32 1.0, %v2301
        %v2303 = vrcp.pop %v2272
        %v2304 = vmul.f32 1.0, %v2303
        %v2305 = vrcp.pop %v2273
        %v2306 = vmul.f32 1.0, %v2305
        %v2307 = vrcp.pop %v2274
        %v2308 = vmul.f32 1.0, %v2307
        %v2309 = vrcp.pop %v2275
        %v2310 = vmul.f32 1.0, %v2309
        %v2311 = vrcp.pop %v2276
        %v2312 = vmul.f32 1.0, %v2311
        %v2313 = vrcp.pop %v2277
        %v2314 = vmul.f32 1.0, %v2313
        %v2315 = vrcp.pop %v2278
        %v2316 = vmul.f32 1.0, %v2315
        %v2317 = vrcp.pop %v2279
        %v2318 = vmul.f32 1.0, %v2317
        %v2319 = vrcp.pop %v2280
        %v2320 = vmul.f32 1.0, %v2319
        %v2321 = vmul.f32 %v2181, %v2282
        %v2322 = vmul.f32 %v2182, %v2284
        %v2323 = vmul.f32 %v2183, %v2286
        %v2324 = vmul.f32 %v2184, %v2288
        %v2325 = vmul.f32 %v2185, %v2290
        %v2326 = vmul.f32 %v2186, %v2292
        %v2327 = vmul.f32 %v2187, %v2294
        %v2328 = vmul.f32 %v2188, %v2296
        %v2329 = vmul.f32 %v2189, %v2298
        %v2330 = vmul.f32 %v2190, %v2300
        %v2331 = vmul.f32 %v2191, %v2302
        %v2332 = vmul.f32 %v2192, %v2304
        %v2333 = vmul.f32 %v2193, %v2306
        %v2334 = vmul.f32 %v2194, %v2308
        %v2335 = vmul.f32 %v2195, %v2310
        %v2336 = vmul.f32 %v2196, %v2312
        %v2337 = vmul.f32 %v2197, %v2314
        %v2338 = vmul.f32 %v2198, %v2316
        %v2339 = vmul.f32 %v2199, %v2318
        %v2340 = vmul.f32 %v2200, %v2320
        %2341 = vst [vmem:[#allocation3] sm:$0xff] %v2321
        %2342 = vst [vmem:[#allocation3 + $0x8] sm:$0xff] %v2322
        %2343 = vst [vmem:[#allocation3 + $0x10] sm:$0xff] %v2323
        %2344 = vst [vmem:[#allocation3 + $0x18] sm:$0xff] %v2324
        %2345 = vst [vmem:[#allocation3 + $0x20] sm:$0xff] %v2325
        %2346 = vst [vmem:[#allocation3 + $0x28] sm:$0xff] %v2326
        %2347 = vst [vmem:[#allocation3 + $0x30] sm:$0xff] %v2327
        %2348 = vst [vmem:[#allocation3 + $0x38] sm:$0xff] %v2328
        %2349 = vst [vmem:[#allocation3 + $0x40] sm:$0xff] %v2329
        %2350 = vst [vmem:[#allocation3 + $0x48] sm:$0xff] %v2330
        %2351 = vst [vmem:[#allocation3 + $0x50] sm:$0xff] %v2331
        %2352 = vst [vmem:[#allocation3 + $0x58] sm:$0xff] %v2332
        %2353 = vst [vmem:[#allocation3 + $0x60] sm:$0xff] %v2333
        %2354 = vst [vmem:[#allocation3 + $0x68] sm:$0xff] %v2334
        %2355 = vst [vmem:[#allocation3 + $0x70] sm:$0xff] %v2335
        %2356 = vst [vmem:[#allocation3 + $0x78] sm:$0xff] %v2336
        %2357 = vst [vmem:[#allocation3 + $0x80] sm:$0xff] %v2337
        %2358 = vst [vmem:[#allocation3 + $0x88] sm:$0xff] %v2338
        %2359 = vst [vmem:[#allocation3 + $0x90] sm:$0xff] %v2339
        %2360 = vst [vmem:[#allocation3 + $0x98] sm:$0xff] %v2340
        // Predicated region
        $region77: #{tpu_custom_call.1} parent=39 // pred_check
          %p2361 = pneg %p353
        $region78: #{tpu_custom_call.1} parent=39 // pred_check_branch
          %2363 = sbr.rel (%p2361) target = $region80
        $region79: #{tpu_custom_call.1} parent=39 // pred_region
          %2364 = vst [vmem:[#allocation3] sm:$0xff] 0.0
          %2365 = vst [vmem:[#allocation3 + $0x8] sm:$0xff] 0.0
        $region80: #{tpu_custom_call.1} parent=39 // pred_fallthru
          _
        // Predicated region
        $region81: #{tpu_custom_call.1} parent=39 // pred_check
          %p2366 = pneg %p388
        $region82: #{tpu_custom_call.1} parent=39 // pred_check_branch
          %2368 = sbr.rel (%p2366) target = $region84
        $region83: #{tpu_custom_call.1} parent=39 // pred_region
          %s2369 = scalar_lea.vmem [#allocation3], 144
          %2370 = vst [vmem:[%s2369] sm:$0xff] 0.0
          %2371 = vst [vmem:[%s2369 + $0x8] sm:$0xff] 0.0
        $region84: #{tpu_custom_call.1} parent=39 // pred_fallthru
          _
        %v2372 = vld [vmem:[#allocation3] sm:$0xff]
        %v2373 = vld [vmem:[#allocation3 + $0x8] sm:$0xff]
        %v2374 = vld [vmem:[#allocation3 + $0x10] sm:$0xff]
        %v2375 = vld [vmem:[#allocation3 + $0x18] sm:$0xff]
        %v2376 = vld [vmem:[#allocation3 + $0x20] sm:$0xff]
        %v2377 = vld [vmem:[#allocation3 + $0x28] sm:$0xff]
        %v2378 = vld [vmem:[#allocation3 + $0x30] sm:$0xff]
        %v2379 = vld [vmem:[#allocation3 + $0x38] sm:$0xff]
        %v2380 = vld [vmem:[#allocation3 + $0x40] sm:$0xff]
        %v2381 = vld [vmem:[#allocation3 + $0x48] sm:$0xff]
        %v2382 = vld [vmem:[#allocation3 + $0x50] sm:$0xff]
        %v2383 = vld [vmem:[#allocation3 + $0x58] sm:$0xff]
        %v2384 = vld [vmem:[#allocation3 + $0x60] sm:$0xff]
        %v2385 = vld [vmem:[#allocation3 + $0x68] sm:$0xff]
        %v2386 = vld [vmem:[#allocation3 + $0x70] sm:$0xff]
        %v2387 = vld [vmem:[#allocation3 + $0x78] sm:$0xff]
        %v2404 = vrot.slane %v2372, 7
        %v2405 = vrot.slane %v2373, 7
        %v2406 = vsel %vm437, %v2404, %v2405
        %v2407 = vrot.slane %v2374, 7
        %v2408 = vrot.slane %v2375, 7
        %v2409 = vsel %vm437, %v2407, %v2408
        %v2410 = vrot.slane %v2376, 7
        %v2411 = vrot.slane %v2377, 7
        %v2412 = vsel %vm437, %v2410, %v2411
        %v2413 = vrot.slane %v2378, 7
        %v2414 = vrot.slane %v2379, 7
        %v2415 = vsel %vm437, %v2413, %v2414
        %v2416 = vrot.slane %v2380, 7
        %v2417 = vrot.slane %v2381, 7
        %v2418 = vsel %vm437, %v2416, %v2417
        %v2419 = vrot.slane %v2382, 7
        %v2420 = vrot.slane %v2383, 7
        %v2421 = vsel %vm437, %v2419, %v2420
        %v2422 = vrot.slane %v2384, 7
        %v2423 = vrot.slane %v2385, 7
        %v2424 = vsel %vm437, %v2422, %v2423
        %v2425 = vrot.slane %v2386, 7
        %v2426 = vrot.slane %v2387, 7
        %v2427 = vsel %vm437, %v2425, %v2426
        %v2444 = vsel %vm437, 0.0, %v2404
        %v2445 = vsel %vm437, 0.0, %v2407
        %v2446 = vsel %vm437, 0.0, %v2410
        %v2447 = vsel %vm437, 0.0, %v2413
        %v2448 = vsel %vm437, 0.0, %v2416
        %v2449 = vsel %vm437, 0.0, %v2419
        %v2450 = vsel %vm437, 0.0, %v2422
        %v2451 = vsel %vm437, 0.0, %v2425
        %v2452 = vrot.slane %v2372, 1
        %v2453 = vrot.slane %v2373, 1
        %v2454 = vsel %vm498, %v2452, %v2453
        %v2455 = vrot.slane %v2374, 1
        %v2456 = vrot.slane %v2375, 1
        %v2457 = vsel %vm498, %v2455, %v2456
        %v2458 = vrot.slane %v2376, 1
        %v2459 = vrot.slane %v2377, 1
        %v2460 = vsel %vm498, %v2458, %v2459
        %v2461 = vrot.slane %v2378, 1
        %v2462 = vrot.slane %v2379, 1
        %v2463 = vsel %vm498, %v2461, %v2462
        %v2464 = vrot.slane %v2380, 1
        %v2465 = vrot.slane %v2381, 1
        %v2466 = vsel %vm498, %v2464, %v2465
        %v2467 = vrot.slane %v2382, 1
        %v2468 = vrot.slane %v2383, 1
        %v2469 = vsel %vm498, %v2467, %v2468
        %v2470 = vrot.slane %v2384, 1
        %v2471 = vrot.slane %v2385, 1
        %v2472 = vsel %vm498, %v2470, %v2471
        %v2473 = vrot.slane %v2386, 1
        %v2474 = vrot.slane %v2387, 1
        %v2475 = vsel %vm498, %v2473, %v2474
        %v2492 = vsel %vm498, %v2453, 0.0
        %v2493 = vsel %vm498, %v2456, 0.0
        %v2494 = vsel %vm498, %v2459, 0.0
        %v2495 = vsel %vm498, %v2462, 0.0
        %v2496 = vsel %vm498, %v2465, 0.0
        %v2497 = vsel %vm498, %v2468, 0.0
        %v2498 = vsel %vm498, %v2471, 0.0
        %v2499 = vsel %vm498, %v2474, 0.0
        %v2500 = vld [vmem:[#allocation11] sm:$0xff]
        %v2501 = vld [vmem:[#allocation11 + $0x8] sm:$0xff]
        %v2502 = vld [vmem:[#allocation11 + $0x10] sm:$0xff]
        %v2503 = vld [vmem:[#allocation11 + $0x18] sm:$0xff]
        %v2504 = vld [vmem:[#allocation11 + $0x20] sm:$0xff]
        %v2505 = vld [vmem:[#allocation11 + $0x28] sm:$0xff]
        %v2506 = vld [vmem:[#allocation11 + $0x30] sm:$0xff]
        %v2507 = vld [vmem:[#allocation11 + $0x38] sm:$0xff]
        %v2508 = vld [vmem:[#allocation11 + $0x40] sm:$0xff]
        %v2509 = vld [vmem:[#allocation11 + $0x48] sm:$0xff]
        %v2510 = vld [vmem:[#allocation11 + $0x50] sm:$0xff]
        %v2511 = vld [vmem:[#allocation11 + $0x58] sm:$0xff]
        %v2512 = vld [vmem:[#allocation11 + $0x60] sm:$0xff]
        %v2513 = vld [vmem:[#allocation11 + $0x68] sm:$0xff]
        %v2514 = vld [vmem:[#allocation11 + $0x70] sm:$0xff]
        %v2515 = vld [vmem:[#allocation11 + $0x78] sm:$0xff]
        %v2516 = vld [vmem:[#allocation11 + $0x80] sm:$0xff]
        %v2517 = vld [vmem:[#allocation11 + $0x88] sm:$0xff]
        %v2518 = vld [vmem:[#allocation11 + $0x90] sm:$0xff]
        %v2519 = vld [vmem:[#allocation11 + $0x98] sm:$0xff]
        %v2520 = vld [vmem:[#allocation11 + $0xa0] sm:$0xff]
        %v2521 = vld [vmem:[#allocation11 + $0xa8] sm:$0xff]
        %v2522 = vld [vmem:[#allocation11 + $0xb0] sm:$0xff]
        %v2523 = vld [vmem:[#allocation11 + $0xb8] sm:$0xff]
        %v2524 = vld [vmem:[#allocation11 + $0xc0] sm:$0xff]
        %v2525 = vld [vmem:[#allocation11 + $0xc8] sm:$0xff]
        %v2526 = vld [vmem:[#allocation11 + $0xd0] sm:$0xff]
        %v2527 = vld [vmem:[#allocation11 + $0xd8] sm:$0xff]
        %v2528 = vld [vmem:[#allocation11 + $0xe0] sm:$0xff]
        %v2529 = vld [vmem:[#allocation11 + $0xe8] sm:$0xff]
        %v2530 = vld [vmem:[#allocation11 + $0xf0] sm:$0xff]
        %v2531 = vld [vmem:[#allocation11 + $0xf8] sm:$0xff]
        %v2532 = vld [vmem:[#allocation11 + $0x100] sm:$0xff]
        %v2533 = vld [vmem:[#allocation11 + $0x108] sm:$0xff]
        %v2534 = vld [vmem:[#allocation11 + $0x110] sm:$0xff]
        %v2535 = vld [vmem:[#allocation11 + $0x118] sm:$0xff]
        %v2536 = vld [vmem:[#allocation11 + $0x120] sm:$0xff]
        %v2537 = vld [vmem:[#allocation11 + $0x128] sm:$0xff]
        %v2538 = vld [vmem:[#allocation11 + $0x130] sm:$0xff]
        %v2539 = vld [vmem:[#allocation11 + $0x138] sm:$0xff]
        %v2540 = vld [vmem:[#allocation11 + $0x140] sm:$0xff]
        %v2541 = vld [vmem:[#allocation11 + $0x148] sm:$0xff]
        %v2542 = vld [vmem:[#allocation11 + $0x150] sm:$0xff]
        %v2543 = vld [vmem:[#allocation11 + $0x158] sm:$0xff]
        %v2544 = vld [vmem:[#allocation11 + $0x160] sm:$0xff]
        %v2545 = vld [vmem:[#allocation11 + $0x168] sm:$0xff]
        %v2546 = vld [vmem:[#allocation11 + $0x170] sm:$0xff]
        %v2547 = vld [vmem:[#allocation11 + $0x178] sm:$0xff]
        %2548 = vmatprep.subr.mxu0 0.0
        %2549 = vmatpush1.msra.mxu0 %v2500
        %2550 = vmatprep.subr.mxu0 0.0
        %2551 = vmatpush1.msra.mxu0 %v2501
        %2552 = vmatprep.subr.mxu0 0.0
        %2553 = vmatpush1.msra.mxu0 %v2502
        %2554 = vmatprep.subr.mxu0 0.0
        %2555 = vmatpush1.msra.mxu0 %v2503
        %2556 = vmatprep.subr.mxu0 0.0
        %2557 = vmatpush1.msra.mxu0 %v2504
        %2558 = vmatprep.subr.mxu0 0.0
        %2559 = vmatpush1.msra.mxu0 %v2505
        %2560 = vmatprep.subr.mxu0 0.0
        %2561 = vmatpush1.msra.mxu0 %v2506
        %2562 = vmatprep.subr.mxu0 0.0
        %2563 = vmatpush1.msra.mxu0 %v2507
        %2564 = vmatprep.subr.mxu0 0.0
        %2565 = vmatpush1.msra.mxu0 %v2508
        %2566 = vmatprep.subr.mxu0 0.0
        %2567 = vmatpush1.msra.mxu0 %v2509
        %2568 = vmatprep.subr.mxu0 0.0
        %2569 = vmatpush1.msra.mxu0 %v2510
        %2570 = vmatprep.subr.mxu0 0.0
        %2571 = vmatpush1.msra.mxu0 %v2511
        %2572 = vmatprep.subr.mxu0 0.0
        %2573 = vmatpush1.msra.mxu0 %v2512
        %2574 = vmatprep.subr.mxu0 0.0
        %2575 = vmatpush1.msra.mxu0 %v2513
        %2576 = vmatprep.subr.mxu0 0.0
        %2577 = vmatpush1.msra.mxu0 %v2514
        %2578 = vmatprep.subr.mxu0 0.0
        %2579 = vmatpush1.msra.mxu0 %v2515
        %2580 = vmatprep.subr.mxu0 0.0
        %2581 = vmatpush1.msra.mxu0 %v2516
        %2582 = vmatprep.subr.mxu0 0.0
        %2583 = vmatpush1.msra.mxu0 %v2517
        %2584 = vmatprep.subr.mxu0 0.0
        %2585 = vmatpush1.msra.mxu0 %v2518
        %2586 = vmatprep.subr.mxu0 0.0
        %2587 = vmatpush1.msra.mxu0 %v2519
        %2588 = vmatprep.subr.mxu0 0.0
        %2589 = vmatpush1.msra.mxu0 %v2520
        %2590 = vmatprep.subr.mxu0 0.0
        %2591 = vmatpush1.msra.mxu0 %v2521
        %2592 = vmatprep.subr.mxu0 0.0
        %2593 = vmatpush1.msra.mxu0 %v2522
        %2594 = vmatprep.subr.mxu0 0.0
        %2595 = vmatpush1.msra.mxu0 %v2523
        %2596 = vmatprep.subr.mxu0 0.0
        %2597 = vmatpush1.msra.mxu0 %v2524
        %2598 = vmatprep.subr.mxu0 0.0
        %2599 = vmatpush1.msra.mxu0 %v2525
        %2600 = vmatprep.subr.mxu0 0.0
        %2601 = vmatpush1.msra.mxu0 %v2526
        %2602 = vmatprep.subr.mxu0 0.0
        %2603 = vmatpush1.msra.mxu0 %v2527
        %2604 = vmatprep.subr.mxu0 0.0
        %2605 = vmatpush1.msra.mxu0 %v2528
        %2606 = vmatprep.subr.mxu0 0.0
        %2607 = vmatpush1.msra.mxu0 %v2529
        %2608 = vmatprep.subr.mxu0 0.0
        %2609 = vmatpush1.msra.mxu0 %v2530
        %2610 = vmatprep.subr.mxu0 0.0
        %2611 = vmatpush1.msra.mxu0 %v2531
        %2612 = vmatprep.mubr.f32.mxu0 %v2372
        %2613 = vmatmul.mubr.f32.gmra.mrb[0].mxu0 %v2444
        %v2614 = vpop.f32.mrb[0].mxu0
        %v2615 = vadd.f32 0.0, %v2614
        %v2616 = vpop.f32.mrb[0].mxu0
        %2617 = vmatprep.mubr.f32.mxu0 %v2373
        %2618 = vmatmul.mubr.f32.gmra.mrb[0].mxu0 %v2406
        %v2619 = vpop.f32.mrb[0].mxu0
        %v2620 = vadd.f32 0.0, %v2619
        %v2621 = vpop.f32.mrb[0].mxu0
        %2622 = vmatprep.mubr.f32.mxu0 %v2374
        %2623 = vmatmul.mubr.f32.gmra.mrb[0].mxu0 %v2445
        %v2624 = vpop.f32.mrb[0].mxu0
        %v2625 = vadd.f32 0.0, %v2624
        %v2626 = vpop.f32.mrb[0].mxu0
        %2627 = vmatprep.mubr.f32.mxu0 %v2375
        %2628 = vmatmul.mubr.f32.gmra.mrb[0].mxu0 %v2409
        %v2629 = vpop.f32.mrb[0].mxu0
        %v2630 = vadd.f32 0.0, %v2629
        %v2631 = vpop.f32.mrb[0].mxu0
        %2632 = vmatprep.mubr.f32.mxu0 %v2376
        %2633 = vmatmul.mubr.f32.gmra.mrb[0].mxu0 %v2446
        %v2634 = vpop.f32.mrb[0].mxu0
        %v2635 = vadd.f32 0.0, %v2634
        %v2636 = vpop.f32.mrb[0].mxu0
        %2637 = vmatprep.mubr.f32.mxu0 %v2377
        %2638 = vmatmul.mubr.f32.gmra.mrb[0].mxu0 %v2412
        %v2639 = vpop.f32.mrb[0].mxu0
        %v2640 = vadd.f32 0.0, %v2639
        %v2641 = vpop.f32.mrb[0].mxu0
        %2642 = vmatprep.mubr.f32.mxu0 %v2378
        %2643 = vmatmul.mubr.f32.gmra.mrb[0].mxu0 %v2447
        %v2644 = vpop.f32.mrb[0].mxu0
        %v2645 = vadd.f32 0.0, %v2644
        %v2646 = vpop.f32.mrb[0].mxu0
        %2647 = vmatprep.mubr.f32.mxu0 %v2379
        %2648 = vmatmul.mubr.f32.gmra.mrb[0].mxu0 %v2415
        %v2649 = vpop.f32.mrb[0].mxu0
        %v2650 = vadd.f32 0.0, %v2649
        %v2651 = vpop.f32.mrb[0].mxu0
        %2652 = vmatprep.mubr.f32.mxu0 %v2380
        %2653 = vmatmul.mubr.f32.gmra.mrb[0].mxu0 %v2448
        %v2654 = vpop.f32.mrb[0].mxu0
        %v2655 = vadd.f32 0.0, %v2654
        %v2656 = vpop.f32.mrb[0].mxu0
        %2657 = vmatprep.mubr.f32.mxu0 %v2381
        %2658 = vmatmul.mubr.f32.gmra.mrb[0].mxu0 %v2418
        %v2659 = vpop.f32.mrb[0].mxu0
        %v2660 = vadd.f32 0.0, %v2659
        %v2661 = vpop.f32.mrb[0].mxu0
        %2662 = vmatprep.mubr.f32.mxu0 %v2382
        %2663 = vmatmul.mubr.f32.gmra.mrb[0].mxu0 %v2449
        %v2664 = vpop.f32.mrb[0].mxu0
        %v2665 = vadd.f32 0.0, %v2664
        %v2666 = vpop.f32.mrb[0].mxu0
        %2667 = vmatprep.mubr.f32.mxu0 %v2383
        %2668 = vmatmul.mubr.f32.gmra.mrb[0].mxu0 %v2421
        %v2669 = vpop.f32.mrb[0].mxu0
        %v2670 = vadd.f32 0.0, %v2669
        %v2671 = vpop.f32.mrb[0].mxu0
        %2672 = vmatprep.mubr.f32.mxu0 %v2384
        %2673 = vmatmul.mubr.f32.gmra.mrb[0].mxu0 %v2450
        %v2674 = vpop.f32.mrb[0].mxu0
        %v2675 = vadd.f32 0.0, %v2674
        %v2676 = vpop.f32.mrb[0].mxu0
        %2677 = vmatprep.mubr.f32.mxu0 %v2385
        %2678 = vmatmul.mubr.f32.gmra.mrb[0].mxu0 %v2424
        %v2679 = vpop.f32.mrb[0].mxu0
        %v2680 = vadd.f32 0.0, %v2679
        %v2681 = vpop.f32.mrb[0].mxu0
        %2682 = vmatprep.mubr.f32.mxu0 %v2386
        %2683 = vmatmul.mubr.f32.gmra.mrb[0].mxu0 %v2451
        %v2684 = vpop.f32.mrb[0].mxu0
        %v2685 = vadd.f32 0.0, %v2684
        %v2686 = vpop.f32.mrb[0].mxu0
        %2687 = vmatprep.mubr.f32.mxu0 %v2387
        %2688 = vmatmul.mubr.f32.gmra.mrb[0].mxu0 %v2427
        %v2689 = vpop.f32.mrb[0].mxu0
        %v2690 = vadd.f32 0.0, %v2689
        %v2691 = vpop.f32.mrb[0].mxu0
        %2692 = vdwg.mxu0
        %2693 = vmatprep.subr.mxu0 0.0
        %2694 = vmatpush1.msra.mxu0 %v2532
        %2695 = vmatprep.subr.mxu0 0.0
        %2696 = vmatpush1.msra.mxu0 %v2533
        %2697 = vmatprep.subr.mxu0 0.0
        %2698 = vmatpush1.msra.mxu0 %v2534
        %2699 = vmatprep.subr.mxu0 0.0
        %2700 = vmatpush1.msra.mxu0 %v2535
        %2701 = vmatprep.subr.mxu0 0.0
        %2702 = vmatpush1.msra.mxu0 %v2536
        %2703 = vmatprep.subr.mxu0 0.0
        %2704 = vmatpush1.msra.mxu0 %v2537
        %2705 = vmatprep.subr.mxu0 0.0
        %2706 = vmatpush1.msra.mxu0 %v2538
        %2707 = vmatprep.subr.mxu0 0.0
        %2708 = vmatpush1.msra.mxu0 %v2539
        %2709 = vmatprep.subr.mxu0 0.0
        %2710 = vmatpush1.msra.mxu0 %v2540
        %2711 = vmatprep.subr.mxu0 0.0
        %2712 = vmatpush1.msra.mxu0 %v2541
        %2713 = vmatprep.subr.mxu0 0.0
        %2714 = vmatpush1.msra.mxu0 %v2542
        %2715 = vmatprep.subr.mxu0 0.0
        %2716 = vmatpush1.msra.mxu0 %v2543
        %2717 = vmatprep.subr.mxu0 0.0
        %2718 = vmatpush1.msra.mxu0 %v2544
        %2719 = vmatprep.subr.mxu0 0.0
        %2720 = vmatpush1.msra.mxu0 %v2545
        %2721 = vmatprep.subr.mxu0 0.0
        %2722 = vmatpush1.msra.mxu0 %v2546
        %2723 = vmatprep.subr.mxu0 0.0
        %2724 = vmatpush1.msra.mxu0 %v2547
        %2725 = vmatprep.subr.mxu0 0.0
        %2726 = vmatpush1.msra.mxu0 0.0
        %2727 = vmatprep.subr.mxu0 0.0
        %2728 = vmatpush1.msra.mxu0 0.0
        %2729 = vmatprep.subr.mxu0 0.0
        %2730 = vmatpush1.msra.mxu0 0.0
        %2731 = vmatprep.subr.mxu0 0.0
        %2732 = vmatpush1.msra.mxu0 0.0
        %2733 = vmatprep.subr.mxu0 0.0
        %2734 = vmatpush1.msra.mxu0 0.0
        %2735 = vmatprep.subr.mxu0 0.0
        %2736 = vmatpush1.msra.mxu0 0.0
        %2737 = vmatprep.subr.mxu0 0.0
        %2738 = vmatpush1.msra.mxu0 0.0
        %2739 = vmatprep.subr.mxu0 0.0
        %2740 = vmatpush1.msra.mxu0 0.0
        %2741 = vmatprep.subr.mxu0 0.0
        %2742 = vmatpush1.msra.mxu0 0.0
        %2743 = vmatprep.subr.mxu0 0.0
        %2744 = vmatpush1.msra.mxu0 0.0
        %2745 = vmatprep.subr.mxu0 0.0
        %2746 = vmatpush1.msra.mxu0 0.0
        %2747 = vmatprep.subr.mxu0 0.0
        %2748 = vmatpush1.msra.mxu0 0.0
        %2749 = vmatprep.subr.mxu0 0.0
        %2750 = vmatpush1.msra.mxu0 0.0
        %2751 = vmatprep.subr.mxu0 0.0
        %2752 = vmatpush1.msra.mxu0 0.0
        %2753 = vmatprep.subr.mxu0 0.0
        %2754 = vmatpush1.msra.mxu0 0.0
        %2755 = vmatprep.subr.mxu0 0.0
        %2756 = vmatpush1.msra.mxu0 0.0
        %2757 = vmatprep.mubr.f32.mxu0 0.0
        %2758 = vmatmul.mubr.f32.gmra.mrb[0].mxu0 %v2454
        %v2759 = vpop.f32.mrb[0].mxu0
        %v2760 = vadd.f32 %v2615, %v2759
        %v2761 = vpop.f32.mrb[0].mxu0
        %2762 = vmatprep.mubr.f32.mxu0 0.0
        %2763 = vmatmul.mubr.f32.gmra.mrb[0].mxu0 %v2492
        %v2764 = vpop.f32.mrb[0].mxu0
        %v2765 = vadd.f32 %v2620, %v2764
        %v2766 = vpop.f32.mrb[0].mxu0
        %2767 = vmatprep.mubr.f32.mxu0 0.0
        %2768 = vmatmul.mubr.f32.gmra.mrb[0].mxu0 %v2457
        %v2769 = vpop.f32.mrb[0].mxu0
        %v2770 = vadd.f32 %v2625, %v2769
        %v2771 = vpop.f32.mrb[0].mxu0
        %2772 = vmatprep.mubr.f32.mxu0 0.0
        %2773 = vmatmul.mubr.f32.gmra.mrb[0].mxu0 %v2493
        %v2774 = vpop.f32.mrb[0].mxu0
        %v2775 = vadd.f32 %v2630, %v2774
        %v2776 = vpop.f32.mrb[0].mxu0
        %2777 = vmatprep.mubr.f32.mxu0 0.0
        %2778 = vmatmul.mubr.f32.gmra.mrb[0].mxu0 %v2460
        %v2779 = vpop.f32.mrb[0].mxu0
        %v2780 = vadd.f32 %v2635, %v2779
        %v2781 = vpop.f32.mrb[0].mxu0
        %2782 = vmatprep.mubr.f32.mxu0 0.0
        %2783 = vmatmul.mubr.f32.gmra.mrb[0].mxu0 %v2494
        %v2784 = vpop.f32.mrb[0].mxu0
        %v2785 = vadd.f32 %v2640, %v2784
        %v2786 = vpop.f32.mrb[0].mxu0
        %2787 = vmatprep.mubr.f32.mxu0 0.0
        %2788 = vmatmul.mubr.f32.gmra.mrb[0].mxu0 %v2463
        %v2789 = vpop.f32.mrb[0].mxu0
        %v2790 = vadd.f32 %v2645, %v2789
        %v2791 = vpop.f32.mrb[0].mxu0
        %2792 = vmatprep.mubr.f32.mxu0 0.0
        %2793 = vmatmul.mubr.f32.gmra.mrb[0].mxu0 %v2495
        %v2794 = vpop.f32.mrb[0].mxu0
        %v2795 = vadd.f32 %v2650, %v2794
        %v2796 = vpop.f32.mrb[0].mxu0
        %2797 = vmatprep.mubr.f32.mxu0 0.0
        %2798 = vmatmul.mubr.f32.gmra.mrb[0].mxu0 %v2466
        %v2799 = vpop.f32.mrb[0].mxu0
        %v2800 = vadd.f32 %v2655, %v2799
        %v2801 = vpop.f32.mrb[0].mxu0
        %2802 = vmatprep.mubr.f32.mxu0 0.0
        %2803 = vmatmul.mubr.f32.gmra.mrb[0].mxu0 %v2496
        %v2804 = vpop.f32.mrb[0].mxu0
        %v2805 = vadd.f32 %v2660, %v2804
        %v2806 = vpop.f32.mrb[0].mxu0
        %2807 = vmatprep.mubr.f32.mxu0 0.0
        %2808 = vmatmul.mubr.f32.gmra.mrb[0].mxu0 %v2469
        %v2809 = vpop.f32.mrb[0].mxu0
        %v2810 = vadd.f32 %v2665, %v2809
        %v2811 = vpop.f32.mrb[0].mxu0
        %2812 = vmatprep.mubr.f32.mxu0 0.0
        %2813 = vmatmul.mubr.f32.gmra.mrb[0].mxu0 %v2497
        %v2814 = vpop.f32.mrb[0].mxu0
        %v2815 = vadd.f32 %v2670, %v2814
        %v2816 = vpop.f32.mrb[0].mxu0
        %2817 = vmatprep.mubr.f32.mxu0 0.0
        %2818 = vmatmul.mubr.f32.gmra.mrb[0].mxu0 %v2472
        %v2819 = vpop.f32.mrb[0].mxu0
        %v2820 = vadd.f32 %v2675, %v2819
        %v2821 = vpop.f32.mrb[0].mxu0
        %2822 = vmatprep.mubr.f32.mxu0 0.0
        %2823 = vmatmul.mubr.f32.gmra.mrb[0].mxu0 %v2498
        %v2824 = vpop.f32.mrb[0].mxu0
        %v2825 = vadd.f32 %v2680, %v2824
        %v2826 = vpop.f32.mrb[0].mxu0
        %2827 = vmatprep.mubr.f32.mxu0 0.0
        %2828 = vmatmul.mubr.f32.gmra.mrb[0].mxu0 %v2475
        %v2829 = vpop.f32.mrb[0].mxu0
        %v2830 = vadd.f32 %v2685, %v2829
        %v2831 = vpop.f32.mrb[0].mxu0
        %2832 = vmatprep.mubr.f32.mxu0 0.0
        %2833 = vmatmul.mubr.f32.gmra.mrb[0].mxu0 %v2499
        %v2834 = vpop.f32.mrb[0].mxu0
        %v2835 = vadd.f32 %v2690, %v2834
        %v2836 = vpop.f32.mrb[0].mxu0
        %2837 = vdwg.mxu0
        %2838 = vst [vmem:[#allocation4] sm:$0xff] %v2760
        %2839 = vst [vmem:[#allocation4 + $0x8] sm:$0xff] %v2765
        %2840 = vst [vmem:[#allocation4 + $0x10] sm:$0xff] %v2770
        %2841 = vst [vmem:[#allocation4 + $0x18] sm:$0xff] %v2775
        %2842 = vst [vmem:[#allocation4 + $0x20] sm:$0xff] %v2780
        %2843 = vst [vmem:[#allocation4 + $0x28] sm:$0xff] %v2785
        %2844 = vst [vmem:[#allocation4 + $0x30] sm:$0xff] %v2790
        %2845 = vst [vmem:[#allocation4 + $0x38] sm:$0xff] %v2795
        %2846 = vst [vmem:[#allocation4 + $0x40] sm:$0xff] %v2800
        %2847 = vst [vmem:[#allocation4 + $0x48] sm:$0xff] %v2805
        %2848 = vst [vmem:[#allocation4 + $0x50] sm:$0xff] %v2810
        %2849 = vst [vmem:[#allocation4 + $0x58] sm:$0xff] %v2815
        %2850 = vst [vmem:[#allocation4 + $0x60] sm:$0xff] %v2820
        %2851 = vst [vmem:[#allocation4 + $0x68] sm:$0xff] %v2825
        %2852 = vst [vmem:[#allocation4 + $0x70] sm:$0xff] %v2830
        %2853 = vst [vmem:[#allocation4 + $0x78] sm:$0xff] %v2835
        %s2854 = scalar_lea.vmem [#allocation3], 16
        %v2855 = vld [vmem:[%s2854] sm:$0xff]
        %v2856 = vld [vmem:[%s2854 + $0x8] sm:$0xff]
        %v2857 = vld [vmem:[%s2854 + $0x10] sm:$0xff]
        %v2858 = vld [vmem:[%s2854 + $0x18] sm:$0xff]
        %v2859 = vld [vmem:[%s2854 + $0x20] sm:$0xff]
        %v2860 = vld [vmem:[%s2854 + $0x28] sm:$0xff]
        %v2861 = vld [vmem:[%s2854 + $0x30] sm:$0xff]
        %v2862 = vld [vmem:[%s2854 + $0x38] sm:$0xff]
        %v2863 = vld [vmem:[%s2854 + $0x40] sm:$0xff]
        %v2864 = vld [vmem:[%s2854 + $0x48] sm:$0xff]
        %v2865 = vld [vmem:[%s2854 + $0x50] sm:$0xff]
        %v2866 = vld [vmem:[%s2854 + $0x58] sm:$0xff]
        %v2867 = vld [vmem:[%s2854 + $0x60] sm:$0xff]
        %v2868 = vld [vmem:[%s2854 + $0x68] sm:$0xff]
        %v2869 = vld [vmem:[%s2854 + $0x70] sm:$0xff]
        %v2870 = vld [vmem:[%s2854 + $0x78] sm:$0xff]
        %v2887 = vrot.slane %v2855, 7
        %v2888 = vrot.slane %v2856, 7
        %v2889 = vsel %vm437, %v2887, %v2888
        %v2890 = vrot.slane %v2857, 7
        %v2891 = vrot.slane %v2858, 7
        %v2892 = vsel %vm437, %v2890, %v2891
        %v2893 = vrot.slane %v2859, 7
        %v2894 = vrot.slane %v2860, 7
        %v2895 = vsel %vm437, %v2893, %v2894
        %v2896 = vrot.slane %v2861, 7
        %v2897 = vrot.slane %v2862, 7
        %v2898 = vsel %vm437, %v2896, %v2897
        %v2899 = vrot.slane %v2863, 7
        %v2900 = vrot.slane %v2864, 7
        %v2901 = vsel %vm437, %v2899, %v2900
        %v2902 = vrot.slane %v2865, 7
        %v2903 = vrot.slane %v2866, 7
        %v2904 = vsel %vm437, %v2902, %v2903
        %v2905 = vrot.slane %v2867, 7
        %v2906 = vrot.slane %v2868, 7
        %v2907 = vsel %vm437, %v2905, %v2906
        %v2908 = vrot.slane %v2869, 7
        %v2909 = vrot.slane %v2870, 7
        %v2910 = vsel %vm437, %v2908, %v2909
        %v2927 = vsel %vm437, 0.0, %v2887
        %v2928 = vsel %vm437, 0.0, %v2890
        %v2929 = vsel %vm437, 0.0, %v2893
        %v2930 = vsel %vm437, 0.0, %v2896
        %v2931 = vsel %vm437, 0.0, %v2899
        %v2932 = vsel %vm437, 0.0, %v2902
        %v2933 = vsel %vm437, 0.0, %v2905
        %v2934 = vsel %vm437, 0.0, %v2908
        %v2935 = vrot.slane %v2855, 1
        %v2936 = vrot.slane %v2856, 1
        %v2937 = vsel %vm498, %v2935, %v2936
        %v2938 = vrot.slane %v2857, 1
        %v2939 = vrot.slane %v2858, 1
        %v2940 = vsel %vm498, %v2938, %v2939
        %v2941 = vrot.slane %v2859, 1
        %v2942 = vrot.slane %v2860, 1
        %v2943 = vsel %vm498, %v2941, %v2942
        %v2944 = vrot.slane %v2861, 1
        %v2945 = vrot.slane %v2862, 1
        %v2946 = vsel %vm498, %v2944, %v2945
        %v2947 = vrot.slane %v2863, 1
        %v2948 = vrot.slane %v2864, 1
        %v2949 = vsel %vm498, %v2947, %v2948
        %v2950 = vrot.slane %v2865, 1
        %v2951 = vrot.slane %v2866, 1
        %v2952 = vsel %vm498, %v2950, %v2951
        %v2953 = vrot.slane %v2867, 1
        %v2954 = vrot.slane %v2868, 1
        %v2955 = vsel %vm498, %v2953, %v2954
        %v2956 = vrot.slane %v2869, 1
        %v2957 = vrot.slane %v2870, 1
        %v2958 = vsel %vm498, %v2956, %v2957
        %v2975 = vsel %vm498, %v2936, 0.0
        %v2976 = vsel %vm498, %v2939, 0.0
        %v2977 = vsel %vm498, %v2942, 0.0
        %v2978 = vsel %vm498, %v2945, 0.0
        %v2979 = vsel %vm498, %v2948, 0.0
        %v2980 = vsel %vm498, %v2951, 0.0
        %v2981 = vsel %vm498, %v2954, 0.0
        %v2982 = vsel %vm498, %v2957, 0.0
        %v2983 = vld [vmem:[#allocation11 + $0x180] sm:$0xff]
        %v2984 = vld [vmem:[#allocation11 + $0x188] sm:$0xff]
        %v2985 = vld [vmem:[#allocation11 + $0x190] sm:$0xff]
        %v2986 = vld [vmem:[#allocation11 + $0x198] sm:$0xff]
        %v2987 = vld [vmem:[#allocation11 + $0x1a0] sm:$0xff]
        %v2988 = vld [vmem:[#allocation11 + $0x1a8] sm:$0xff]
        %v2989 = vld [vmem:[#allocation11 + $0x1b0] sm:$0xff]
        %v2990 = vld [vmem:[#allocation11 + $0x1b8] sm:$0xff]
        %v2991 = vld [vmem:[#allocation11 + $0x1c0] sm:$0xff]
        %v2992 = vld [vmem:[#allocation11 + $0x1c8] sm:$0xff]
        %v2993 = vld [vmem:[#allocation11 + $0x1d0] sm:$0xff]
        %v2994 = vld [vmem:[#allocation11 + $0x1d8] sm:$0xff]
        %v2995 = vld [vmem:[#allocation11 + $0x1e0] sm:$0xff]
        %v2996 = vld [vmem:[#allocation11 + $0x1e8] sm:$0xff]
        %v2997 = vld [vmem:[#allocation11 + $0x1f0] sm:$0xff]
        %v2998 = vld [vmem:[#allocation11 + $0x1f8] sm:$0xff]
        %v2999 = vld [vmem:[#allocation11 + $0x200] sm:$0xff]
        %v3000 = vld [vmem:[#allocation11 + $0x208] sm:$0xff]
        %v3001 = vld [vmem:[#allocation11 + $0x210] sm:$0xff]
        %v3002 = vld [vmem:[#allocation11 + $0x218] sm:$0xff]
        %v3003 = vld [vmem:[#allocation11 + $0x220] sm:$0xff]
        %v3004 = vld [vmem:[#allocation11 + $0x228] sm:$0xff]
        %v3005 = vld [vmem:[#allocation11 + $0x230] sm:$0xff]
        %v3006 = vld [vmem:[#allocation11 + $0x238] sm:$0xff]
        %v3007 = vld [vmem:[#allocation11 + $0x240] sm:$0xff]
        %v3008 = vld [vmem:[#allocation11 + $0x248] sm:$0xff]
        %v3009 = vld [vmem:[#allocation11 + $0x250] sm:$0xff]
        %v3010 = vld [vmem:[#allocation11 + $0x258] sm:$0xff]
        %v3011 = vld [vmem:[#allocation11 + $0x260] sm:$0xff]
        %v3012 = vld [vmem:[#allocation11 + $0x268] sm:$0xff]
        %v3013 = vld [vmem:[#allocation11 + $0x270] sm:$0xff]
        %v3014 = vld [vmem:[#allocation11 + $0x278] sm:$0xff]
        %v3015 = vld [vmem:[#allocation11 + $0x280] sm:$0xff]
        %v3016 = vld [vmem:[#allocation11 + $0x288] sm:$0xff]
        %v3017 = vld [vmem:[#allocation11 + $0x290] sm:$0xff]
        %v3018 = vld [vmem:[#allocation11 + $0x298] sm:$0xff]
        %v3019 = vld [vmem:[#allocation11 + $0x2a0] sm:$0xff]
        %v3020 = vld [vmem:[#allocation11 + $0x2a8] sm:$0xff]
        %v3021 = vld [vmem:[#allocation11 + $0x2b0] sm:$0xff]
        %v3022 = vld [vmem:[#allocation11 + $0x2b8] sm:$0xff]
        %v3023 = vld [vmem:[#allocation11 + $0x2c0] sm:$0xff]
        %v3024 = vld [vmem:[#allocation11 + $0x2c8] sm:$0xff]
        %v3025 = vld [vmem:[#allocation11 + $0x2d0] sm:$0xff]
        %v3026 = vld [vmem:[#allocation11 + $0x2d8] sm:$0xff]
        %v3027 = vld [vmem:[#allocation11 + $0x2e0] sm:$0xff]
        %v3028 = vld [vmem:[#allocation11 + $0x2e8] sm:$0xff]
        %v3029 = vld [vmem:[#allocation11 + $0x2f0] sm:$0xff]
        %v3030 = vld [vmem:[#allocation11 + $0x2f8] sm:$0xff]
        %3031 = vmatprep.subr.mxu0 0.0
        %3032 = vmatpush1.msra.mxu0 %v2983
        %3033 = vmatprep.subr.mxu0 0.0
        %3034 = vmatpush1.msra.mxu0 %v2984
        %3035 = vmatprep.subr.mxu0 0.0
        %3036 = vmatpush1.msra.mxu0 %v2985
        %3037 = vmatprep.subr.mxu0 0.0
        %3038 = vmatpush1.msra.mxu0 %v2986
        %3039 = vmatprep.subr.mxu0 0.0
        %3040 = vmatpush1.msra.mxu0 %v2987
        %3041 = vmatprep.subr.mxu0 0.0
        %3042 = vmatpush1.msra.mxu0 %v2988
        %3043 = vmatprep.subr.mxu0 0.0
        %3044 = vmatpush1.msra.mxu0 %v2989
        %3045 = vmatprep.subr.mxu0 0.0
        %3046 = vmatpush1.msra.mxu0 %v2990
        %3047 = vmatprep.subr.mxu0 0.0
        %3048 = vmatpush1.msra.mxu0 %v2991
        %3049 = vmatprep.subr.mxu0 0.0
        %3050 = vmatpush1.msra.mxu0 %v2992
        %3051 = vmatprep.subr.mxu0 0.0
        %3052 = vmatpush1.msra.mxu0 %v2993
        %3053 = vmatprep.subr.mxu0 0.0
        %3054 = vmatpush1.msra.mxu0 %v2994
        %3055 = vmatprep.subr.mxu0 0.0
        %3056 = vmatpush1.msra.mxu0 %v2995
        %3057 = vmatprep.subr.mxu0 0.0
        %3058 = vmatpush1.msra.mxu0 %v2996
        %3059 = vmatprep.subr.mxu0 0.0
        %3060 = vmatpush1.msra.mxu0 %v2997
        %3061 = vmatprep.subr.mxu0 0.0
        %3062 = vmatpush1.msra.mxu0 %v2998
        %3063 = vmatprep.subr.mxu0 0.0
        %3064 = vmatpush1.msra.mxu0 %v2999
        %3065 = vmatprep.subr.mxu0 0.0
        %3066 = vmatpush1.msra.mxu0 %v3000
        %3067 = vmatprep.subr.mxu0 0.0
        %3068 = vmatpush1.msra.mxu0 %v3001
        %3069 = vmatprep.subr.mxu0 0.0
        %3070 = vmatpush1.msra.mxu0 %v3002
        %3071 = vmatprep.subr.mxu0 0.0
        %3072 = vmatpush1.msra.mxu0 %v3003
        %3073 = vmatprep.subr.mxu0 0.0
        %3074 = vmatpush1.msra.mxu0 %v3004
        %3075 = vmatprep.subr.mxu0 0.0
        %3076 = vmatpush1.msra.mxu0 %v3005
        %3077 = vmatprep.subr.mxu0 0.0
        %3078 = vmatpush1.msra.mxu0 %v3006
        %3079 = vmatprep.subr.mxu0 0.0
        %3080 = vmatpush1.msra.mxu0 %v3007
        %3081 = vmatprep.subr.mxu0 0.0
        %3082 = vmatpush1.msra.mxu0 %v3008
        %3083 = vmatprep.subr.mxu0 0.0
        %3084 = vmatpush1.msra.mxu0 %v3009
        %3085 = vmatprep.subr.mxu0 0.0
        %3086 = vmatpush1.msra.mxu0 %v3010
        %3087 = vmatprep.subr.mxu0 0.0
        %3088 = vmatpush1.msra.mxu0 %v3011
        %3089 = vmatprep.subr.mxu0 0.0
        %3090 = vmatpush1.msra.mxu0 %v3012
        %3091 = vmatprep.subr.mxu0 0.0
        %3092 = vmatpush1.msra.mxu0 %v3013
        %3093 = vmatprep.subr.mxu0 0.0
        %3094 = vmatpush1.msra.mxu0 %v3014
        %3095 = vmatprep.mubr.f32.mxu0 %v2855
        %3096 = vmatmul.mubr.f32.gmra.mrb[0].mxu0 %v2927
        %v3097 = vpop.f32.mrb[0].mxu0
        %v3098 = vadd.f32 0.0, %v3097
        %v3099 = vpop.f32.mrb[0].mxu0
        %3100 = vmatprep.mubr.f32.mxu0 %v2856
        %3101 = vmatmul.mubr.f32.gmra.mrb[0].mxu0 %v2889
        %v3102 = vpop.f32.mrb[0].mxu0
        %v3103 = vadd.f32 0.0, %v3102
        %v3104 = vpop.f32.mrb[0].mxu0
        %3105 = vmatprep.mubr.f32.mxu0 %v2857
        %3106 = vmatmul.mubr.f32.gmra.mrb[0].mxu0 %v2928
        %v3107 = vpop.f32.mrb[0].mxu0
        %v3108 = vadd.f32 0.0, %v3107
        %v3109 = vpop.f32.mrb[0].mxu0
        %3110 = vmatprep.mubr.f32.mxu0 %v2858
        %3111 = vmatmul.mubr.f32.gmra.mrb[0].mxu0 %v2892
        %v3112 = vpop.f32.mrb[0].mxu0
        %v3113 = vadd.f32 0.0, %v3112
        %v3114 = vpop.f32.mrb[0].mxu0
        %3115 = vmatprep.mubr.f32.mxu0 %v2859
        %3116 = vmatmul.mubr.f32.gmra.mrb[0].mxu0 %v2929
        %v3117 = vpop.f32.mrb[0].mxu0
        %v3118 = vadd.f32 0.0, %v3117
        %v3119 = vpop.f32.mrb[0].mxu0
        %3120 = vmatprep.mubr.f32.mxu0 %v2860
        %3121 = vmatmul.mubr.f32.gmra.mrb[0].mxu0 %v2895
        %v3122 = vpop.f32.mrb[0].mxu0
        %v3123 = vadd.f32 0.0, %v3122
        %v3124 = vpop.f32.mrb[0].mxu0
        %3125 = vmatprep.mubr.f32.mxu0 %v2861
        %3126 = vmatmul.mubr.f32.gmra.mrb[0].mxu0 %v2930
        %v3127 = vpop.f32.mrb[0].mxu0
        %v3128 = vadd.f32 0.0, %v3127
        %v3129 = vpop.f32.mrb[0].mxu0
        %3130 = vmatprep.mubr.f32.mxu0 %v2862
        %3131 = vmatmul.mubr.f32.gmra.mrb[0].mxu0 %v2898
        %v3132 = vpop.f32.mrb[0].mxu0
        %v3133 = vadd.f32 0.0, %v3132
        %v3134 = vpop.f32.mrb[0].mxu0
        %3135 = vmatprep.mubr.f32.mxu0 %v2863
        %3136 = vmatmul.mubr.f32.gmra.mrb[0].mxu0 %v2931
        %v3137 = vpop.f32.mrb[0].mxu0
        %v3138 = vadd.f32 0.0, %v3137
        %v3139 = vpop.f32.mrb[0].mxu0
        %3140 = vmatprep.mubr.f32.mxu0 %v2864
        %3141 = vmatmul.mubr.f32.gmra.mrb[0].mxu0 %v2901
        %v3142 = vpop.f32.mrb[0].mxu0
        %v3143 = vadd.f32 0.0, %v3142
        %v3144 = vpop.f32.mrb[0].mxu0
        %3145 = vmatprep.mubr.f32.mxu0 %v2865
        %3146 = vmatmul.mubr.f32.gmra.mrb[0].mxu0 %v2932
        %v3147 = vpop.f32.mrb[0].mxu0
        %v3148 = vadd.f32 0.0, %v3147
        %v3149 = vpop.f32.mrb[0].mxu0
        %3150 = vmatprep.mubr.f32.mxu0 %v2866
        %3151 = vmatmul.mubr.f32.gmra.mrb[0].mxu0 %v2904
        %v3152 = vpop.f32.mrb[0].mxu0
        %v3153 = vadd.f32 0.0, %v3152
        %v3154 = vpop.f32.mrb[0].mxu0
        %3155 = vmatprep.mubr.f32.mxu0 %v2867
        %3156 = vmatmul.mubr.f32.gmra.mrb[0].mxu0 %v2933
        %v3157 = vpop.f32.mrb[0].mxu0
        %v3158 = vadd.f32 0.0, %v3157
        %v3159 = vpop.f32.mrb[0].mxu0
        %3160 = vmatprep.mubr.f32.mxu0 %v2868
        %3161 = vmatmul.mubr.f32.gmra.mrb[0].mxu0 %v2907
        %v3162 = vpop.f32.mrb[0].mxu0
        %v3163 = vadd.f32 0.0, %v3162
        %v3164 = vpop.f32.mrb[0].mxu0
        %3165 = vmatprep.mubr.f32.mxu0 %v2869
        %3166 = vmatmul.mubr.f32.gmra.mrb[0].mxu0 %v2934
        %v3167 = vpop.f32.mrb[0].mxu0
        %v3168 = vadd.f32 0.0, %v3167
        %v3169 = vpop.f32.mrb[0].mxu0
        %3170 = vmatprep.mubr.f32.mxu0 %v2870
        %3171 = vmatmul.mubr.f32.gmra.mrb[0].mxu0 %v2910
        %v3172 = vpop.f32.mrb[0].mxu0
        %v3173 = vadd.f32 0.0, %v3172
        %v3174 = vpop.f32.mrb[0].mxu0
        %3175 = vdwg.mxu0
        %3176 = vmatprep.subr.mxu0 0.0
        %3177 = vmatpush1.msra.mxu0 %v3015
        %3178 = vmatprep.subr.mxu0 0.0
        %3179 = vmatpush1.msra.mxu0 %v3016
        %3180 = vmatprep.subr.mxu0 0.0
        %3181 = vmatpush1.msra.mxu0 %v3017
        %3182 = vmatprep.subr.mxu0 0.0
        %3183 = vmatpush1.msra.mxu0 %v3018
        %3184 = vmatprep.subr.mxu0 0.0
        %3185 = vmatpush1.msra.mxu0 %v3019
        %3186 = vmatprep.subr.mxu0 0.0
        %3187 = vmatpush1.msra.mxu0 %v3020
        %3188 = vmatprep.subr.mxu0 0.0
        %3189 = vmatpush1.msra.mxu0 %v3021
        %3190 = vmatprep.subr.mxu0 0.0
        %3191 = vmatpush1.msra.mxu0 %v3022
        %3192 = vmatprep.subr.mxu0 0.0
        %3193 = vmatpush1.msra.mxu0 %v3023
        %3194 = vmatprep.subr.mxu0 0.0
        %3195 = vmatpush1.msra.mxu0 %v3024
        %3196 = vmatprep.subr.mxu0 0.0
        %3197 = vmatpush1.msra.mxu0 %v3025
        %3198 = vmatprep.subr.mxu0 0.0
        %3199 = vmatpush1.msra.mxu0 %v3026
        %3200 = vmatprep.subr.mxu0 0.0
        %3201 = vmatpush1.msra.mxu0 %v3027
        %3202 = vmatprep.subr.mxu0 0.0
        %3203 = vmatpush1.msra.mxu0 %v3028
        %3204 = vmatprep.subr.mxu0 0.0
        %3205 = vmatpush1.msra.mxu0 %v3029
        %3206 = vmatprep.subr.mxu0 0.0
        %3207 = vmatpush1.msra.mxu0 %v3030
        %3208 = vmatprep.subr.mxu0 0.0
        %3209 = vmatpush1.msra.mxu0 0.0
        %3210 = vmatprep.subr.mxu0 0.0
        %3211 = vmatpush1.msra.mxu0 0.0
        %3212 = vmatprep.subr.mxu0 0.0
        %3213 = vmatpush1.msra.mxu0 0.0
        %3214 = vmatprep.subr.mxu0 0.0
        %3215 = vmatpush1.msra.mxu0 0.0
        %3216 = vmatprep.subr.mxu0 0.0
        %3217 = vmatpush1.msra.mxu0 0.0
        %3218 = vmatprep.subr.mxu0 0.0
        %3219 = vmatpush1.msra.mxu0 0.0
        %3220 = vmatprep.subr.mxu0 0.0
        %3221 = vmatpush1.msra.mxu0 0.0
        %3222 = vmatprep.subr.mxu0 0.0
        %3223 = vmatpush1.msra.mxu0 0.0
        %3224 = vmatprep.subr.mxu0 0.0
        %3225 = vmatpush1.msra.mxu0 0.0
        %3226 = vmatprep.subr.mxu0 0.0
        %3227 = vmatpush1.msra.mxu0 0.0
        %3228 = vmatprep.subr.mxu0 0.0
        %3229 = vmatpush1.msra.mxu0 0.0
        %3230 = vmatprep.subr.mxu0 0.0
        %3231 = vmatpush1.msra.mxu0 0.0
        %3232 = vmatprep.subr.mxu0 0.0
        %3233 = vmatpush1.msra.mxu0 0.0
        %3234 = vmatprep.subr.mxu0 0.0
        %3235 = vmatpush1.msra.mxu0 0.0
        %3236 = vmatprep.subr.mxu0 0.0
        %3237 = vmatpush1.msra.mxu0 0.0
        %3238 = vmatprep.subr.mxu0 0.0
        %3239 = vmatpush1.msra.mxu0 0.0
        %3240 = vmatprep.mubr.f32.mxu0 0.0
        %3241 = vmatmul.mubr.f32.gmra.mrb[0].mxu0 %v2937
        %v3242 = vpop.f32.mrb[0].mxu0
        %v3243 = vadd.f32 %v3098, %v3242
        %v3244 = vpop.f32.mrb[0].mxu0
        %3245 = vmatprep.mubr.f32.mxu0 0.0
        %3246 = vmatmul.mubr.f32.gmra.mrb[0].mxu0 %v2975
        %v3247 = vpop.f32.mrb[0].mxu0
        %v3248 = vadd.f32 %v3103, %v3247
        %v3249 = vpop.f32.mrb[0].mxu0
        %3250 = vmatprep.mubr.f32.mxu0 0.0
        %3251 = vmatmul.mubr.f32.gmra.mrb[0].mxu0 %v2940
        %v3252 = vpop.f32.mrb[0].mxu0
        %v3253 = vadd.f32 %v3108, %v3252
        %v3254 = vpop.f32.mrb[0].mxu0
        %3255 = vmatprep.mubr.f32.mxu0 0.0
        %3256 = vmatmul.mubr.f32.gmra.mrb[0].mxu0 %v2976
        %v3257 = vpop.f32.mrb[0].mxu0
        %v3258 = vadd.f32 %v3113, %v3257
        %v3259 = vpop.f32.mrb[0].mxu0
        %3260 = vmatprep.mubr.f32.mxu0 0.0
        %3261 = vmatmul.mubr.f32.gmra.mrb[0].mxu0 %v2943
        %v3262 = vpop.f32.mrb[0].mxu0
        %v3263 = vadd.f32 %v3118, %v3262
        %v3264 = vpop.f32.mrb[0].mxu0
        %3265 = vmatprep.mubr.f32.mxu0 0.0
        %3266 = vmatmul.mubr.f32.gmra.mrb[0].mxu0 %v2977
        %v3267 = vpop.f32.mrb[0].mxu0
        %v3268 = vadd.f32 %v3123, %v3267
        %v3269 = vpop.f32.mrb[0].mxu0
        %3270 = vmatprep.mubr.f32.mxu0 0.0
        %3271 = vmatmul.mubr.f32.gmra.mrb[0].mxu0 %v2946
        %v3272 = vpop.f32.mrb[0].mxu0
        %v3273 = vadd.f32 %v3128, %v3272
        %v3274 = vpop.f32.mrb[0].mxu0
        %3275 = vmatprep.mubr.f32.mxu0 0.0
        %3276 = vmatmul.mubr.f32.gmra.mrb[0].mxu0 %v2978
        %v3277 = vpop.f32.mrb[0].mxu0
        %v3278 = vadd.f32 %v3133, %v3277
        %v3279 = vpop.f32.mrb[0].mxu0
        %3280 = vmatprep.mubr.f32.mxu0 0.0
        %3281 = vmatmul.mubr.f32.gmra.mrb[0].mxu0 %v2949
        %v3282 = vpop.f32.mrb[0].mxu0
        %v3283 = vadd.f32 %v3138, %v3282
        %v3284 = vpop.f32.mrb[0].mxu0
        %3285 = vmatprep.mubr.f32.mxu0 0.0
        %3286 = vmatmul.mubr.f32.gmra.mrb[0].mxu0 %v2979
        %v3287 = vpop.f32.mrb[0].mxu0
        %v3288 = vadd.f32 %v3143, %v3287
        %v3289 = vpop.f32.mrb[0].mxu0
        %3290 = vmatprep.mubr.f32.mxu0 0.0
        %3291 = vmatmul.mubr.f32.gmra.mrb[0].mxu0 %v2952
        %v3292 = vpop.f32.mrb[0].mxu0
        %v3293 = vadd.f32 %v3148, %v3292
        %v3294 = vpop.f32.mrb[0].mxu0
        %3295 = vmatprep.mubr.f32.mxu0 0.0
        %3296 = vmatmul.mubr.f32.gmra.mrb[0].mxu0 %v2980
        %v3297 = vpop.f32.mrb[0].mxu0
        %v3298 = vadd.f32 %v3153, %v3297
        %v3299 = vpop.f32.mrb[0].mxu0
        %3300 = vmatprep.mubr.f32.mxu0 0.0
        %3301 = vmatmul.mubr.f32.gmra.mrb[0].mxu0 %v2955
        %v3302 = vpop.f32.mrb[0].mxu0
        %v3303 = vadd.f32 %v3158, %v3302
        %v3304 = vpop.f32.mrb[0].mxu0
        %3305 = vmatprep.mubr.f32.mxu0 0.0
        %3306 = vmatmul.mubr.f32.gmra.mrb[0].mxu0 %v2981
        %v3307 = vpop.f32.mrb[0].mxu0
        %v3308 = vadd.f32 %v3163, %v3307
        %v3309 = vpop.f32.mrb[0].mxu0
        %3310 = vmatprep.mubr.f32.mxu0 0.0
        %3311 = vmatmul.mubr.f32.gmra.mrb[0].mxu0 %v2958
        %v3312 = vpop.f32.mrb[0].mxu0
        %v3313 = vadd.f32 %v3168, %v3312
        %v3314 = vpop.f32.mrb[0].mxu0
        %3315 = vmatprep.mubr.f32.mxu0 0.0
        %3316 = vmatmul.mubr.f32.gmra.mrb[0].mxu0 %v2982
        %v3317 = vpop.f32.mrb[0].mxu0
        %v3318 = vadd.f32 %v3173, %v3317
        %v3319 = vpop.f32.mrb[0].mxu0
        %3320 = vdwg.mxu0
        %v3321 = vld [vmem:[#allocation4] sm:$0xff]
        %v3322 = vld [vmem:[#allocation4 + $0x8] sm:$0xff]
        %v3323 = vld [vmem:[#allocation4 + $0x10] sm:$0xff]
        %v3324 = vld [vmem:[#allocation4 + $0x18] sm:$0xff]
        %v3325 = vld [vmem:[#allocation4 + $0x20] sm:$0xff]
        %v3326 = vld [vmem:[#allocation4 + $0x28] sm:$0xff]
        %v3327 = vld [vmem:[#allocation4 + $0x30] sm:$0xff]
        %v3328 = vld [vmem:[#allocation4 + $0x38] sm:$0xff]
        %v3329 = vld [vmem:[#allocation4 + $0x40] sm:$0xff]
        %v3330 = vld [vmem:[#allocation4 + $0x48] sm:$0xff]
        %v3331 = vld [vmem:[#allocation4 + $0x50] sm:$0xff]
        %v3332 = vld [vmem:[#allocation4 + $0x58] sm:$0xff]
        %v3333 = vld [vmem:[#allocation4 + $0x60] sm:$0xff]
        %v3334 = vld [vmem:[#allocation4 + $0x68] sm:$0xff]
        %v3335 = vld [vmem:[#allocation4 + $0x70] sm:$0xff]
        %v3336 = vld [vmem:[#allocation4 + $0x78] sm:$0xff]
        %v3337 = vadd.f32 %v3321, %v3243
        %v3338 = vadd.f32 %v3322, %v3248
        %v3339 = vadd.f32 %v3323, %v3253
        %v3340 = vadd.f32 %v3324, %v3258
        %v3341 = vadd.f32 %v3325, %v3263
        %v3342 = vadd.f32 %v3326, %v3268
        %v3343 = vadd.f32 %v3327, %v3273
        %v3344 = vadd.f32 %v3328, %v3278
        %v3345 = vadd.f32 %v3329, %v3283
        %v3346 = vadd.f32 %v3330, %v3288
        %v3347 = vadd.f32 %v3331, %v3293
        %v3348 = vadd.f32 %v3332, %v3298
        %v3349 = vadd.f32 %v3333, %v3303
        %v3350 = vadd.f32 %v3334, %v3308
        %v3351 = vadd.f32 %v3335, %v3313
        %v3352 = vadd.f32 %v3336, %v3318
        %3353 = vst [vmem:[#allocation4] sm:$0xff] %v3337
        %3354 = vst [vmem:[#allocation4 + $0x8] sm:$0xff] %v3338
        %3355 = vst [vmem:[#allocation4 + $0x10] sm:$0xff] %v3339
        %3356 = vst [vmem:[#allocation4 + $0x18] sm:$0xff] %v3340
        %3357 = vst [vmem:[#allocation4 + $0x20] sm:$0xff] %v3341
        %3358 = vst [vmem:[#allocation4 + $0x28] sm:$0xff] %v3342
        %3359 = vst [vmem:[#allocation4 + $0x30] sm:$0xff] %v3343
        %3360 = vst [vmem:[#allocation4 + $0x38] sm:$0xff] %v3344
        %3361 = vst [vmem:[#allocation4 + $0x40] sm:$0xff] %v3345
        %3362 = vst [vmem:[#allocation4 + $0x48] sm:$0xff] %v3346
        %3363 = vst [vmem:[#allocation4 + $0x50] sm:$0xff] %v3347
        %3364 = vst [vmem:[#allocation4 + $0x58] sm:$0xff] %v3348
        %3365 = vst [vmem:[#allocation4 + $0x60] sm:$0xff] %v3349
        %3366 = vst [vmem:[#allocation4 + $0x68] sm:$0xff] %v3350
        %3367 = vst [vmem:[#allocation4 + $0x70] sm:$0xff] %v3351
        %3368 = vst [vmem:[#allocation4 + $0x78] sm:$0xff] %v3352
        %s3369 = scalar_lea.vmem [#allocation3], 32
        %v3370 = vld [vmem:[%s3369] sm:$0xff]
        %v3371 = vld [vmem:[%s3369 + $0x8] sm:$0xff]
        %v3372 = vld [vmem:[%s3369 + $0x10] sm:$0xff]
        %v3373 = vld [vmem:[%s3369 + $0x18] sm:$0xff]
        %v3374 = vld [vmem:[%s3369 + $0x20] sm:$0xff]
        %v3375 = vld [vmem:[%s3369 + $0x28] sm:$0xff]
        %v3376 = vld [vmem:[%s3369 + $0x30] sm:$0xff]
        %v3377 = vld [vmem:[%s3369 + $0x38] sm:$0xff]
        %v3378 = vld [vmem:[%s3369 + $0x40] sm:$0xff]
        %v3379 = vld [vmem:[%s3369 + $0x48] sm:$0xff]
        %v3380 = vld [vmem:[%s3369 + $0x50] sm:$0xff]
        %v3381 = vld [vmem:[%s3369 + $0x58] sm:$0xff]
        %v3382 = vld [vmem:[%s3369 + $0x60] sm:$0xff]
        %v3383 = vld [vmem:[%s3369 + $0x68] sm:$0xff]
        %v3384 = vld [vmem:[%s3369 + $0x70] sm:$0xff]
        %v3385 = vld [vmem:[%s3369 + $0x78] sm:$0xff]
        %v3402 = vrot.slane %v3370, 7
        %v3403 = vrot.slane %v3371, 7
        %v3404 = vsel %vm437, %v3402, %v3403
        %v3405 = vrot.slane %v3372, 7
        %v3406 = vrot.slane %v3373, 7
        %v3407 = vsel %vm437, %v3405, %v3406
        %v3408 = vrot.slane %v3374, 7
        %v3409 = vrot.slane %v3375, 7
        %v3410 = vsel %vm437, %v3408, %v3409
        %v3411 = vrot.slane %v3376, 7
        %v3412 = vrot.slane %v3377, 7
        %v3413 = vsel %vm437, %v3411, %v3412
        %v3414 = vrot.slane %v3378, 7
        %v3415 = vrot.slane %v3379, 7
        %v3416 = vsel %vm437, %v3414, %v3415
        %v3417 = vrot.slane %v3380, 7
        %v3418 = vrot.slane %v3381, 7
        %v3419 = vsel %vm437, %v3417, %v3418
        %v3420 = vrot.slane %v3382, 7
        %v3421 = vrot.slane %v3383, 7
        %v3422 = vsel %vm437, %v3420, %v3421
        %v3423 = vrot.slane %v3384, 7
        %v3424 = vrot.slane %v3385, 7
        %v3425 = vsel %vm437, %v3423, %v3424
        %v3442 = vsel %vm437, 0.0, %v3402
        %v3443 = vsel %vm437, 0.0, %v3405
        %v3444 = vsel %vm437, 0.0, %v3408
        %v3445 = vsel %vm437, 0.0, %v3411
        %v3446 = vsel %vm437, 0.0, %v3414
        %v3447 = vsel %vm437, 0.0, %v3417
        %v3448 = vsel %vm437, 0.0, %v3420
        %v3449 = vsel %vm437, 0.0, %v3423
        %v3450 = vrot.slane %v3370, 1
        %v3451 = vrot.slane %v3371, 1
        %v3452 = vsel %vm498, %v3450, %v3451
        %v3453 = vrot.slane %v3372, 1
        %v3454 = vrot.slane %v3373, 1
        %v3455 = vsel %vm498, %v3453, %v3454
        %v3456 = vrot.slane %v3374, 1
        %v3457 = vrot.slane %v3375, 1
        %v3458 = vsel %vm498, %v3456, %v3457
        %v3459 = vrot.slane %v3376, 1
        %v3460 = vrot.slane %v3377, 1
        %v3461 = vsel %vm498, %v3459, %v3460
        %v3462 = vrot.slane %v3378, 1
        %v3463 = vrot.slane %v3379, 1
        %v3464 = vsel %vm498, %v3462, %v3463
        %v3465 = vrot.slane %v3380, 1
        %v3466 = vrot.slane %v3381, 1
        %v3467 = vsel %vm498, %v3465, %v3466
        %v3468 = vrot.slane %v3382, 1
        %v3469 = vrot.slane %v3383, 1
        %v3470 = vsel %vm498, %v3468, %v3469
        %v3471 = vrot.slane %v3384, 1
        %v3472 = vrot.slane %v3385, 1
        %v3473 = vsel %vm498, %v3471, %v3472
        %v3490 = vsel %vm498, %v3451, 0.0
        %v3491 = vsel %vm498, %v3454, 0.0
        %v3492 = vsel %vm498, %v3457, 0.0
        %v3493 = vsel %vm498, %v3460, 0.0
        %v3494 = vsel %vm498, %v3463, 0.0
        %v3495 = vsel %vm498, %v3466, 0.0
        %v3496 = vsel %vm498, %v3469, 0.0
        %v3497 = vsel %vm498, %v3472, 0.0
        %v3498 = vld [vmem:[#allocation11 + $0x300] sm:$0xff]
        %v3499 = vld [vmem:[#allocation11 + $0x308] sm:$0xff]
        %v3500 = vld [vmem:[#allocation11 + $0x310] sm:$0xff]
        %v3501 = vld [vmem:[#allocation11 + $0x318] sm:$0xff]
        %v3502 = vld [vmem:[#allocation11 + $0x320] sm:$0xff]
        %v3503 = vld [vmem:[#allocation11 + $0x328] sm:$0xff]
        %v3504 = vld [vmem:[#allocation11 + $0x330] sm:$0xff]
        %v3505 = vld [vmem:[#allocation11 + $0x338] sm:$0xff]
        %v3506 = vld [vmem:[#allocation11 + $0x340] sm:$0xff]
        %v3507 = vld [vmem:[#allocation11 + $0x348] sm:$0xff]
        %v3508 = vld [vmem:[#allocation11 + $0x350] sm:$0xff]
        %v3509 = vld [vmem:[#allocation11 + $0x358] sm:$0xff]
        %v3510 = vld [vmem:[#allocation11 + $0x360] sm:$0xff]
        %v3511 = vld [vmem:[#allocation11 + $0x368] sm:$0xff]
        %v3512 = vld [vmem:[#allocation11 + $0x370] sm:$0xff]
        %v3513 = vld [vmem:[#allocation11 + $0x378] sm:$0xff]
        %v3514 = vld [vmem:[#allocation11 + $0x380] sm:$0xff]
        %v3515 = vld [vmem:[#allocation11 + $0x388] sm:$0xff]
        %v3516 = vld [vmem:[#allocation11 + $0x390] sm:$0xff]
        %v3517 = vld [vmem:[#allocation11 + $0x398] sm:$0xff]
        %v3518 = vld [vmem:[#allocation11 + $0x3a0] sm:$0xff]
        %v3519 = vld [vmem:[#allocation11 + $0x3a8] sm:$0xff]
        %v3520 = vld [vmem:[#allocation11 + $0x3b0] sm:$0xff]
        %v3521 = vld [vmem:[#allocation11 + $0x3b8] sm:$0xff]
        %v3522 = vld [vmem:[#allocation11 + $0x3c0] sm:$0xff]
        %v3523 = vld [vmem:[#allocation11 + $0x3c8] sm:$0xff]
        %v3524 = vld [vmem:[#allocation11 + $0x3d0] sm:$0xff]
        %v3525 = vld [vmem:[#allocation11 + $0x3d8] sm:$0xff]
        %v3526 = vld [vmem:[#allocation11 + $0x3e0] sm:$0xff]
        %v3527 = vld [vmem:[#allocation11 + $0x3e8] sm:$0xff]
        %v3528 = vld [vmem:[#allocation11 + $0x3f0] sm:$0xff]
        %v3529 = vld [vmem:[#allocation11 + $0x3f8] sm:$0xff]
        %v3530 = vld [vmem:[#allocation11 + $0x400] sm:$0xff]
        %v3531 = vld [vmem:[#allocation11 + $0x408] sm:$0xff]
        %v3532 = vld [vmem:[#allocation11 + $0x410] sm:$0xff]
        %v3533 = vld [vmem:[#allocation11 + $0x418] sm:$0xff]
        %v3534 = vld [vmem:[#allocation11 + $0x420] sm:$0xff]
        %v3535 = vld [vmem:[#allocation11 + $0x428] sm:$0xff]
        %v3536 = vld [vmem:[#allocation11 + $0x430] sm:$0xff]
        %v3537 = vld [vmem:[#allocation11 + $0x438] sm:$0xff]
        %v3538 = vld [vmem:[#allocation11 + $0x440] sm:$0xff]
        %v3539 = vld [vmem:[#allocation11 + $0x448] sm:$0xff]
        %v3540 = vld [vmem:[#allocation11 + $0x450] sm:$0xff]
        %v3541 = vld [vmem:[#allocation11 + $0x458] sm:$0xff]
        %v3542 = vld [vmem:[#allocation11 + $0x460] sm:$0xff]
        %v3543 = vld [vmem:[#allocation11 + $0x468] sm:$0xff]
        %v3544 = vld [vmem:[#allocation11 + $0x470] sm:$0xff]
        %v3545 = vld [vmem:[#allocation11 + $0x478] sm:$0xff]
        %3546 = vmatprep.subr.mxu0 0.0
        %3547 = vmatpush1.msra.mxu0 %v3498
        %3548 = vmatprep.subr.mxu0 0.0
        %3549 = vmatpush1.msra.mxu0 %v3499
        %3550 = vmatprep.subr.mxu0 0.0
        %3551 = vmatpush1.msra.mxu0 %v3500
        %3552 = vmatprep.subr.mxu0 0.0
        %3553 = vmatpush1.msra.mxu0 %v3501
        %3554 = vmatprep.subr.mxu0 0.0
        %3555 = vmatpush1.msra.mxu0 %v3502
        %3556 = vmatprep.subr.mxu0 0.0
        %3557 = vmatpush1.msra.mxu0 %v3503
        %3558 = vmatprep.subr.mxu0 0.0
        %3559 = vmatpush1.msra.mxu0 %v3504
        %3560 = vmatprep.subr.mxu0 0.0
        %3561 = vmatpush1.msra.mxu0 %v3505
        %3562 = vmatprep.subr.mxu0 0.0
        %3563 = vmatpush1.msra.mxu0 %v3506
        %3564 = vmatprep.subr.mxu0 0.0
        %3565 = vmatpush1.msra.mxu0 %v3507
        %3566 = vmatprep.subr.mxu0 0.0
        %3567 = vmatpush1.msra.mxu0 %v3508
        %3568 = vmatprep.subr.mxu0 0.0
        %3569 = vmatpush1.msra.mxu0 %v3509
        %3570 = vmatprep.subr.mxu0 0.0
        %3571 = vmatpush1.msra.mxu0 %v3510
        %3572 = vmatprep.subr.mxu0 0.0
        %3573 = vmatpush1.msra.mxu0 %v3511
        %3574 = vmatprep.subr.mxu0 0.0
        %3575 = vmatpush1.msra.mxu0 %v3512
        %3576 = vmatprep.subr.mxu0 0.0
        %3577 = vmatpush1.msra.mxu0 %v3513
        %3578 = vmatprep.subr.mxu0 0.0
        %3579 = vmatpush1.msra.mxu0 %v3514
        %3580 = vmatprep.subr.mxu0 0.0
        %3581 = vmatpush1.msra.mxu0 %v3515
        %3582 = vmatprep.subr.mxu0 0.0
        %3583 = vmatpush1.msra.mxu0 %v3516
        %3584 = vmatprep.subr.mxu0 0.0
        %3585 = vmatpush1.msra.mxu0 %v3517
        %3586 = vmatprep.subr.mxu0 0.0
        %3587 = vmatpush1.msra.mxu0 %v3518
        %3588 = vmatprep.subr.mxu0 0.0
        %3589 = vmatpush1.msra.mxu0 %v3519
        %3590 = vmatprep.subr.mxu0 0.0
        %3591 = vmatpush1.msra.mxu0 %v3520
        %3592 = vmatprep.subr.mxu0 0.0
        %3593 = vmatpush1.msra.mxu0 %v3521
        %3594 = vmatprep.subr.mxu0 0.0
        %3595 = vmatpush1.msra.mxu0 %v3522
        %3596 = vmatprep.subr.mxu0 0.0
        %3597 = vmatpush1.msra.mxu0 %v3523
        %3598 = vmatprep.subr.mxu0 0.0
        %3599 = vmatpush1.msra.mxu0 %v3524
        %3600 = vmatprep.subr.mxu0 0.0
        %3601 = vmatpush1.msra.mxu0 %v3525
        %3602 = vmatprep.subr.mxu0 0.0
        %3603 = vmatpush1.msra.mxu0 %v3526
        %3604 = vmatprep.subr.mxu0 0.0
        %3605 = vmatpush1.msra.mxu0 %v3527
        %3606 = vmatprep.subr.mxu0 0.0
        %3607 = vmatpush1.msra.mxu0 %v3528
        %3608 = vmatprep.subr.mxu0 0.0
        %3609 = vmatpush1.msra.mxu0 %v3529
        %3610 = vmatprep.mubr.f32.mxu0 %v3370
        %3611 = vmatmul.mubr.f32.gmra.mrb[0].mxu0 %v3442
        %v3612 = vpop.f32.mrb[0].mxu0
        %v3613 = vadd.f32 0.0, %v3612
        %v3614 = vpop.f32.mrb[0].mxu0
        %3615 = vmatprep.mubr.f32.mxu0 %v3371
        %3616 = vmatmul.mubr.f32.gmra.mrb[0].mxu0 %v3404
        %v3617 = vpop.f32.mrb[0].mxu0
        %v3618 = vadd.f32 0.0, %v3617
        %v3619 = vpop.f32.mrb[0].mxu0
        %3620 = vmatprep.mubr.f32.mxu0 %v3372
        %3621 = vmatmul.mubr.f32.gmra.mrb[0].mxu0 %v3443
        %v3622 = vpop.f32.mrb[0].mxu0
        %v3623 = vadd.f32 0.0, %v3622
        %v3624 = vpop.f32.mrb[0].mxu0
        %3625 = vmatprep.mubr.f32.mxu0 %v3373
        %3626 = vmatmul.mubr.f32.gmra.mrb[0].mxu0 %v3407
        %v3627 = vpop.f32.mrb[0].mxu0
        %v3628 = vadd.f32 0.0, %v3627
        %v3629 = vpop.f32.mrb[0].mxu0
        %3630 = vmatprep.mubr.f32.mxu0 %v3374
        %3631 = vmatmul.mubr.f32.gmra.mrb[0].mxu0 %v3444
        %v3632 = vpop.f32.mrb[0].mxu0
        %v3633 = vadd.f32 0.0, %v3632
        %v3634 = vpop.f32.mrb[0].mxu0
        %3635 = vmatprep.mubr.f32.mxu0 %v3375
        %3636 = vmatmul.mubr.f32.gmra.mrb[0].mxu0 %v3410
        %v3637 = vpop.f32.mrb[0].mxu0
        %v3638 = vadd.f32 0.0, %v3637
        %v3639 = vpop.f32.mrb[0].mxu0
        %3640 = vmatprep.mubr.f32.mxu0 %v3376
        %3641 = vmatmul.mubr.f32.gmra.mrb[0].mxu0 %v3445
        %v3642 = vpop.f32.mrb[0].mxu0
        %v3643 = vadd.f32 0.0, %v3642
        %v3644 = vpop.f32.mrb[0].mxu0
        %3645 = vmatprep.mubr.f32.mxu0 %v3377
        %3646 = vmatmul.mubr.f32.gmra.mrb[0].mxu0 %v3413
        %v3647 = vpop.f32.mrb[0].mxu0
        %v3648 = vadd.f32 0.0, %v3647
        %v3649 = vpop.f32.mrb[0].mxu0
        %3650 = vmatprep.mubr.f32.mxu0 %v3378
        %3651 = vmatmul.mubr.f32.gmra.mrb[0].mxu0 %v3446
        %v3652 = vpop.f32.mrb[0].mxu0
        %v3653 = vadd.f32 0.0, %v3652
        %v3654 = vpop.f32.mrb[0].mxu0
        %3655 = vmatprep.mubr.f32.mxu0 %v3379
        %3656 = vmatmul.mubr.f32.gmra.mrb[0].mxu0 %v3416
        %v3657 = vpop.f32.mrb[0].mxu0
        %v3658 = vadd.f32 0.0, %v3657
        %v3659 = vpop.f32.mrb[0].mxu0
        %3660 = vmatprep.mubr.f32.mxu0 %v3380
        %3661 = vmatmul.mubr.f32.gmra.mrb[0].mxu0 %v3447
        %v3662 = vpop.f32.mrb[0].mxu0
        %v3663 = vadd.f32 0.0, %v3662
        %v3664 = vpop.f32.mrb[0].mxu0
        %3665 = vmatprep.mubr.f32.mxu0 %v3381
        %3666 = vmatmul.mubr.f32.gmra.mrb[0].mxu0 %v3419
        %v3667 = vpop.f32.mrb[0].mxu0
        %v3668 = vadd.f32 0.0, %v3667
        %v3669 = vpop.f32.mrb[0].mxu0
        %3670 = vmatprep.mubr.f32.mxu0 %v3382
        %3671 = vmatmul.mubr.f32.gmra.mrb[0].mxu0 %v3448
        %v3672 = vpop.f32.mrb[0].mxu0
        %v3673 = vadd.f32 0.0, %v3672
        %v3674 = vpop.f32.mrb[0].mxu0
        %3675 = vmatprep.mubr.f32.mxu0 %v3383
        %3676 = vmatmul.mubr.f32.gmra.mrb[0].mxu0 %v3422
        %v3677 = vpop.f32.mrb[0].mxu0
        %v3678 = vadd.f32 0.0, %v3677
        %v3679 = vpop.f32.mrb[0].mxu0
        %3680 = vmatprep.mubr.f32.mxu0 %v3384
        %3681 = vmatmul.mubr.f32.gmra.mrb[0].mxu0 %v3449
        %v3682 = vpop.f32.mrb[0].mxu0
        %v3683 = vadd.f32 0.0, %v3682
        %v3684 = vpop.f32.mrb[0].mxu0
        %3685 = vmatprep.mubr.f32.mxu0 %v3385
        %3686 = vmatmul.mubr.f32.gmra.mrb[0].mxu0 %v3425
        %v3687 = vpop.f32.mrb[0].mxu0
        %v3688 = vadd.f32 0.0, %v3687
        %v3689 = vpop.f32.mrb[0].mxu0
        %3690 = vdwg.mxu0
        %3691 = vmatprep.subr.mxu0 0.0
        %3692 = vmatpush1.msra.mxu0 %v3530
        %3693 = vmatprep.subr.mxu0 0.0
        %3694 = vmatpush1.msra.mxu0 %v3531
        %3695 = vmatprep.subr.mxu0 0.0
        %3696 = vmatpush1.msra.mxu0 %v3532
        %3697 = vmatprep.subr.mxu0 0.0
        %3698 = vmatpush1.msra.mxu0 %v3533
        %3699 = vmatprep.subr.mxu0 0.0
        %3700 = vmatpush1.msra.mxu0 %v3534
        %3701 = vmatprep.subr.mxu0 0.0
        %3702 = vmatpush1.msra.mxu0 %v3535
        %3703 = vmatprep.subr.mxu0 0.0
        %3704 = vmatpush1.msra.mxu0 %v3536
        %3705 = vmatprep.subr.mxu0 0.0
        %3706 = vmatpush1.msra.mxu0 %v3537
        %3707 = vmatprep.subr.mxu0 0.0
        %3708 = vmatpush1.msra.mxu0 %v3538
        %3709 = vmatprep.subr.mxu0 0.0
        %3710 = vmatpush1.msra.mxu0 %v3539
        %3711 = vmatprep.subr.mxu0 0.0
        %3712 = vmatpush1.msra.mxu0 %v3540
        %3713 = vmatprep.subr.mxu0 0.0
        %3714 = vmatpush1.msra.mxu0 %v3541
        %3715 = vmatprep.subr.mxu0 0.0
        %3716 = vmatpush1.msra.mxu0 %v3542
        %3717 = vmatprep.subr.mxu0 0.0
        %3718 = vmatpush1.msra.mxu0 %v3543
        %3719 = vmatprep.subr.mxu0 0.0
        %3720 = vmatpush1.msra.mxu0 %v3544
        %3721 = vmatprep.subr.mxu0 0.0
        %3722 = vmatpush1.msra.mxu0 %v3545
        %3723 = vmatprep.subr.mxu0 0.0
        %3724 = vmatpush1.msra.mxu0 0.0
        %3725 = vmatprep.subr.mxu0 0.0
        %3726 = vmatpush1.msra.mxu0 0.0
        %3727 = vmatprep.subr.mxu0 0.0
        %3728 = vmatpush1.msra.mxu0 0.0
        %3729 = vmatprep.subr.mxu0 0.0
        %3730 = vmatpush1.msra.mxu0 0.0
        %3731 = vmatprep.subr.mxu0 0.0
        %3732 = vmatpush1.msra.mxu0 0.0
        %3733 = vmatprep.subr.mxu0 0.0
        %3734 = vmatpush1.msra.mxu0 0.0
        %3735 = vmatprep.subr.mxu0 0.0
        %3736 = vmatpush1.msra.mxu0 0.0
        %3737 = vmatprep.subr.mxu0 0.0
        %3738 = vmatpush1.msra.mxu0 0.0
        %3739 = vmatprep.subr.mxu0 0.0
        %3740 = vmatpush1.msra.mxu0 0.0
        %3741 = vmatprep.subr.mxu0 0.0
        %3742 = vmatpush1.msra.mxu0 0.0
        %3743 = vmatprep.subr.mxu0 0.0
        %3744 = vmatpush1.msra.mxu0 0.0
        %3745 = vmatprep.subr.mxu0 0.0
        %3746 = vmatpush1.msra.mxu0 0.0
        %3747 = vmatprep.subr.mxu0 0.0
        %3748 = vmatpush1.msra.mxu0 0.0
        %3749 = vmatprep.subr.mxu0 0.0
        %3750 = vmatpush1.msra.mxu0 0.0
        %3751 = vmatprep.subr.mxu0 0.0
        %3752 = vmatpush1.msra.mxu0 0.0
        %3753 = vmatprep.subr.mxu0 0.0
        %3754 = vmatpush1.msra.mxu0 0.0
        %3755 = vmatprep.mubr.f32.mxu0 0.0
        %3756 = vmatmul.mubr.f32.gmra.mrb[0].mxu0 %v3452
        %v3757 = vpop.f32.mrb[0].mxu0
        %v3758 = vadd.f32 %v3613, %v3757
        %v3759 = vpop.f32.mrb[0].mxu0
        %3760 = vmatprep.mubr.f32.mxu0 0.0
        %3761 = vmatmul.mubr.f32.gmra.mrb[0].mxu0 %v3490
        %v3762 = vpop.f32.mrb[0].mxu0
        %v3763 = vadd.f32 %v3618, %v3762
        %v3764 = vpop.f32.mrb[0].mxu0
        %3765 = vmatprep.mubr.f32.mxu0 0.0
        %3766 = vmatmul.mubr.f32.gmra.mrb[0].mxu0 %v3455
        %v3767 = vpop.f32.mrb[0].mxu0
        %v3768 = vadd.f32 %v3623, %v3767
        %v3769 = vpop.f32.mrb[0].mxu0
        %3770 = vmatprep.mubr.f32.mxu0 0.0
        %3771 = vmatmul.mubr.f32.gmra.mrb[0].mxu0 %v3491
        %v3772 = vpop.f32.mrb[0].mxu0
        %v3773 = vadd.f32 %v3628, %v3772
        %v3774 = vpop.f32.mrb[0].mxu0
        %3775 = vmatprep.mubr.f32.mxu0 0.0
        %3776 = vmatmul.mubr.f32.gmra.mrb[0].mxu0 %v3458
        %v3777 = vpop.f32.mrb[0].mxu0
        %v3778 = vadd.f32 %v3633, %v3777
        %v3779 = vpop.f32.mrb[0].mxu0
        %3780 = vmatprep.mubr.f32.mxu0 0.0
        %3781 = vmatmul.mubr.f32.gmra.mrb[0].mxu0 %v3492
        %v3782 = vpop.f32.mrb[0].mxu0
        %v3783 = vadd.f32 %v3638, %v3782
        %v3784 = vpop.f32.mrb[0].mxu0
        %3785 = vmatprep.mubr.f32.mxu0 0.0
        %3786 = vmatmul.mubr.f32.gmra.mrb[0].mxu0 %v3461
        %v3787 = vpop.f32.mrb[0].mxu0
        %v3788 = vadd.f32 %v3643, %v3787
        %v3789 = vpop.f32.mrb[0].mxu0
        %3790 = vmatprep.mubr.f32.mxu0 0.0
        %3791 = vmatmul.mubr.f32.gmra.mrb[0].mxu0 %v3493
        %v3792 = vpop.f32.mrb[0].mxu0
        %v3793 = vadd.f32 %v3648, %v3792
        %v3794 = vpop.f32.mrb[0].mxu0
        %3795 = vmatprep.mubr.f32.mxu0 0.0
        %3796 = vmatmul.mubr.f32.gmra.mrb[0].mxu0 %v3464
        %v3797 = vpop.f32.mrb[0].mxu0
        %v3798 = vadd.f32 %v3653, %v3797
        %v3799 = vpop.f32.mrb[0].mxu0
        %3800 = vmatprep.mubr.f32.mxu0 0.0
        %3801 = vmatmul.mubr.f32.gmra.mrb[0].mxu0 %v3494
        %v3802 = vpop.f32.mrb[0].mxu0
        %v3803 = vadd.f32 %v3658, %v3802
        %v3804 = vpop.f32.mrb[0].mxu0
        %3805 = vmatprep.mubr.f32.mxu0 0.0
        %3806 = vmatmul.mubr.f32.gmra.mrb[0].mxu0 %v3467
        %v3807 = vpop.f32.mrb[0].mxu0
        %v3808 = vadd.f32 %v3663, %v3807
        %v3809 = vpop.f32.mrb[0].mxu0
        %3810 = vmatprep.mubr.f32.mxu0 0.0
        %3811 = vmatmul.mubr.f32.gmra.mrb[0].mxu0 %v3495
        %v3812 = vpop.f32.mrb[0].mxu0
        %v3813 = vadd.f32 %v3668, %v3812
        %v3814 = vpop.f32.mrb[0].mxu0
        %3815 = vmatprep.mubr.f32.mxu0 0.0
        %3816 = vmatmul.mubr.f32.gmra.mrb[0].mxu0 %v3470
        %v3817 = vpop.f32.mrb[0].mxu0
        %v3818 = vadd.f32 %v3673, %v3817
        %v3819 = vpop.f32.mrb[0].mxu0
        %3820 = vmatprep.mubr.f32.mxu0 0.0
        %3821 = vmatmul.mubr.f32.gmra.mrb[0].mxu0 %v3496
        %v3822 = vpop.f32.mrb[0].mxu0
        %v3823 = vadd.f32 %v3678, %v3822
        %v3824 = vpop.f32.mrb[0].mxu0
        %3825 = vmatprep.mubr.f32.mxu0 0.0
        %3826 = vmatmul.mubr.f32.gmra.mrb[0].mxu0 %v3473
        %v3827 = vpop.f32.mrb[0].mxu0
        %v3828 = vadd.f32 %v3683, %v3827
        %v3829 = vpop.f32.mrb[0].mxu0
        %3830 = vmatprep.mubr.f32.mxu0 0.0
        %3831 = vmatmul.mubr.f32.gmra.mrb[0].mxu0 %v3497
        %v3832 = vpop.f32.mrb[0].mxu0
        %v3833 = vadd.f32 %v3688, %v3832
        %v3834 = vpop.f32.mrb[0].mxu0
        %3835 = vdwg.mxu0
        %v3836 = vld [vmem:[#allocation4] sm:$0xff]
        %v3837 = vld [vmem:[#allocation4 + $0x8] sm:$0xff]
        %v3838 = vld [vmem:[#allocation4 + $0x10] sm:$0xff]
        %v3839 = vld [vmem:[#allocation4 + $0x18] sm:$0xff]
        %v3840 = vld [vmem:[#allocation4 + $0x20] sm:$0xff]
        %v3841 = vld [vmem:[#allocation4 + $0x28] sm:$0xff]
        %v3842 = vld [vmem:[#allocation4 + $0x30] sm:$0xff]
        %v3843 = vld [vmem:[#allocation4 + $0x38] sm:$0xff]
        %v3844 = vld [vmem:[#allocation4 + $0x40] sm:$0xff]
        %v3845 = vld [vmem:[#allocation4 + $0x48] sm:$0xff]
        %v3846 = vld [vmem:[#allocation4 + $0x50] sm:$0xff]
        %v3847 = vld [vmem:[#allocation4 + $0x58] sm:$0xff]
        %v3848 = vld [vmem:[#allocation4 + $0x60] sm:$0xff]
        %v3849 = vld [vmem:[#allocation4 + $0x68] sm:$0xff]
        %v3850 = vld [vmem:[#allocation4 + $0x70] sm:$0xff]
        %v3851 = vld [vmem:[#allocation4 + $0x78] sm:$0xff]
        %v3852 = vadd.f32 %v3836, %v3758
        %v3853 = vadd.f32 %v3837, %v3763
        %v3854 = vadd.f32 %v3838, %v3768
        %v3855 = vadd.f32 %v3839, %v3773
        %v3856 = vadd.f32 %v3840, %v3778
        %v3857 = vadd.f32 %v3841, %v3783
        %v3858 = vadd.f32 %v3842, %v3788
        %v3859 = vadd.f32 %v3843, %v3793
        %v3860 = vadd.f32 %v3844, %v3798
        %v3861 = vadd.f32 %v3845, %v3803
        %v3862 = vadd.f32 %v3846, %v3808
        %v3863 = vadd.f32 %v3847, %v3813
        %v3864 = vadd.f32 %v3848, %v3818
        %v3865 = vadd.f32 %v3849, %v3823
        %v3866 = vadd.f32 %v3850, %v3828
        %v3867 = vadd.f32 %v3851, %v3833
        %3868 = vst [vmem:[#allocation4] sm:$0xff] %v3852
        %3869 = vst [vmem:[#allocation4 + $0x8] sm:$0xff] %v3853
        %3870 = vst [vmem:[#allocation4 + $0x10] sm:$0xff] %v3854
        %3871 = vst [vmem:[#allocation4 + $0x18] sm:$0xff] %v3855
        %3872 = vst [vmem:[#allocation4 + $0x20] sm:$0xff] %v3856
        %3873 = vst [vmem:[#allocation4 + $0x28] sm:$0xff] %v3857
        %3874 = vst [vmem:[#allocation4 + $0x30] sm:$0xff] %v3858
        %3875 = vst [vmem:[#allocation4 + $0x38] sm:$0xff] %v3859
        %3876 = vst [vmem:[#allocation4 + $0x40] sm:$0xff] %v3860
        %3877 = vst [vmem:[#allocation4 + $0x48] sm:$0xff] %v3861
        %3878 = vst [vmem:[#allocation4 + $0x50] sm:$0xff] %v3862
        %3879 = vst [vmem:[#allocation4 + $0x58] sm:$0xff] %v3863
        %3880 = vst [vmem:[#allocation4 + $0x60] sm:$0xff] %v3864
        %3881 = vst [vmem:[#allocation4 + $0x68] sm:$0xff] %v3865
        %3882 = vst [vmem:[#allocation4 + $0x70] sm:$0xff] %v3866
        %3883 = vst [vmem:[#allocation4 + $0x78] sm:$0xff] %v3867
        %v3884 = vld [vmem:[#allocation4] sm:$0xff]
        %v3885 = vld [vmem:[#allocation4 + $0x8] sm:$0xff]
        %v3886 = vld [vmem:[#allocation4 + $0x10] sm:$0xff]
        %v3887 = vld [vmem:[#allocation4 + $0x18] sm:$0xff]
        %v3888 = vld [vmem:[#allocation4 + $0x20] sm:$0xff]
        %v3889 = vld [vmem:[#allocation4 + $0x28] sm:$0xff]
        %v3890 = vld [vmem:[#allocation4 + $0x30] sm:$0xff]
        %v3891 = vld [vmem:[#allocation4 + $0x38] sm:$0xff]
        %v3892 = vld [vmem:[#allocation4 + $0x40] sm:$0xff]
        %v3893 = vld [vmem:[#allocation4 + $0x48] sm:$0xff]
        %v3894 = vld [vmem:[#allocation4 + $0x50] sm:$0xff]
        %v3895 = vld [vmem:[#allocation4 + $0x58] sm:$0xff]
        %v3896 = vld [vmem:[#allocation4 + $0x60] sm:$0xff]
        %v3897 = vld [vmem:[#allocation4 + $0x68] sm:$0xff]
        %v3898 = vld [vmem:[#allocation4 + $0x70] sm:$0xff]
        %v3899 = vld [vmem:[#allocation4 + $0x78] sm:$0xff]
        %v3900 = vld [vmem:[%s5] sm:$0x1]
        %v3902 = vlaneseq
        %v3903 = vshrl.u32 %v3902, 7
        %v3904 = vsub.s32 0, %v3903
        %v3905 = vrot.slane %v3900, %v3904
        %v3907 = vadd.f32 %v3884, %v3905
        %v3908 = vadd.f32 %v3885, %v3905
        %v3909 = vadd.f32 %v3886, %v3905
        %v3910 = vadd.f32 %v3887, %v3905
        %v3911 = vadd.f32 %v3888, %v3905
        %v3912 = vadd.f32 %v3889, %v3905
        %v3913 = vadd.f32 %v3890, %v3905
        %v3914 = vadd.f32 %v3891, %v3905
        %v3915 = vadd.f32 %v3892, %v3905
        %v3916 = vadd.f32 %v3893, %v3905
        %v3917 = vadd.f32 %v3894, %v3905
        %v3918 = vadd.f32 %v3895, %v3905
        %v3919 = vadd.f32 %v3896, %v3905
        %v3920 = vadd.f32 %v3897, %v3905
        %v3921 = vadd.f32 %v3898, %v3905
        %v3922 = vadd.f32 %v3899, %v3905
        %v3923 = vxor.u32 %v3907, 2147483648
        %v3924 = vxor.u32 %v3908, 2147483648
        %v3925 = vxor.u32 %v3909, 2147483648
        %v3926 = vxor.u32 %v3910, 2147483648
        %v3927 = vxor.u32 %v3911, 2147483648
        %v3928 = vxor.u32 %v3912, 2147483648
        %v3929 = vxor.u32 %v3913, 2147483648
        %v3930 = vxor.u32 %v3914, 2147483648
        %v3931 = vxor.u32 %v3915, 2147483648
        %v3932 = vxor.u32 %v3916, 2147483648
        %v3933 = vxor.u32 %v3917, 2147483648
        %v3934 = vxor.u32 %v3918, 2147483648
        %v3935 = vxor.u32 %v3919, 2147483648
        %v3936 = vxor.u32 %v3920, 2147483648
        %v3937 = vxor.u32 %v3921, 2147483648
        %v3938 = vxor.u32 %v3922, 2147483648
        %v3939 = vmul.f32 %v3923, 1.442695
        %v3940 = vpow.pop %v3939
        %v3941 = vmul.f32 %v3924, 1.442695
        %v3942 = vpow.pop %v3941
        %v3943 = vmul.f32 %v3925, 1.442695
        %v3944 = vpow.pop %v3943
        %v3945 = vmul.f32 %v3926, 1.442695
        %v3946 = vpow.pop %v3945
        %v3947 = vmul.f32 %v3927, 1.442695
        %v3948 = vpow.pop %v3947
        %v3949 = vmul.f32 %v3928, 1.442695
        %v3950 = vpow.pop %v3949
        %v3951 = vmul.f32 %v3929, 1.442695
        %v3952 = vpow.pop %v3951
        %v3953 = vmul.f32 %v3930, 1.442695
        %v3954 = vpow.pop %v3953
        %v3955 = vmul.f32 %v3931, 1.442695
        %v3956 = vpow.pop %v3955
        %v3957 = vmul.f32 %v3932, 1.442695
        %v3958 = vpow.pop %v3957
        %v3959 = vmul.f32 %v3933, 1.442695
        %v3960 = vpow.pop %v3959
        %v3961 = vmul.f32 %v3934, 1.442695
        %v3962 = vpow.pop %v3961
        %v3963 = vmul.f32 %v3935, 1.442695
        %v3964 = vpow.pop %v3963
        %v3965 = vmul.f32 %v3936, 1.442695
        %v3966 = vpow.pop %v3965
        %v3967 = vmul.f32 %v3937, 1.442695
        %v3968 = vpow.pop %v3967
        %v3969 = vmul.f32 %v3938, 1.442695
        %v3970 = vpow.pop %v3969
        %v3971 = vadd.f32 %v3940, 1.0
        %v3972 = vadd.f32 %v3942, 1.0
        %v3973 = vadd.f32 %v3944, 1.0
        %v3974 = vadd.f32 %v3946, 1.0
        %v3975 = vadd.f32 %v3948, 1.0
        %v3976 = vadd.f32 %v3950, 1.0
        %v3977 = vadd.f32 %v3952, 1.0
        %v3978 = vadd.f32 %v3954, 1.0
        %v3979 = vadd.f32 %v3956, 1.0
        %v3980 = vadd.f32 %v3958, 1.0
        %v3981 = vadd.f32 %v3960, 1.0
        %v3982 = vadd.f32 %v3962, 1.0
        %v3983 = vadd.f32 %v3964, 1.0
        %v3984 = vadd.f32 %v3966, 1.0
        %v3985 = vadd.f32 %v3968, 1.0
        %v3986 = vadd.f32 %v3970, 1.0
        %v3987 = vrcp.pop %v3971
        %v3988 = vmul.f32 1.0, %v3987
        %v3989 = vrcp.pop %v3972
        %v3990 = vmul.f32 1.0, %v3989
        %v3991 = vrcp.pop %v3973
        %v3992 = vmul.f32 1.0, %v3991
        %v3993 = vrcp.pop %v3974
        %v3994 = vmul.f32 1.0, %v3993
        %v3995 = vrcp.pop %v3975
        %v3996 = vmul.f32 1.0, %v3995
        %v3997 = vrcp.pop %v3976
        %v3998 = vmul.f32 1.0, %v3997
        %v3999 = vrcp.pop %v3977
        %v4000 = vmul.f32 1.0, %v3999
        %v4001 = vrcp.pop %v3978
        %v4002 = vmul.f32 1.0, %v4001
        %v4003 = vrcp.pop %v3979
        %v4004 = vmul.f32 1.0, %v4003
        %v4005 = vrcp.pop %v3980
        %v4006 = vmul.f32 1.0, %v4005
        %v4007 = vrcp.pop %v3981
        %v4008 = vmul.f32 1.0, %v4007
        %v4009 = vrcp.pop %v3982
        %v4010 = vmul.f32 1.0, %v4009
        %v4011 = vrcp.pop %v3983
        %v4012 = vmul.f32 1.0, %v4011
        %v4013 = vrcp.pop %v3984
        %v4014 = vmul.f32 1.0, %v4013
        %v4015 = vrcp.pop %v3985
        %v4016 = vmul.f32 1.0, %v4015
        %v4017 = vrcp.pop %v3986
        %v4018 = vmul.f32 1.0, %v4017
        %v4019 = vmul.f32 %v3907, %v3988
        %v4020 = vmul.f32 %v3908, %v3990
        %v4021 = vmul.f32 %v3909, %v3992
        %v4022 = vmul.f32 %v3910, %v3994
        %v4023 = vmul.f32 %v3911, %v3996
        %v4024 = vmul.f32 %v3912, %v3998
        %v4025 = vmul.f32 %v3913, %v4000
        %v4026 = vmul.f32 %v3914, %v4002
        %v4027 = vmul.f32 %v3915, %v4004
        %v4028 = vmul.f32 %v3916, %v4006
        %v4029 = vmul.f32 %v3917, %v4008
        %v4030 = vmul.f32 %v3918, %v4010
        %v4031 = vmul.f32 %v3919, %v4012
        %v4032 = vmul.f32 %v3920, %v4014
        %v4033 = vmul.f32 %v3921, %v4016
        %v4034 = vmul.f32 %v3922, %v4018
        %v4035 = vld [vmem:[%s257] sm:$0xff]
        %v4036 = vld [vmem:[%s257 + $0x8] sm:$0xff]
        %v4037 = vld [vmem:[%s257 + $0x10] sm:$0xff]
        %v4038 = vld [vmem:[%s257 + $0x18] sm:$0xff]
        %v4039 = vld [vmem:[%s257 + $0x20] sm:$0xff]
        %v4040 = vld [vmem:[%s257 + $0x28] sm:$0xff]
        %v4041 = vld [vmem:[%s257 + $0x30] sm:$0xff]
        %v4042 = vld [vmem:[%s257 + $0x38] sm:$0xff]
        %v4043 = vld [vmem:[%s257 + $0x40] sm:$0xff]
        %v4044 = vld [vmem:[%s257 + $0x48] sm:$0xff]
        %v4045 = vld [vmem:[%s257 + $0x50] sm:$0xff]
        %v4046 = vld [vmem:[%s257 + $0x58] sm:$0xff]
        %v4047 = vld [vmem:[%s257 + $0x60] sm:$0xff]
        %v4048 = vld [vmem:[%s257 + $0x68] sm:$0xff]
        %v4049 = vld [vmem:[%s257 + $0x70] sm:$0xff]
        %v4050 = vld [vmem:[%s257 + $0x78] sm:$0xff]
        %v4051 = vadd.f32 %v4035, %v4019
        %v4052 = vadd.f32 %v4036, %v4020
        %v4053 = vadd.f32 %v4037, %v4021
        %v4054 = vadd.f32 %v4038, %v4022
        %v4055 = vadd.f32 %v4039, %v4023
        %v4056 = vadd.f32 %v4040, %v4024
        %v4057 = vadd.f32 %v4041, %v4025
        %v4058 = vadd.f32 %v4042, %v4026
        %v4059 = vadd.f32 %v4043, %v4027
        %v4060 = vadd.f32 %v4044, %v4028
        %v4061 = vadd.f32 %v4045, %v4029
        %v4062 = vadd.f32 %v4046, %v4030
        %v4063 = vadd.f32 %v4047, %v4031
        %v4064 = vadd.f32 %v4048, %v4032
        %v4065 = vadd.f32 %v4049, %v4033
        %v4066 = vadd.f32 %v4050, %v4034
        %4067 = vst [vmem:[%s291] sm:$0xff] %v4051
        %4068 = vst [vmem:[%s291 + $0x8] sm:$0xff] %v4052
        %4069 = vst [vmem:[%s291 + $0x10] sm:$0xff] %v4053
        %4070 = vst [vmem:[%s291 + $0x18] sm:$0xff] %v4054
        %4071 = vst [vmem:[%s291 + $0x20] sm:$0xff] %v4055
        %4072 = vst [vmem:[%s291 + $0x28] sm:$0xff] %v4056
        %4073 = vst [vmem:[%s291 + $0x30] sm:$0xff] %v4057
        %4074 = vst [vmem:[%s291 + $0x38] sm:$0xff] %v4058
        %4075 = vst [vmem:[%s291 + $0x40] sm:$0xff] %v4059
        %4076 = vst [vmem:[%s291 + $0x48] sm:$0xff] %v4060
        %4077 = vst [vmem:[%s291 + $0x50] sm:$0xff] %v4061
        %4078 = vst [vmem:[%s291 + $0x58] sm:$0xff] %v4062
        %4079 = vst [vmem:[%s291 + $0x60] sm:$0xff] %v4063
        %4080 = vst [vmem:[%s291 + $0x68] sm:$0xff] %v4064
        %4081 = vst [vmem:[%s291 + $0x70] sm:$0xff] %v4065
        %4082 = vst [vmem:[%s291 + $0x78] sm:$0xff] %v4066
        %s4083 = sand.u32 %s158, 1
        %s4084 = scalar_lea.sflag [#allocation8], %s4083
        %s4085 = sand.u32 %s158, 1
        %s4086 = smul.addr %s4085, 128
        %s4087 = scalar_lea.vmem [#allocation12], %s4086
        // Predicated region
        $region85: #{tpu_custom_call.1} parent=39 // pred_check
          %p4088 = pneg %p168
        $region86: #{tpu_custom_call.1} parent=39 // pred_check_branch
          %4090 = sbr.rel (%p4088) target = $region88
        $region87: #{tpu_custom_call.1} parent=39 // pred_region
          %s4091 = smul.u32 8, %s29
          %s4093 = ssub.s32 2048, 2048
          %4094 = vsyncadd %s4084, %s4093
          %s4095 = smul.addr %s4091, 2
          %s4096 = smul.addr %s28, 32
          %s4097 = sadd.s32 %s4095, %s4096
          %s4098 = smul.addr %s4097, 128
          %s4099 = scalar_lea.hbm %s6, %s4098
          %s4100 = sshll.u32 %s4087, 4
          %s4101 = int_to_ptr.vmem [resolvable:$true] %s4100
          %4106 = dma.vmem_to_hbm [thread:$0]  %s4101, 2048, %s4099, %s4084, 128, 128, 8
        $region88: #{tpu_custom_call.1} parent=39 // pred_fallthru
          _
      $region40: #{tpu_custom_call.1} parent=5 // pred_fallthru
        _
      %p4107 = scmp.le.s32.totalorder 2, %s19
      // Predicated region
      $region89: #{tpu_custom_call.1} parent=5 // pred_check
        %p4108 = pneg %p4107
      $region90: #{tpu_custom_call.1} parent=5 // pred_check_branch
        %4110 = sbr.rel (%p4108) target = $region92
      $region91: #{tpu_custom_call.1} parent=5 // pred_region
        %s4111 = ssub.s32 %s19, 2
        // Predicated region
        $region93: #{tpu_custom_call.1} parent=91 // pred_check
          %p4112 = pneg %p174
        $region94: #{tpu_custom_call.1} parent=91 // pred_check_branch
          %4114 = sbr.rel (%p4112) target = $region96
        $region95: #{tpu_custom_call.1} parent=91 // pred_region
          %s4115 = sand.u32 %s159, 1
          %s4116 = scalar_lea.sflag [#allocation8], %s4115
          %s4117 = sand.u32 %s159, 1
          %s4118 = smul.addr %s4117, 128
          %s4119 = scalar_lea.vmem [#allocation12], %s4118
          %4120 = dma.done %s4116, 2048
        $region96: #{tpu_custom_call.1} parent=91 // pred_fallthru
          _
      $region92: #{tpu_custom_call.1} parent=5 // pred_fallthru
        _
    $region6: #{tpu_custom_call.1} parent=1 // loop_footer
      %s23 = sadd.s32 1, %s19
    $region7: #{tpu_custom_call.1} parent=1 // loop_footer_branch
      %18 = sbr.rel target = $region3
    $region8: #{tpu_custom_call.1} parent=1 // loop_exit
      _
    %4121 = vsyncpa [#allocation7], 1
    %s4122 = scalar_lea.sflag [#allocation7], 1
    %4123 = vsyncpa %s4122, 1
    %4124 = vsyncpa [#allocation10], 1
    %4125 = vsyncpa [#allocation8], 1
    %s4126 = scalar_lea.sflag [#allocation8], 1
    %4127 = vsyncpa %s4126, 1
  %4128 = vsyncmov [#allocation5]
  %s4129 = vpop.sfrf %4128
  %p4130 = scmp.eq.s32.totalorder %s4129, 0
  %p4131 = pneg %p4130
  %4133 = shalt.err (%p4131)
  %s4134 = scalar_lea.sflag [#allocation5], 1
  %4135 = vsyncmov %s4134
  %s4136 = vpop.sfrf %4135
  %p4137 = scmp.eq.s32.totalorder %s4136, 0
  %p4138 = pneg %p4137
  %4140 = shalt.err (%p4138)

</llo_original>
